<compile_context>
chip_gen: v7x
topology: tpu7x:2x2x1
jax: 0.10.0
libtpu: 0.0.40
codegen_flags: <defaults>
</compile_context>

<pallas_src>
import math
import functools

import jax
import jax.numpy as jnp
from jax import lax
from jax.experimental import pallas as pl
from jax.experimental.pallas import tpu as pltpu


def _seq2seq_encoder_kernel(tok_ref, emb_ref, *refs, num_layers, T, Bp, H, V):
    """Single-invocation kernel.

    refs = [w_ih_0, w_hh_0, b_gi_0, b_hn_0, ..., (x num_layers), out_ref, state_ref, gi_ref]
      tok_ref  : (T*Bp, 1) int32, time-major rows (row = t*Bp + b)  == permute(1,0,2)
      emb_ref  : (V, E)    f32 embedding table
      w_ih     : (D_in, 3H) pre-transposed (x @ W layout, gate order r,z,n)
      w_hh     : (H, 3H)    pre-transposed
      b_gi     : (1, 3H)  = b_ih + [b_hh_r, b_hh_z, 0]   (folded once, outside the loop)
      b_hn     : (1, H)   = b_hh[2H:]                    (must stay inside r*(...))
      out_ref  : (T*Bp, H)  output slab; also reused as next layer's input
      state_ref: (L*Bp, H)  final hidden state per layer
      gi_ref   : (T*Bp, 3H) VMEM scratch: hoisted input projection for the current layer
    """
    w_refs = refs[:4 * num_layers]
    out_ref = refs[4 * num_layers]
    state_ref = refs[4 * num_layers + 1]
    gi_ref = refs[4 * num_layers + 2]

    # ---- embedding lookup as a one-hot matmul (exact for in-range ids; V is tiny) ----
    tok = tok_ref[...]                                            # (T*Bp, 1) int32
    col = lax.broadcasted_iota(jnp.int32, (T * Bp, V), 1)
    onehot = (col == tok).astype(jnp.float32)                     # (T*Bp, V)
    x = jnp.dot(onehot, emb_ref[...],
                preferred_element_type=jnp.float32)               # (T*Bp, E), time-major

    for l in range(num_layers):
        w_ih = w_refs[4 * l][...]        # (D_in, 3H)
        w_hh = w_refs[4 * l + 1][...]    # (H, 3H)
        b_gi = w_refs[4 * l + 2][...]    # (1, 3H)
        b_hn = w_refs[4 * l + 3][...]    # (1, H)

        if l > 0:
            x = out_ref[...]             # previous layer's full output (T*Bp, H)

        # Hoisted input projection over ALL time steps at once (M = T*Bp rows on the
        # MXU) with r/z biases pre-folded; stored to scratch for tile-aligned per-step reads.
        gi_ref[...] = jnp.dot(x, w_ih, preferred_element_type=jnp.float32) + b_gi

        def step(t, h):
            row = pl.multiple_of(t * Bp, Bp)
            gi = gi_ref[pl.ds(row, Bp), :]                                 # (Bp, 3H)
            gh = jnp.dot(h, w_hh, preferred_element_type=jnp.float32)      # (Bp, 3H)
            rz = jax.nn.sigmoid(gi[:, :2 * H] + gh[:, :2 * H])             # one EUP issue
            r = rz[:, :H]
            z = rz[:, H:2 * H]
            n = jnp.tanh(gi[:, 2 * H:] + r * (gh[:, 2 * H:] + b_hn))
            h_new = (1.0 - z) * n + z * h
            out_ref[pl.ds(row, Bp), :] = h_new                             # per-step store
            return h_new

        # Inherently sequential recurrence; fori_loop bounds live ranges, unroll keeps
        # LLO scheduler visibility. (TODO(synk): inter-layer dropout omitted: eval mode.)
        h = lax.fori_loop(0, T, step, jnp.zeros((Bp, H), jnp.float32), unroll=True)

        state_ref[l * Bp:(l + 1) * Bp, :] = h                              # tile-aligned


def seq2seq_encoder(X, params, *, num_hiddens, num_layers):
    """X: (batch, seq) integer token ids.
    params (PyTorch layout, gate order r,z,n):
      'embedding' : (vocab, embed)
      f'w_ih_l{l}': (3H, D_in),  f'w_hh_l{l}': (3H, H)
      f'b_ih_l{l}': (3H,),       f'b_hh_l{l}': (3H,)
    Returns (output, state) = ((seq, batch, H), (num_layers, batch, H))."""
    B, T = X.shape
    emb = params['embedding'].astype(jnp.float32)
    V, E = emb.shape
    H = num_hiddens

    # Pad batch to one f32 sublane tile so all per-step accesses are tile-aligned.
    Bp = max(8, ((B + 7) // 8) * 8)
    Xp = jnp.pad(X.astype(jnp.int32), ((0, Bp - B), (0, 0)))      # pad rows use token 0
    tok2d = jnp.transpose(Xp).reshape(T * Bp, 1)                  # time-major rows

    flat_w = []
    for l in range(num_layers):
        w_ih = params[f'w_ih_l{l}'].astype(jnp.float32)           # (3H, D_in)
        w_hh = params[f'w_hh_l{l}'].astype(jnp.float32)           # (3H, H)
        b_ih = params[f'b_ih_l{l}'].astype(jnp.float32)           # (3H,)
        b_hh = params[f'b_hh_l{l}'].astype(jnp.float32)           # (3H,)
        b_gi = b_ih + jnp.concatenate([b_hh[:2 * H], jnp.zeros((H,), jnp.float32)])
        flat_w.append(jnp.transpose(w_ih))                        # (D_in, 3H)
        flat_w.append(jnp.transpose(w_hh))                        # (H, 3H)
        flat_w.append(b_gi.reshape(1, 3 * H))                     # (1, 3H)
        flat_w.append(b_hh[2 * H:].reshape(1, H))                 # (1, H)

    kernel = functools.partial(_seq2seq_encoder_kernel,
                               num_layers=num_layers, T=T, Bp=Bp, H=H, V=V)

    vmem = pl.BlockSpec(memory_space=pltpu.MemorySpace.VMEM)
    n_in = 2 + len(flat_w)

    out_flat, state_flat = pl.pallas_call(
        kernel,
        out_shape=(jax.ShapeDtypeStruct((T * Bp, H), jnp.float32),
                   jax.ShapeDtypeStruct((num_layers * Bp, H), jnp.float32)),
        in_specs=[vmem] * n_in,           # whole (tiny) arrays resident in VMEM, no grid
        out_specs=(vmem, vmem),
        scratch_shapes=[pltpu.VMEM((T * Bp, 3 * H), jnp.float32)],
    )(tok2d, emb, *flat_w)

    output = out_flat.reshape(T, Bp, H)[:, :B, :]                 # drop batch padding
    state = state_flat.reshape(num_layers, Bp, H)[:, :B, :]
    return output, state


def _reference(X, params, *, num_hiddens, num_layers):
    """Pure-JAX transcription of the PyTorch forward (eval mode), for verification."""
    emb = params['embedding']
    H = num_hiddens
    x = emb[X]                              # (B, T, E)
    x = jnp.transpose(x, (1, 0, 2))         # (T, B, E)
    states = []
    for l in range(num_layers):
        w_ih = params[f'w_ih_l{l}']; w_hh = params[f'w_hh_l{l}']
        b_ih = params[f'b_ih_l{l}']; b_hh = params[f'b_hh_l{l}']
        h = jnp.zeros((x.shape[1], H), jnp.float32)
        outs = []
        for t in range(x.shape[0]):
            gi = x[t] @ w_ih.T + b_ih
            gh = h @ w_hh.T + b_hh
            r = jax.nn.sigmoid(gi[:, :H] + gh[:, :H])
            z = jax.nn.sigmoid(gi[:, H:2 * H] + gh[:, H:2 * H])
            n = jnp.tanh(gi[:, 2 * H:] + r * gh[:, 2 * H:])
            h = (1.0 - z) * n + z * h
            outs.append(h)
        x = jnp.stack(outs, axis=0)         # (T, B, H)
        states.append(h)
    return x, jnp.stack(states, axis=0)


if __name__ == "__main__":
    # small shapes consistent with the module
    B, T = 2, 8
    vocab_size, embed_size, num_hiddens, num_layers = 32, 32, 32, 2

    root = jax.random.PRNGKey(0)
    ks = jax.random.split(root, 2 + 4 * num_layers)
    X = jax.random.randint(ks[0], (B, T), 0, vocab_size, dtype=jnp.int32)

    params = {'embedding': jax.random.normal(ks[1], (vocab_size, embed_size), jnp.float32)}
    s = 1.0 / math.sqrt(num_hiddens)
    kidx = 2
    for l in range(num_layers):
        d_in = embed_size if l == 0 else num_hiddens
        params[f'w_ih_l{l}'] = jax.random.uniform(ks[kidx + 0], (3 * num_hiddens, d_in),
                                                  jnp.float32, -s, s)
        params[f'w_hh_l{l}'] = jax.random.uniform(ks[kidx + 1], (3 * num_hiddens, num_hiddens),
                                                  jnp.float32, -s, s)
        params[f'b_ih_l{l}'] = jax.random.uniform(ks[kidx + 2], (3 * num_hiddens,),
                                                  jnp.float32, -s, s)
        params[f'b_hh_l{l}'] = jax.random.uniform(ks[kidx + 3], (3 * num_hiddens,),
                                                  jnp.float32, -s, s)
        kidx += 4

    out, state = seq2seq_encoder(X, params, num_hiddens=num_hiddens, num_layers=num_layers)
    out = jax.block_until_ready(out)
    state = jax.block_until_ready(state)

    ref_out, ref_state = _reference(X, params, num_hiddens=num_hiddens, num_layers=num_layers)
    assert out.shape == (T, B, num_hiddens), out.shape
    assert state.shape == (num_layers, B, num_hiddens), state.shape
    assert jnp.allclose(out, ref_out, atol=1e-4, rtol=1e-4), \
        float(jnp.max(jnp.abs(out - ref_out)))
    assert jnp.allclose(state, ref_state, atol=1e-4, rtol=1e-4), \
        float(jnp.max(jnp.abs(state - ref_state)))

    print("KERNEL_OK")
</pallas_src>

<mosaic_0001>
module attributes {stable_mosaic.version = 11 : i64} {
  func.func @_seq2seq_encoder_kernel(%arg0: memref<64x1xi32, #tpu.memory_space<vmem>>, %arg1: memref<32x32xf32, #tpu.memory_space<vmem>>, %arg2: memref<32x96xf32, #tpu.memory_space<vmem>>, %arg3: memref<32x96xf32, #tpu.memory_space<vmem>>, %arg4: memref<1x96xf32, #tpu.memory_space<vmem>>, %arg5: memref<1x32xf32, #tpu.memory_space<vmem>>, %arg6: memref<32x96xf32, #tpu.memory_space<vmem>>, %arg7: memref<32x96xf32, #tpu.memory_space<vmem>>, %arg8: memref<1x96xf32, #tpu.memory_space<vmem>>, %arg9: memref<1x32xf32, #tpu.memory_space<vmem>>, %arg10: memref<64x32xf32, #tpu.memory_space<vmem>>, %arg11: memref<16x32xf32, #tpu.memory_space<vmem>>, %arg12: memref<64x96xf32, #tpu.memory_space<vmem>>) attributes {dimension_semantics = [], scalar_prefetch = 0 : i64, scratch_operands = 1 : i64, tpu.core_type = #tpu.core_type<tc>} {
    %c0 = arith.constant 0 : index
    %c0_0 = arith.constant 0 : index
    %0 = vector.load %arg0[%c0, %c0_0] : memref<64x1xi32, #tpu.memory_space<vmem>>, vector<64x1xi32>
    %1 = tpu.iota {dimensions = array<i32: 1>} : vector<64x32xi32>
    %2 = vector.broadcast %0 : vector<64x1xi32> to vector<64x32xi32>
    %3 = arith.cmpi eq, %1, %2 : vector<64x32xi32>
    %4 = arith.extui %3 : vector<64x32xi1> to vector<64x32xi32>
    %5 = arith.sitofp %4 : vector<64x32xi32> to vector<64x32xf32>
    %c0_1 = arith.constant 0 : index
    %c0_2 = arith.constant 0 : index
    %6 = vector.load %arg1[%c0_1, %c0_2] : memref<32x32xf32, #tpu.memory_space<vmem>>, vector<32x32xf32>
    %cst = arith.constant dense<0.000000e+00> : vector<64x32xf32>
    %7 = tpu.matmul %5, %6, %cst {dimension_numbers = #tpu.dot_dimension_numbers<[1], [0], [0], [1], [0, 0, 1, 1], [], []>} : vector<64x32xf32>, vector<32x32xf32>, vector<64x32xf32> -> vector<64x32xf32>
    %c0_3 = arith.constant 0 : index
    %c0_4 = arith.constant 0 : index
    %8 = vector.load %arg2[%c0_3, %c0_4] : memref<32x96xf32, #tpu.memory_space<vmem>>, vector<32x96xf32>
    %c0_5 = arith.constant 0 : index
    %c0_6 = arith.constant 0 : index
    %9 = vector.load %arg3[%c0_5, %c0_6] : memref<32x96xf32, #tpu.memory_space<vmem>>, vector<32x96xf32>
    %c0_7 = arith.constant 0 : index
    %c0_8 = arith.constant 0 : index
    %10 = vector.load %arg4[%c0_7, %c0_8] : memref<1x96xf32, #tpu.memory_space<vmem>>, vector<1x96xf32>
    %c0_9 = arith.constant 0 : index
    %c0_10 = arith.constant 0 : index
    %11 = vector.load %arg5[%c0_9, %c0_10] : memref<1x32xf32, #tpu.memory_space<vmem>>, vector<1x32xf32>
    %cst_11 = arith.constant dense<0.000000e+00> : vector<64x96xf32>
    %12 = tpu.matmul %7, %8, %cst_11 {dimension_numbers = #tpu.dot_dimension_numbers<[1], [0], [0], [1], [0, 0, 1, 1], [], []>} : vector<64x32xf32>, vector<32x96xf32>, vector<64x96xf32> -> vector<64x96xf32>
    %13 = vector.broadcast %10 : vector<1x96xf32> to vector<64x96xf32>
    %14 = arith.addf %12, %13 : vector<64x96xf32>
    %c0_12 = arith.constant 0 : index
    %c0_13 = arith.constant 0 : index
    %15 = vector.load %arg12[%c0_12, %c0_13] : memref<64x96xf32, #tpu.memory_space<vmem>>, vector<64x96xf32>
    tpu.vector_store %arg12[%c0_12, %c0_13], %14 {strides = array<i32>} : memref<64x96xf32, #tpu.memory_space<vmem>>, vector<64x96xf32>,
    %cst_14 = arith.constant 0.000000e+00 : f32
    %16 = vector.broadcast %cst_14 : f32 to vector<8x32xf32>
    %c0_i32 = arith.constant 0 : i32
    %c8_i32 = arith.constant 8 : i32
    %17 = arith.muli %c0_i32, %c8_i32 : i32
    %18 = tpu.assume_multiple %17, 8 : i32
    %19 = arith.index_cast %18 : i32 to index
    %c0_15 = arith.constant 0 : index
    %20 = vector.load %arg12[%19, %c0_15] : memref<64x96xf32, #tpu.memory_space<vmem>>, vector<8x96xf32>
    %cst_16 = arith.constant dense<0.000000e+00> : vector<8x96xf32>
    %21 = tpu.matmul %16, %9, %cst_16 {dimension_numbers = #tpu.dot_dimension_numbers<[1], [0], [0], [1], [0, 0, 1, 1], [], []>} : vector<8x32xf32>, vector<32x96xf32>, vector<8x96xf32> -> vector<8x96xf32>
    %22 = vector.extract_strided_slice %20 {offsets = [0, 0], sizes = [8, 64], strides = [1, 1]} : vector<8x96xf32> to vector<8x64xf32>
    %23 = vector.extract_strided_slice %21 {offsets = [0, 0], sizes = [8, 64], strides = [1, 1]} : vector<8x96xf32> to vector<8x64xf32>
    %24 = arith.addf %22, %23 : vector<8x64xf32>
    %25 = arith.negf %24 : vector<8x64xf32>
    %26 = math.exp %25 : vector<8x64xf32>
    %cst_17 = arith.constant 1.000000e+00 : f32
    %27 = vector.broadcast %cst_17 : f32 to vector<8x64xf32>
    %28 = arith.addf %27, %26 : vector<8x64xf32>
    %29 = arith.divf %27, %28 : vector<8x64xf32>
    %30 = vector.extract_strided_slice %29 {offsets = [0, 0], sizes = [8, 32], strides = [1, 1]} : vector<8x64xf32> to vector<8x32xf32>
    %31 = vector.extract_strided_slice %29 {offsets = [0, 32], sizes = [8, 32], strides = [1, 1]} : vector<8x64xf32> to vector<8x32xf32>
    %32 = vector.extract_strided_slice %20 {offsets = [0, 64], sizes = [8, 32], strides = [1, 1]} : vector<8x96xf32> to vector<8x32xf32>
    %33 = vector.extract_strided_slice %21 {offsets = [0, 64], sizes = [8, 32], strides = [1, 1]} : vector<8x96xf32> to vector<8x32xf32>
    %34 = vector.broadcast %11 : vector<1x32xf32> to vector<8x32xf32>
    %35 = arith.addf %33, %34 : vector<8x32xf32>
    %36 = arith.mulf %30, %35 : vector<8x32xf32>
    %37 = arith.addf %32, %36 : vector<8x32xf32>
    %38 = math.tanh %37 : vector<8x32xf32>
    %cst_18 = arith.constant 1.000000e+00 : f32
    %39 = vector.broadcast %cst_18 : f32 to vector<8x32xf32>
    %40 = arith.subf %39, %31 : vector<8x32xf32>
    %41 = arith.mulf %40, %38 : vector<8x32xf32>
    %42 = arith.mulf %31, %16 : vector<8x32xf32>
    %43 = arith.addf %41, %42 : vector<8x32xf32>
    %44 = arith.index_cast %18 : i32 to index
    %c0_19 = arith.constant 0 : index
    %45 = vector.load %arg10[%44, %c0_19] : memref<64x32xf32, #tpu.memory_space<vmem>>, vector<8x32xf32>
    tpu.vector_store %arg10[%44, %c0_19], %43 {strides = array<i32>} : memref<64x32xf32, #tpu.memory_space<vmem>>, vector<8x32xf32>,
    %c1_i32 = arith.constant 1 : i32
    %c8_i32_20 = arith.constant 8 : i32
    %46 = arith.muli %c1_i32, %c8_i32_20 : i32
    %47 = tpu.assume_multiple %46, 8 : i32
    %48 = arith.index_cast %47 : i32 to index
    %c0_21 = arith.constant 0 : index
    %49 = vector.load %arg12[%48, %c0_21] : memref<64x96xf32, #tpu.memory_space<vmem>>, vector<8x96xf32>
    %cst_22 = arith.constant dense<0.000000e+00> : vector<8x96xf32>
    %50 = tpu.matmul %43, %9, %cst_22 {dimension_numbers = #tpu.dot_dimension_numbers<[1], [0], [0], [1], [0, 0, 1, 1], [], []>} : vector<8x32xf32>, vector<32x96xf32>, vector<8x96xf32> -> vector<8x96xf32>
    %51 = vector.extract_strided_slice %49 {offsets = [0, 0], sizes = [8, 64], strides = [1, 1]} : vector<8x96xf32> to vector<8x64xf32>
    %52 = vector.extract_strided_slice %50 {offsets = [0, 0], sizes = [8, 64], strides = [1, 1]} : vector<8x96xf32> to vector<8x64xf32>
    %53 = arith.addf %51, %52 : vector<8x64xf32>
    %54 = arith.negf %53 : vector<8x64xf32>
    %55 = math.exp %54 : vector<8x64xf32>
    %cst_23 = arith.constant 1.000000e+00 : f32
    %56 = vector.broadcast %cst_23 : f32 to vector<8x64xf32>
    %57 = arith.addf %56, %55 : vector<8x64xf32>
    %58 = arith.divf %56, %57 : vector<8x64xf32>
    %59 = vector.extract_strided_slice %58 {offsets = [0, 0], sizes = [8, 32], strides = [1, 1]} : vector<8x64xf32> to vector<8x32xf32>
    %60 = vector.extract_strided_slice %58 {offsets = [0, 32], sizes = [8, 32], strides = [1, 1]} : vector<8x64xf32> to vector<8x32xf32>
    %61 = vector.extract_strided_slice %49 {offsets = [0, 64], sizes = [8, 32], strides = [1, 1]} : vector<8x96xf32> to vector<8x32xf32>
    %62 = vector.extract_strided_slice %50 {offsets = [0, 64], sizes = [8, 32], strides = [1, 1]} : vector<8x96xf32> to vector<8x32xf32>
    %63 = vector.broadcast %11 : vector<1x32xf32> to vector<8x32xf32>
    %64 = arith.addf %62, %63 : vector<8x32xf32>
    %65 = arith.mulf %59, %64 : vector<8x32xf32>
    %66 = arith.addf %61, %65 : vector<8x32xf32>
    %67 = math.tanh %66 : vector<8x32xf32>
    %cst_24 = arith.constant 1.000000e+00 : f32
    %68 = vector.broadcast %cst_24 : f32 to vector<8x32xf32>
    %69 = arith.subf %68, %60 : vector<8x32xf32>
    %70 = arith.mulf %69, %67 : vector<8x32xf32>
    %71 = arith.mulf %60, %43 : vector<8x32xf32>
    %72 = arith.addf %70, %71 : vector<8x32xf32>
    %73 = arith.index_cast %47 : i32 to index
    %c0_25 = arith.constant 0 : index
    %74 = vector.load %arg10[%73, %c0_25] : memref<64x32xf32, #tpu.memory_space<vmem>>, vector<8x32xf32>
    tpu.vector_store %arg10[%73, %c0_25], %72 {strides = array<i32>} : memref<64x32xf32, #tpu.memory_space<vmem>>, vector<8x32xf32>,
    %c2_i32 = arith.constant 2 : i32
    %c8_i32_26 = arith.constant 8 : i32
    %75 = arith.muli %c2_i32, %c8_i32_26 : i32
    %76 = tpu.assume_multiple %75, 8 : i32
    %77 = arith.index_cast %76 : i32 to index
    %c0_27 = arith.constant 0 : index
    %78 = vector.load %arg12[%77, %c0_27] : memref<64x96xf32, #tpu.memory_space<vmem>>, vector<8x96xf32>
    %cst_28 = arith.constant dense<0.000000e+00> : vector<8x96xf32>
    %79 = tpu.matmul %72, %9, %cst_28 {dimension_numbers = #tpu.dot_dimension_numbers<[1], [0], [0], [1], [0, 0, 1, 1], [], []>} : vector<8x32xf32>, vector<32x96xf32>, vector<8x96xf32> -> vector<8x96xf32>
    %80 = vector.extract_strided_slice %78 {offsets = [0, 0], sizes = [8, 64], strides = [1, 1]} : vector<8x96xf32> to vector<8x64xf32>
    %81 = vector.extract_strided_slice %79 {offsets = [0, 0], sizes = [8, 64], strides = [1, 1]} : vector<8x96xf32> to vector<8x64xf32>
    %82 = arith.addf %80, %81 : vector<8x64xf32>
    %83 = arith.negf %82 : vector<8x64xf32>
    %84 = math.exp %83 : vector<8x64xf32>
    %cst_29 = arith.constant 1.000000e+00 : f32
    %85 = vector.broadcast %cst_29 : f32 to vector<8x64xf32>
    %86 = arith.addf %85, %84 : vector<8x64xf32>
    %87 = arith.divf %85, %86 : vector<8x64xf32>
    %88 = vector.extract_strided_slice %87 {offsets = [0, 0], sizes = [8, 32], strides = [1, 1]} : vector<8x64xf32> to vector<8x32xf32>
    %89 = vector.extract_strided_slice %87 {offsets = [0, 32], sizes = [8, 32], strides = [1, 1]} : vector<8x64xf32> to vector<8x32xf32>
    %90 = vector.extract_strided_slice %78 {offsets = [0, 64], sizes = [8, 32], strides = [1, 1]} : vector<8x96xf32> to vector<8x32xf32>
    %91 = vector.extract_strided_slice %79 {offsets = [0, 64], sizes = [8, 32], strides = [1, 1]} : vector<8x96xf32> to vector<8x32xf32>
    %92 = vector.broadcast %11 : vector<1x32xf32> to vector<8x32xf32>
    %93 = arith.addf %91, %92 : vector<8x32xf32>
    %94 = arith.mulf %88, %93 : vector<8x32xf32>
    %95 = arith.addf %90, %94 : vector<8x32xf32>
    %96 = math.tanh %95 : vector<8x32xf32>
    %cst_30 = arith.constant 1.000000e+00 : f32
    %97 = vector.broadcast %cst_30 : f32 to vector<8x32xf32>
    %98 = arith.subf %97, %89 : vector<8x32xf32>
    %99 = arith.mulf %98, %96 : vector<8x32xf32>
    %100 = arith.mulf %89, %72 : vector<8x32xf32>
    %101 = arith.addf %99, %100 : vector<8x32xf32>
    %102 = arith.index_cast %76 : i32 to index
    %c0_31 = arith.constant 0 : index
    %103 = vector.load %arg10[%102, %c0_31] : memref<64x32xf32, #tpu.memory_space<vmem>>, vector<8x32xf32>
    tpu.vector_store %arg10[%102, %c0_31], %101 {strides = array<i32>} : memref<64x32xf32, #tpu.memory_space<vmem>>, vector<8x32xf32>,
    %c3_i32 = arith.constant 3 : i32
    %c8_i32_32 = arith.constant 8 : i32
    %104 = arith.muli %c3_i32, %c8_i32_32 : i32
    %105 = tpu.assume_multiple %104, 8 : i32
    %106 = arith.index_cast %105 : i32 to index
    %c0_33 = arith.constant 0 : index
    %107 = vector.load %arg12[%106, %c0_33] : memref<64x96xf32, #tpu.memory_space<vmem>>, vector<8x96xf32>
    %cst_34 = arith.constant dense<0.000000e+00> : vector<8x96xf32>
    %108 = tpu.matmul %101, %9, %cst_34 {dimension_numbers = #tpu.dot_dimension_numbers<[1], [0], [0], [1], [0, 0, 1, 1], [], []>} : vector<8x32xf32>, vector<32x96xf32>, vector<8x96xf32> -> vector<8x96xf32>
    %109 = vector.extract_strided_slice %107 {offsets = [0, 0], sizes = [8, 64], strides = [1, 1]} : vector<8x96xf32> to vector<8x64xf32>
    %110 = vector.extract_strided_slice %108 {offsets = [0, 0], sizes = [8, 64], strides = [1, 1]} : vector<8x96xf32> to vector<8x64xf32>
    %111 = arith.addf %109, %110 : vector<8x64xf32>
    %112 = arith.negf %111 : vector<8x64xf32>
    %113 = math.exp %112 : vector<8x64xf32>
    %cst_35 = arith.constant 1.000000e+00 : f32
    %114 = vector.broadcast %cst_35 : f32 to vector<8x64xf32>
    %115 = arith.addf %114, %113 : vector<8x64xf32>
    %116 = arith.divf %114, %115 : vector<8x64xf32>
    %117 = vector.extract_strided_slice %116 {offsets = [0, 0], sizes = [8, 32], strides = [1, 1]} : vector<8x64xf32> to vector<8x32xf32>
    %118 = vector.extract_strided_slice %116 {offsets = [0, 32], sizes = [8, 32], strides = [1, 1]} : vector<8x64xf32> to vector<8x32xf32>
    %119 = vector.extract_strided_slice %107 {offsets = [0, 64], sizes = [8, 32], strides = [1, 1]} : vector<8x96xf32> to vector<8x32xf32>
    %120 = vector.extract_strided_slice %108 {offsets = [0, 64], sizes = [8, 32], strides = [1, 1]} : vector<8x96xf32> to vector<8x32xf32>
    %121 = vector.broadcast %11 : vector<1x32xf32> to vector<8x32xf32>
    %122 = arith.addf %120, %121 : vector<8x32xf32>
    %123 = arith.mulf %117, %122 : vector<8x32xf32>
    %124 = arith.addf %119, %123 : vector<8x32xf32>
    %125 = math.tanh %124 : vector<8x32xf32>
    %cst_36 = arith.constant 1.000000e+00 : f32
    %126 = vector.broadcast %cst_36 : f32 to vector<8x32xf32>
    %127 = arith.subf %126, %118 : vector<8x32xf32>
    %128 = arith.mulf %127, %125 : vector<8x32xf32>
    %129 = arith.mulf %118, %101 : vector<8x32xf32>
    %130 = arith.addf %128, %129 : vector<8x32xf32>
    %131 = arith.index_cast %105 : i32 to index
    %c0_37 = arith.constant 0 : index
    %132 = vector.load %arg10[%131, %c0_37] : memref<64x32xf32, #tpu.memory_space<vmem>>, vector<8x32xf32>
    tpu.vector_store %arg10[%131, %c0_37], %130 {strides = array<i32>} : memref<64x32xf32, #tpu.memory_space<vmem>>, vector<8x32xf32>,
    %c4_i32 = arith.constant 4 : i32
    %c8_i32_38 = arith.constant 8 : i32
    %133 = arith.muli %c4_i32, %c8_i32_38 : i32
    %134 = tpu.assume_multiple %133, 8 : i32
    %135 = arith.index_cast %134 : i32 to index
    %c0_39 = arith.constant 0 : index
    %136 = vector.load %arg12[%135, %c0_39] : memref<64x96xf32, #tpu.memory_space<vmem>>, vector<8x96xf32>
    %cst_40 = arith.constant dense<0.000000e+00> : vector<8x96xf32>
    %137 = tpu.matmul %130, %9, %cst_40 {dimension_numbers = #tpu.dot_dimension_numbers<[1], [0], [0], [1], [0, 0, 1, 1], [], []>} : vector<8x32xf32>, vector<32x96xf32>, vector<8x96xf32> -> vector<8x96xf32>
    %138 = vector.extract_strided_slice %136 {offsets = [0, 0], sizes = [8, 64], strides = [1, 1]} : vector<8x96xf32> to vector<8x64xf32>
    %139 = vector.extract_strided_slice %137 {offsets = [0, 0], sizes = [8, 64], strides = [1, 1]} : vector<8x96xf32> to vector<8x64xf32>
    %140 = arith.addf %138, %139 : vector<8x64xf32>
    %141 = arith.negf %140 : vector<8x64xf32>
    %142 = math.exp %141 : vector<8x64xf32>
    %cst_41 = arith.constant 1.000000e+00 : f32
    %143 = vector.broadcast %cst_41 : f32 to vector<8x64xf32>
    %144 = arith.addf %143, %142 : vector<8x64xf32>
    %145 = arith.divf %143, %144 : vector<8x64xf32>
    %146 = vector.extract_strided_slice %145 {offsets = [0, 0], sizes = [8, 32], strides = [1, 1]} : vector<8x64xf32> to vector<8x32xf32>
    %147 = vector.extract_strided_slice %145 {offsets = [0, 32], sizes = [8, 32], strides = [1, 1]} : vector<8x64xf32> to vector<8x32xf32>
    %148 = vector.extract_strided_slice %136 {offsets = [0, 64], sizes = [8, 32], strides = [1, 1]} : vector<8x96xf32> to vector<8x32xf32>
    %149 = vector.extract_strided_slice %137 {offsets = [0, 64], sizes = [8, 32], strides = [1, 1]} : vector<8x96xf32> to vector<8x32xf32>
    %150 = vector.broadcast %11 : vector<1x32xf32> to vector<8x32xf32>
    %151 = arith.addf %149, %150 : vector<8x32xf32>
    %152 = arith.mulf %146, %151 : vector<8x32xf32>
    %153 = arith.addf %148, %152 : vector<8x32xf32>
    %154 = math.tanh %153 : vector<8x32xf32>
    %cst_42 = arith.constant 1.000000e+00 : f32
    %155 = vector.broadcast %cst_42 : f32 to vector<8x32xf32>
    %156 = arith.subf %155, %147 : vector<8x32xf32>
    %157 = arith.mulf %156, %154 : vector<8x32xf32>
    %158 = arith.mulf %147, %130 : vector<8x32xf32>
    %159 = arith.addf %157, %158 : vector<8x32xf32>
    %160 = arith.index_cast %134 : i32 to index
    %c0_43 = arith.constant 0 : index
    %161 = vector.load %arg10[%160, %c0_43] : memref<64x32xf32, #tpu.memory_space<vmem>>, vector<8x32xf32>
    tpu.vector_store %arg10[%160, %c0_43], %159 {strides = array<i32>} : memref<64x32xf32, #tpu.memory_space<vmem>>, vector<8x32xf32>,
    %c5_i32 = arith.constant 5 : i32
    %c8_i32_44 = arith.constant 8 : i32
    %162 = arith.muli %c5_i32, %c8_i32_44 : i32
    %163 = tpu.assume_multiple %162, 8 : i32
    %164 = arith.index_cast %163 : i32 to index
    %c0_45 = arith.constant 0 : index
    %165 = vector.load %arg12[%164, %c0_45] : memref<64x96xf32, #tpu.memory_space<vmem>>, vector<8x96xf32>
    %cst_46 = arith.constant dense<0.000000e+00> : vector<8x96xf32>
    %166 = tpu.matmul %159, %9, %cst_46 {dimension_numbers = #tpu.dot_dimension_numbers<[1], [0], [0], [1], [0, 0, 1, 1], [], []>} : vector<8x32xf32>, vector<32x96xf32>, vector<8x96xf32> -> vector<8x96xf32>
    %167 = vector.extract_strided_slice %165 {offsets = [0, 0], sizes = [8, 64], strides = [1, 1]} : vector<8x96xf32> to vector<8x64xf32>
    %168 = vector.extract_strided_slice %166 {offsets = [0, 0], sizes = [8, 64], strides = [1, 1]} : vector<8x96xf32> to vector<8x64xf32>
    %169 = arith.addf %167, %168 : vector<8x64xf32>
    %170 = arith.negf %169 : vector<8x64xf32>
    %171 = math.exp %170 : vector<8x64xf32>
    %cst_47 = arith.constant 1.000000e+00 : f32
    %172 = vector.broadcast %cst_47 : f32 to vector<8x64xf32>
    %173 = arith.addf %172, %171 : vector<8x64xf32>
    %174 = arith.divf %172, %173 : vector<8x64xf32>
    %175 = vector.extract_strided_slice %174 {offsets = [0, 0], sizes = [8, 32], strides = [1, 1]} : vector<8x64xf32> to vector<8x32xf32>
    %176 = vector.extract_strided_slice %174 {offsets = [0, 32], sizes = [8, 32], strides = [1, 1]} : vector<8x64xf32> to vector<8x32xf32>
    %177 = vector.extract_strided_slice %165 {offsets = [0, 64], sizes = [8, 32], strides = [1, 1]} : vector<8x96xf32> to vector<8x32xf32>
    %178 = vector.extract_strided_slice %166 {offsets = [0, 64], sizes = [8, 32], strides = [1, 1]} : vector<8x96xf32> to vector<8x32xf32>
    %179 = vector.broadcast %11 : vector<1x32xf32> to vector<8x32xf32>
    %180 = arith.addf %178, %179 : vector<8x32xf32>
    %181 = arith.mulf %175, %180 : vector<8x32xf32>
    %182 = arith.addf %177, %181 : vector<8x32xf32>
    %183 = math.tanh %182 : vector<8x32xf32>
    %cst_48 = arith.constant 1.000000e+00 : f32
    %184 = vector.broadcast %cst_48 : f32 to vector<8x32xf32>
    %185 = arith.subf %184, %176 : vector<8x32xf32>
    %186 = arith.mulf %185, %183 : vector<8x32xf32>
    %187 = arith.mulf %176, %159 : vector<8x32xf32>
    %188 = arith.addf %186, %187 : vector<8x32xf32>
    %189 = arith.index_cast %163 : i32 to index
    %c0_49 = arith.constant 0 : index
    %190 = vector.load %arg10[%189, %c0_49] : memref<64x32xf32, #tpu.memory_space<vmem>>, vector<8x32xf32>
    tpu.vector_store %arg10[%189, %c0_49], %188 {strides = array<i32>} : memref<64x32xf32, #tpu.memory_space<vmem>>, vector<8x32xf32>,
    %c6_i32 = arith.constant 6 : i32
    %c8_i32_50 = arith.constant 8 : i32
    %191 = arith.muli %c6_i32, %c8_i32_50 : i32
    %192 = tpu.assume_multiple %191, 8 : i32
    %193 = arith.index_cast %192 : i32 to index
    %c0_51 = arith.constant 0 : index
    %194 = vector.load %arg12[%193, %c0_51] : memref<64x96xf32, #tpu.memory_space<vmem>>, vector<8x96xf32>
    %cst_52 = arith.constant dense<0.000000e+00> : vector<8x96xf32>
    %195 = tpu.matmul %188, %9, %cst_52 {dimension_numbers = #tpu.dot_dimension_numbers<[1], [0], [0], [1], [0, 0, 1, 1], [], []>} : vector<8x32xf32>, vector<32x96xf32>, vector<8x96xf32> -> vector<8x96xf32>
    %196 = vector.extract_strided_slice %194 {offsets = [0, 0], sizes = [8, 64], strides = [1, 1]} : vector<8x96xf32> to vector<8x64xf32>
    %197 = vector.extract_strided_slice %195 {offsets = [0, 0], sizes = [8, 64], strides = [1, 1]} : vector<8x96xf32> to vector<8x64xf32>
    %198 = arith.addf %196, %197 : vector<8x64xf32>
    %199 = arith.negf %198 : vector<8x64xf32>
    %200 = math.exp %199 : vector<8x64xf32>
    %cst_53 = arith.constant 1.000000e+00 : f32
    %201 = vector.broadcast %cst_53 : f32 to vector<8x64xf32>
    %202 = arith.addf %201, %200 : vector<8x64xf32>
    %203 = arith.divf %201, %202 : vector<8x64xf32>
    %204 = vector.extract_strided_slice %203 {offsets = [0, 0], sizes = [8, 32], strides = [1, 1]} : vector<8x64xf32> to vector<8x32xf32>
    %205 = vector.extract_strided_slice %203 {offsets = [0, 32], sizes = [8, 32], strides = [1, 1]} : vector<8x64xf32> to vector<8x32xf32>
    %206 = vector.extract_strided_slice %194 {offsets = [0, 64], sizes = [8, 32], strides = [1, 1]} : vector<8x96xf32> to vector<8x32xf32>
    %207 = vector.extract_strided_slice %195 {offsets = [0, 64], sizes = [8, 32], strides = [1, 1]} : vector<8x96xf32> to vector<8x32xf32>
    %208 = vector.broadcast %11 : vector<1x32xf32> to vector<8x32xf32>
    %209 = arith.addf %207, %208 : vector<8x32xf32>
    %210 = arith.mulf %204, %209 : vector<8x32xf32>
    %211 = arith.addf %206, %210 : vector<8x32xf32>
    %212 = math.tanh %211 : vector<8x32xf32>
    %cst_54 = arith.constant 1.000000e+00 : f32
    %213 = vector.broadcast %cst_54 : f32 to vector<8x32xf32>
    %214 = arith.subf %213, %205 : vector<8x32xf32>
    %215 = arith.mulf %214, %212 : vector<8x32xf32>
    %216 = arith.mulf %205, %188 : vector<8x32xf32>
    %217 = arith.addf %215, %216 : vector<8x32xf32>
    %218 = arith.index_cast %192 : i32 to index
    %c0_55 = arith.constant 0 : index
    %219 = vector.load %arg10[%218, %c0_55] : memref<64x32xf32, #tpu.memory_space<vmem>>, vector<8x32xf32>
    tpu.vector_store %arg10[%218, %c0_55], %217 {strides = array<i32>} : memref<64x32xf32, #tpu.memory_space<vmem>>, vector<8x32xf32>,
    %c7_i32 = arith.constant 7 : i32
    %c8_i32_56 = arith.constant 8 : i32
    %220 = arith.muli %c7_i32, %c8_i32_56 : i32
    %221 = tpu.assume_multiple %220, 8 : i32
    %222 = arith.index_cast %221 : i32 to index
    %c0_57 = arith.constant 0 : index
    %223 = vector.load %arg12[%222, %c0_57] : memref<64x96xf32, #tpu.memory_space<vmem>>, vector<8x96xf32>
    %cst_58 = arith.constant dense<0.000000e+00> : vector<8x96xf32>
    %224 = tpu.matmul %217, %9, %cst_58 {dimension_numbers = #tpu.dot_dimension_numbers<[1], [0], [0], [1], [0, 0, 1, 1], [], []>} : vector<8x32xf32>, vector<32x96xf32>, vector<8x96xf32> -> vector<8x96xf32>
    %225 = vector.extract_strided_slice %223 {offsets = [0, 0], sizes = [8, 64], strides = [1, 1]} : vector<8x96xf32> to vector<8x64xf32>
    %226 = vector.extract_strided_slice %224 {offsets = [0, 0], sizes = [8, 64], strides = [1, 1]} : vector<8x96xf32> to vector<8x64xf32>
    %227 = arith.addf %225, %226 : vector<8x64xf32>
    %228 = arith.negf %227 : vector<8x64xf32>
    %229 = math.exp %228 : vector<8x64xf32>
    %cst_59 = arith.constant 1.000000e+00 : f32
    %230 = vector.broadcast %cst_59 : f32 to vector<8x64xf32>
    %231 = arith.addf %230, %229 : vector<8x64xf32>
    %232 = arith.divf %230, %231 : vector<8x64xf32>
    %233 = vector.extract_strided_slice %232 {offsets = [0, 0], sizes = [8, 32], strides = [1, 1]} : vector<8x64xf32> to vector<8x32xf32>
    %234 = vector.extract_strided_slice %232 {offsets = [0, 32], sizes = [8, 32], strides = [1, 1]} : vector<8x64xf32> to vector<8x32xf32>
    %235 = vector.extract_strided_slice %223 {offsets = [0, 64], sizes = [8, 32], strides = [1, 1]} : vector<8x96xf32> to vector<8x32xf32>
    %236 = vector.extract_strided_slice %224 {offsets = [0, 64], sizes = [8, 32], strides = [1, 1]} : vector<8x96xf32> to vector<8x32xf32>
    %237 = vector.broadcast %11 : vector<1x32xf32> to vector<8x32xf32>
    %238 = arith.addf %236, %237 : vector<8x32xf32>
    %239 = arith.mulf %233, %238 : vector<8x32xf32>
    %240 = arith.addf %235, %239 : vector<8x32xf32>
    %241 = math.tanh %240 : vector<8x32xf32>
    %cst_60 = arith.constant 1.000000e+00 : f32
    %242 = vector.broadcast %cst_60 : f32 to vector<8x32xf32>
    %243 = arith.subf %242, %234 : vector<8x32xf32>
    %244 = arith.mulf %243, %241 : vector<8x32xf32>
    %245 = arith.mulf %234, %217 : vector<8x32xf32>
    %246 = arith.addf %244, %245 : vector<8x32xf32>
    %247 = arith.index_cast %221 : i32 to index
    %c0_61 = arith.constant 0 : index
    %248 = vector.load %arg10[%247, %c0_61] : memref<64x32xf32, #tpu.memory_space<vmem>>, vector<8x32xf32>
    tpu.vector_store %arg10[%247, %c0_61], %246 {strides = array<i32>} : memref<64x32xf32, #tpu.memory_space<vmem>>, vector<8x32xf32>,
    %c8_i32_62 = arith.constant 8 : i32
    %c0_63 = arith.constant 0 : index
    %c0_64 = arith.constant 0 : index
    %249 = vector.load %arg11[%c0_63, %c0_64] : memref<16x32xf32, #tpu.memory_space<vmem>>, vector<8x32xf32>
    tpu.vector_store %arg11[%c0_63, %c0_64], %246 {strides = array<i32>} : memref<16x32xf32, #tpu.memory_space<vmem>>, vector<8x32xf32>,
    %c0_65 = arith.constant 0 : index
    %c0_66 = arith.constant 0 : index
    %250 = vector.load %arg6[%c0_65, %c0_66] : memref<32x96xf32, #tpu.memory_space<vmem>>, vector<32x96xf32>
    %c0_67 = arith.constant 0 : index
    %c0_68 = arith.constant 0 : index
    %251 = vector.load %arg7[%c0_67, %c0_68] : memref<32x96xf32, #tpu.memory_space<vmem>>, vector<32x96xf32>
    %c0_69 = arith.constant 0 : index
    %c0_70 = arith.constant 0 : index
    %252 = vector.load %arg8[%c0_69, %c0_70] : memref<1x96xf32, #tpu.memory_space<vmem>>, vector<1x96xf32>
    %c0_71 = arith.constant 0 : index
    %c0_72 = arith.constant 0 : index
    %253 = vector.load %arg9[%c0_71, %c0_72] : memref<1x32xf32, #tpu.memory_space<vmem>>, vector<1x32xf32>
    %c0_73 = arith.constant 0 : index
    %c0_74 = arith.constant 0 : index
    %254 = vector.load %arg10[%c0_73, %c0_74] : memref<64x32xf32, #tpu.memory_space<vmem>>, vector<64x32xf32>
    %cst_75 = arith.constant dense<0.000000e+00> : vector<64x96xf32>
    %255 = tpu.matmul %254, %250, %cst_75 {dimension_numbers = #tpu.dot_dimension_numbers<[1], [0], [0], [1], [0, 0, 1, 1], [], []>} : vector<64x32xf32>, vector<32x96xf32>, vector<64x96xf32> -> vector<64x96xf32>
    %256 = vector.broadcast %252 : vector<1x96xf32> to vector<64x96xf32>
    %257 = arith.addf %255, %256 : vector<64x96xf32>
    %c0_76 = arith.constant 0 : index
    %c0_77 = arith.constant 0 : index
    %258 = vector.load %arg12[%c0_76, %c0_77] : memref<64x96xf32, #tpu.memory_space<vmem>>, vector<64x96xf32>
    tpu.vector_store %arg12[%c0_76, %c0_77], %257 {strides = array<i32>} : memref<64x96xf32, #tpu.memory_space<vmem>>, vector<64x96xf32>,
    %cst_78 = arith.constant 0.000000e+00 : f32
    %259 = vector.broadcast %cst_78 : f32 to vector<8x32xf32>
    %c0_i32_79 = arith.constant 0 : i32
    %c8_i32_80 = arith.constant 8 : i32
    %260 = arith.muli %c0_i32_79, %c8_i32_80 : i32
    %261 = tpu.assume_multiple %260, 8 : i32
    %262 = arith.index_cast %261 : i32 to index
    %c0_81 = arith.constant 0 : index
    %263 = vector.load %arg12[%262, %c0_81] : memref<64x96xf32, #tpu.memory_space<vmem>>, vector<8x96xf32>
    %cst_82 = arith.constant dense<0.000000e+00> : vector<8x96xf32>
    %264 = tpu.matmul %259, %251, %cst_82 {dimension_numbers = #tpu.dot_dimension_numbers<[1], [0], [0], [1], [0, 0, 1, 1], [], []>} : vector<8x32xf32>, vector<32x96xf32>, vector<8x96xf32> -> vector<8x96xf32>
    %265 = vector.extract_strided_slice %263 {offsets = [0, 0], sizes = [8, 64], strides = [1, 1]} : vector<8x96xf32> to vector<8x64xf32>
    %266 = vector.extract_strided_slice %264 {offsets = [0, 0], sizes = [8, 64], strides = [1, 1]} : vector<8x96xf32> to vector<8x64xf32>
    %267 = arith.addf %265, %266 : vector<8x64xf32>
    %268 = arith.negf %267 : vector<8x64xf32>
    %269 = math.exp %268 : vector<8x64xf32>
    %cst_83 = arith.constant 1.000000e+00 : f32
    %270 = vector.broadcast %cst_83 : f32 to vector<8x64xf32>
    %271 = arith.addf %270, %269 : vector<8x64xf32>
    %272 = arith.divf %270, %271 : vector<8x64xf32>
    %273 = vector.extract_strided_slice %272 {offsets = [0, 0], sizes = [8, 32], strides = [1, 1]} : vector<8x64xf32> to vector<8x32xf32>
    %274 = vector.extract_strided_slice %272 {offsets = [0, 32], sizes = [8, 32], strides = [1, 1]} : vector<8x64xf32> to vector<8x32xf32>
    %275 = vector.extract_strided_slice %263 {offsets = [0, 64], sizes = [8, 32], strides = [1, 1]} : vector<8x96xf32> to vector<8x32xf32>
    %276 = vector.extract_strided_slice %264 {offsets = [0, 64], sizes = [8, 32], strides = [1, 1]} : vector<8x96xf32> to vector<8x32xf32>
    %277 = vector.broadcast %253 : vector<1x32xf32> to vector<8x32xf32>
    %278 = arith.addf %276, %277 : vector<8x32xf32>
    %279 = arith.mulf %273, %278 : vector<8x32xf32>
    %280 = arith.addf %275, %279 : vector<8x32xf32>
    %281 = math.tanh %280 : vector<8x32xf32>
    %cst_84 = arith.constant 1.000000e+00 : f32
    %282 = vector.broadcast %cst_84 : f32 to vector<8x32xf32>
    %283 = arith.subf %282, %274 : vector<8x32xf32>
    %284 = arith.mulf %283, %281 : vector<8x32xf32>
    %285 = arith.mulf %274, %259 : vector<8x32xf32>
    %286 = arith.addf %284, %285 : vector<8x32xf32>
    %287 = arith.index_cast %261 : i32 to index
    %c0_85 = arith.constant 0 : index
    %288 = vector.load %arg10[%287, %c0_85] : memref<64x32xf32, #tpu.memory_space<vmem>>, vector<8x32xf32>
    tpu.vector_store %arg10[%287, %c0_85], %286 {strides = array<i32>} : memref<64x32xf32, #tpu.memory_space<vmem>>, vector<8x32xf32>,
    %c1_i32_86 = arith.constant 1 : i32
    %c8_i32_87 = arith.constant 8 : i32
    %289 = arith.muli %c1_i32_86, %c8_i32_87 : i32
    %290 = tpu.assume_multiple %289, 8 : i32
    %291 = arith.index_cast %290 : i32 to index
    %c0_88 = arith.constant 0 : index
    %292 = vector.load %arg12[%291, %c0_88] : memref<64x96xf32, #tpu.memory_space<vmem>>, vector<8x96xf32>
    %cst_89 = arith.constant dense<0.000000e+00> : vector<8x96xf32>
    %293 = tpu.matmul %286, %251, %cst_89 {dimension_numbers = #tpu.dot_dimension_numbers<[1], [0], [0], [1], [0, 0, 1, 1], [], []>} : vector<8x32xf32>, vector<32x96xf32>, vector<8x96xf32> -> vector<8x96xf32>
    %294 = vector.extract_strided_slice %292 {offsets = [0, 0], sizes = [8, 64], strides = [1, 1]} : vector<8x96xf32> to vector<8x64xf32>
    %295 = vector.extract_strided_slice %293 {offsets = [0, 0], sizes = [8, 64], strides = [1, 1]} : vector<8x96xf32> to vector<8x64xf32>
    %296 = arith.addf %294, %295 : vector<8x64xf32>
    %297 = arith.negf %296 : vector<8x64xf32>
    %298 = math.exp %297 : vector<8x64xf32>
    %cst_90 = arith.constant 1.000000e+00 : f32
    %299 = vector.broadcast %cst_90 : f32 to vector<8x64xf32>
    %300 = arith.addf %299, %298 : vector<8x64xf32>
    %301 = arith.divf %299, %300 : vector<8x64xf32>
    %302 = vector.extract_strided_slice %301 {offsets = [0, 0], sizes = [8, 32], strides = [1, 1]} : vector<8x64xf32> to vector<8x32xf32>
    %303 = vector.extract_strided_slice %301 {offsets = [0, 32], sizes = [8, 32], strides = [1, 1]} : vector<8x64xf32> to vector<8x32xf32>
    %304 = vector.extract_strided_slice %292 {offsets = [0, 64], sizes = [8, 32], strides = [1, 1]} : vector<8x96xf32> to vector<8x32xf32>
    %305 = vector.extract_strided_slice %293 {offsets = [0, 64], sizes = [8, 32], strides = [1, 1]} : vector<8x96xf32> to vector<8x32xf32>
    %306 = vector.broadcast %253 : vector<1x32xf32> to vector<8x32xf32>
    %307 = arith.addf %305, %306 : vector<8x32xf32>
    %308 = arith.mulf %302, %307 : vector<8x32xf32>
    %309 = arith.addf %304, %308 : vector<8x32xf32>
    %310 = math.tanh %309 : vector<8x32xf32>
    %cst_91 = arith.constant 1.000000e+00 : f32
    %311 = vector.broadcast %cst_91 : f32 to vector<8x32xf32>
    %312 = arith.subf %311, %303 : vector<8x32xf32>
    %313 = arith.mulf %312, %310 : vector<8x32xf32>
    %314 = arith.mulf %303, %286 : vector<8x32xf32>
    %315 = arith.addf %313, %314 : vector<8x32xf32>
    %316 = arith.index_cast %290 : i32 to index
    %c0_92 = arith.constant 0 : index
    %317 = vector.load %arg10[%316, %c0_92] : memref<64x32xf32, #tpu.memory_space<vmem>>, vector<8x32xf32>
    tpu.vector_store %arg10[%316, %c0_92], %315 {strides = array<i32>} : memref<64x32xf32, #tpu.memory_space<vmem>>, vector<8x32xf32>,
    %c2_i32_93 = arith.constant 2 : i32
    %c8_i32_94 = arith.constant 8 : i32
    %318 = arith.muli %c2_i32_93, %c8_i32_94 : i32
    %319 = tpu.assume_multiple %318, 8 : i32
    %320 = arith.index_cast %319 : i32 to index
    %c0_95 = arith.constant 0 : index
    %321 = vector.load %arg12[%320, %c0_95] : memref<64x96xf32, #tpu.memory_space<vmem>>, vector<8x96xf32>
    %cst_96 = arith.constant dense<0.000000e+00> : vector<8x96xf32>
    %322 = tpu.matmul %315, %251, %cst_96 {dimension_numbers = #tpu.dot_dimension_numbers<[1], [0], [0], [1], [0, 0, 1, 1], [], []>} : vector<8x32xf32>, vector<32x96xf32>, vector<8x96xf32> -> vector<8x96xf32>
    %323 = vector.extract_strided_slice %321 {offsets = [0, 0], sizes = [8, 64], strides = [1, 1]} : vector<8x96xf32> to vector<8x64xf32>
    %324 = vector.extract_strided_slice %322 {offsets = [0, 0], sizes = [8, 64], strides = [1, 1]} : vector<8x96xf32> to vector<8x64xf32>
    %325 = arith.addf %323, %324 : vector<8x64xf32>
    %326 = arith.negf %325 : vector<8x64xf32>
    %327 = math.exp %326 : vector<8x64xf32>
    %cst_97 = arith.constant 1.000000e+00 : f32
    %328 = vector.broadcast %cst_97 : f32 to vector<8x64xf32>
    %329 = arith.addf %328, %327 : vector<8x64xf32>
    %330 = arith.divf %328, %329 : vector<8x64xf32>
    %331 = vector.extract_strided_slice %330 {offsets = [0, 0], sizes = [8, 32], strides = [1, 1]} : vector<8x64xf32> to vector<8x32xf32>
    %332 = vector.extract_strided_slice %330 {offsets = [0, 32], sizes = [8, 32], strides = [1, 1]} : vector<8x64xf32> to vector<8x32xf32>
    %333 = vector.extract_strided_slice %321 {offsets = [0, 64], sizes = [8, 32], strides = [1, 1]} : vector<8x96xf32> to vector<8x32xf32>
    %334 = vector.extract_strided_slice %322 {offsets = [0, 64], sizes = [8, 32], strides = [1, 1]} : vector<8x96xf32> to vector<8x32xf32>
    %335 = vector.broadcast %253 : vector<1x32xf32> to vector<8x32xf32>
    %336 = arith.addf %334, %335 : vector<8x32xf32>
    %337 = arith.mulf %331, %336 : vector<8x32xf32>
    %338 = arith.addf %333, %337 : vector<8x32xf32>
    %339 = math.tanh %338 : vector<8x32xf32>
    %cst_98 = arith.constant 1.000000e+00 : f32
    %340 = vector.broadcast %cst_98 : f32 to vector<8x32xf32>
    %341 = arith.subf %340, %332 : vector<8x32xf32>
    %342 = arith.mulf %341, %339 : vector<8x32xf32>
    %343 = arith.mulf %332, %315 : vector<8x32xf32>
    %344 = arith.addf %342, %343 : vector<8x32xf32>
    %345 = arith.index_cast %319 : i32 to index
    %c0_99 = arith.constant 0 : index
    %346 = vector.load %arg10[%345, %c0_99] : memref<64x32xf32, #tpu.memory_space<vmem>>, vector<8x32xf32>
    tpu.vector_store %arg10[%345, %c0_99], %344 {strides = array<i32>} : memref<64x32xf32, #tpu.memory_space<vmem>>, vector<8x32xf32>,
    %c3_i32_100 = arith.constant 3 : i32
    %c8_i32_101 = arith.constant 8 : i32
    %347 = arith.muli %c3_i32_100, %c8_i32_101 : i32
    %348 = tpu.assume_multiple %347, 8 : i32
    %349 = arith.index_cast %348 : i32 to index
    %c0_102 = arith.constant 0 : index
    %350 = vector.load %arg12[%349, %c0_102] : memref<64x96xf32, #tpu.memory_space<vmem>>, vector<8x96xf32>
    %cst_103 = arith.constant dense<0.000000e+00> : vector<8x96xf32>
    %351 = tpu.matmul %344, %251, %cst_103 {dimension_numbers = #tpu.dot_dimension_numbers<[1], [0], [0], [1], [0, 0, 1, 1], [], []>} : vector<8x32xf32>, vector<32x96xf32>, vector<8x96xf32> -> vector<8x96xf32>
    %352 = vector.extract_strided_slice %350 {offsets = [0, 0], sizes = [8, 64], strides = [1, 1]} : vector<8x96xf32> to vector<8x64xf32>
    %353 = vector.extract_strided_slice %351 {offsets = [0, 0], sizes = [8, 64], strides = [1, 1]} : vector<8x96xf32> to vector<8x64xf32>
    %354 = arith.addf %352, %353 : vector<8x64xf32>
    %355 = arith.negf %354 : vector<8x64xf32>
    %356 = math.exp %355 : vector<8x64xf32>
    %cst_104 = arith.constant 1.000000e+00 : f32
    %357 = vector.broadcast %cst_104 : f32 to vector<8x64xf32>
    %358 = arith.addf %357, %356 : vector<8x64xf32>
    %359 = arith.divf %357, %358 : vector<8x64xf32>
    %360 = vector.extract_strided_slice %359 {offsets = [0, 0], sizes = [8, 32], strides = [1, 1]} : vector<8x64xf32> to vector<8x32xf32>
    %361 = vector.extract_strided_slice %359 {offsets = [0, 32], sizes = [8, 32], strides = [1, 1]} : vector<8x64xf32> to vector<8x32xf32>
    %362 = vector.extract_strided_slice %350 {offsets = [0, 64], sizes = [8, 32], strides = [1, 1]} : vector<8x96xf32> to vector<8x32xf32>
    %363 = vector.extract_strided_slice %351 {offsets = [0, 64], sizes = [8, 32], strides = [1, 1]} : vector<8x96xf32> to vector<8x32xf32>
    %364 = vector.broadcast %253 : vector<1x32xf32> to vector<8x32xf32>
    %365 = arith.addf %363, %364 : vector<8x32xf32>
    %366 = arith.mulf %360, %365 : vector<8x32xf32>
    %367 = arith.addf %362, %366 : vector<8x32xf32>
    %368 = math.tanh %367 : vector<8x32xf32>
    %cst_105 = arith.constant 1.000000e+00 : f32
    %369 = vector.broadcast %cst_105 : f32 to vector<8x32xf32>
    %370 = arith.subf %369, %361 : vector<8x32xf32>
    %371 = arith.mulf %370, %368 : vector<8x32xf32>
    %372 = arith.mulf %361, %344 : vector<8x32xf32>
    %373 = arith.addf %371, %372 : vector<8x32xf32>
    %374 = arith.index_cast %348 : i32 to index
    %c0_106 = arith.constant 0 : index
    %375 = vector.load %arg10[%374, %c0_106] : memref<64x32xf32, #tpu.memory_space<vmem>>, vector<8x32xf32>
    tpu.vector_store %arg10[%374, %c0_106], %373 {strides = array<i32>} : memref<64x32xf32, #tpu.memory_space<vmem>>, vector<8x32xf32>,
    %c4_i32_107 = arith.constant 4 : i32
    %c8_i32_108 = arith.constant 8 : i32
    %376 = arith.muli %c4_i32_107, %c8_i32_108 : i32
    %377 = tpu.assume_multiple %376, 8 : i32
    %378 = arith.index_cast %377 : i32 to index
    %c0_109 = arith.constant 0 : index
    %379 = vector.load %arg12[%378, %c0_109] : memref<64x96xf32, #tpu.memory_space<vmem>>, vector<8x96xf32>
    %cst_110 = arith.constant dense<0.000000e+00> : vector<8x96xf32>
    %380 = tpu.matmul %373, %251, %cst_110 {dimension_numbers = #tpu.dot_dimension_numbers<[1], [0], [0], [1], [0, 0, 1, 1], [], []>} : vector<8x32xf32>, vector<32x96xf32>, vector<8x96xf32> -> vector<8x96xf32>
    %381 = vector.extract_strided_slice %379 {offsets = [0, 0], sizes = [8, 64], strides = [1, 1]} : vector<8x96xf32> to vector<8x64xf32>
    %382 = vector.extract_strided_slice %380 {offsets = [0, 0], sizes = [8, 64], strides = [1, 1]} : vector<8x96xf32> to vector<8x64xf32>
    %383 = arith.addf %381, %382 : vector<8x64xf32>
    %384 = arith.negf %383 : vector<8x64xf32>
    %385 = math.exp %384 : vector<8x64xf32>
    %cst_111 = arith.constant 1.000000e+00 : f32
    %386 = vector.broadcast %cst_111 : f32 to vector<8x64xf32>
    %387 = arith.addf %386, %385 : vector<8x64xf32>
    %388 = arith.divf %386, %387 : vector<8x64xf32>
    %389 = vector.extract_strided_slice %388 {offsets = [0, 0], sizes = [8, 32], strides = [1, 1]} : vector<8x64xf32> to vector<8x32xf32>
    %390 = vector.extract_strided_slice %388 {offsets = [0, 32], sizes = [8, 32], strides = [1, 1]} : vector<8x64xf32> to vector<8x32xf32>
    %391 = vector.extract_strided_slice %379 {offsets = [0, 64], sizes = [8, 32], strides = [1, 1]} : vector<8x96xf32> to vector<8x32xf32>
    %392 = vector.extract_strided_slice %380 {offsets = [0, 64], sizes = [8, 32], strides = [1, 1]} : vector<8x96xf32> to vector<8x32xf32>
    %393 = vector.broadcast %253 : vector<1x32xf32> to vector<8x32xf32>
    %394 = arith.addf %392, %393 : vector<8x32xf32>
    %395 = arith.mulf %389, %394 : vector<8x32xf32>
    %396 = arith.addf %391, %395 : vector<8x32xf32>
    %397 = math.tanh %396 : vector<8x32xf32>
    %cst_112 = arith.constant 1.000000e+00 : f32
    %398 = vector.broadcast %cst_112 : f32 to vector<8x32xf32>
    %399 = arith.subf %398, %390 : vector<8x32xf32>
    %400 = arith.mulf %399, %397 : vector<8x32xf32>
    %401 = arith.mulf %390, %373 : vector<8x32xf32>
    %402 = arith.addf %400, %401 : vector<8x32xf32>
    %403 = arith.index_cast %377 : i32 to index
    %c0_113 = arith.constant 0 : index
    %404 = vector.load %arg10[%403, %c0_113] : memref<64x32xf32, #tpu.memory_space<vmem>>, vector<8x32xf32>
    tpu.vector_store %arg10[%403, %c0_113], %402 {strides = array<i32>} : memref<64x32xf32, #tpu.memory_space<vmem>>, vector<8x32xf32>,
    %c5_i32_114 = arith.constant 5 : i32
    %c8_i32_115 = arith.constant 8 : i32
    %405 = arith.muli %c5_i32_114, %c8_i32_115 : i32
    %406 = tpu.assume_multiple %405, 8 : i32
    %407 = arith.index_cast %406 : i32 to index
    %c0_116 = arith.constant 0 : index
    %408 = vector.load %arg12[%407, %c0_116] : memref<64x96xf32, #tpu.memory_space<vmem>>, vector<8x96xf32>
    %cst_117 = arith.constant dense<0.000000e+00> : vector<8x96xf32>
    %409 = tpu.matmul %402, %251, %cst_117 {dimension_numbers = #tpu.dot_dimension_numbers<[1], [0], [0], [1], [0, 0, 1, 1], [], []>} : vector<8x32xf32>, vector<32x96xf32>, vector<8x96xf32> -> vector<8x96xf32>
    %410 = vector.extract_strided_slice %408 {offsets = [0, 0], sizes = [8, 64], strides = [1, 1]} : vector<8x96xf32> to vector<8x64xf32>
    %411 = vector.extract_strided_slice %409 {offsets = [0, 0], sizes = [8, 64], strides = [1, 1]} : vector<8x96xf32> to vector<8x64xf32>
    %412 = arith.addf %410, %411 : vector<8x64xf32>
    %413 = arith.negf %412 : vector<8x64xf32>
    %414 = math.exp %413 : vector<8x64xf32>
    %cst_118 = arith.constant 1.000000e+00 : f32
    %415 = vector.broadcast %cst_118 : f32 to vector<8x64xf32>
    %416 = arith.addf %415, %414 : vector<8x64xf32>
    %417 = arith.divf %415, %416 : vector<8x64xf32>
    %418 = vector.extract_strided_slice %417 {offsets = [0, 0], sizes = [8, 32], strides = [1, 1]} : vector<8x64xf32> to vector<8x32xf32>
    %419 = vector.extract_strided_slice %417 {offsets = [0, 32], sizes = [8, 32], strides = [1, 1]} : vector<8x64xf32> to vector<8x32xf32>
    %420 = vector.extract_strided_slice %408 {offsets = [0, 64], sizes = [8, 32], strides = [1, 1]} : vector<8x96xf32> to vector<8x32xf32>
    %421 = vector.extract_strided_slice %409 {offsets = [0, 64], sizes = [8, 32], strides = [1, 1]} : vector<8x96xf32> to vector<8x32xf32>
    %422 = vector.broadcast %253 : vector<1x32xf32> to vector<8x32xf32>
    %423 = arith.addf %421, %422 : vector<8x32xf32>
    %424 = arith.mulf %418, %423 : vector<8x32xf32>
    %425 = arith.addf %420, %424 : vector<8x32xf32>
    %426 = math.tanh %425 : vector<8x32xf32>
    %cst_119 = arith.constant 1.000000e+00 : f32
    %427 = vector.broadcast %cst_119 : f32 to vector<8x32xf32>
    %428 = arith.subf %427, %419 : vector<8x32xf32>
    %429 = arith.mulf %428, %426 : vector<8x32xf32>
    %430 = arith.mulf %419, %402 : vector<8x32xf32>
    %431 = arith.addf %429, %430 : vector<8x32xf32>
    %432 = arith.index_cast %406 : i32 to index
    %c0_120 = arith.constant 0 : index
    %433 = vector.load %arg10[%432, %c0_120] : memref<64x32xf32, #tpu.memory_space<vmem>>, vector<8x32xf32>
    tpu.vector_store %arg10[%432, %c0_120], %431 {strides = array<i32>} : memref<64x32xf32, #tpu.memory_space<vmem>>, vector<8x32xf32>,
    %c6_i32_121 = arith.constant 6 : i32
    %c8_i32_122 = arith.constant 8 : i32
    %434 = arith.muli %c6_i32_121, %c8_i32_122 : i32
    %435 = tpu.assume_multiple %434, 8 : i32
    %436 = arith.index_cast %435 : i32 to index
    %c0_123 = arith.constant 0 : index
    %437 = vector.load %arg12[%436, %c0_123] : memref<64x96xf32, #tpu.memory_space<vmem>>, vector<8x96xf32>
    %cst_124 = arith.constant dense<0.000000e+00> : vector<8x96xf32>
    %438 = tpu.matmul %431, %251, %cst_124 {dimension_numbers = #tpu.dot_dimension_numbers<[1], [0], [0], [1], [0, 0, 1, 1], [], []>} : vector<8x32xf32>, vector<32x96xf32>, vector<8x96xf32> -> vector<8x96xf32>
    %439 = vector.extract_strided_slice %437 {offsets = [0, 0], sizes = [8, 64], strides = [1, 1]} : vector<8x96xf32> to vector<8x64xf32>
    %440 = vector.extract_strided_slice %438 {offsets = [0, 0], sizes = [8, 64], strides = [1, 1]} : vector<8x96xf32> to vector<8x64xf32>
    %441 = arith.addf %439, %440 : vector<8x64xf32>
    %442 = arith.negf %441 : vector<8x64xf32>
    %443 = math.exp %442 : vector<8x64xf32>
    %cst_125 = arith.constant 1.000000e+00 : f32
    %444 = vector.broadcast %cst_125 : f32 to vector<8x64xf32>
    %445 = arith.addf %444, %443 : vector<8x64xf32>
    %446 = arith.divf %444, %445 : vector<8x64xf32>
    %447 = vector.extract_strided_slice %446 {offsets = [0, 0], sizes = [8, 32], strides = [1, 1]} : vector<8x64xf32> to vector<8x32xf32>
    %448 = vector.extract_strided_slice %446 {offsets = [0, 32], sizes = [8, 32], strides = [1, 1]} : vector<8x64xf32> to vector<8x32xf32>
    %449 = vector.extract_strided_slice %437 {offsets = [0, 64], sizes = [8, 32], strides = [1, 1]} : vector<8x96xf32> to vector<8x32xf32>
    %450 = vector.extract_strided_slice %438 {offsets = [0, 64], sizes = [8, 32], strides = [1, 1]} : vector<8x96xf32> to vector<8x32xf32>
    %451 = vector.broadcast %253 : vector<1x32xf32> to vector<8x32xf32>
    %452 = arith.addf %450, %451 : vector<8x32xf32>
    %453 = arith.mulf %447, %452 : vector<8x32xf32>
    %454 = arith.addf %449, %453 : vector<8x32xf32>
    %455 = math.tanh %454 : vector<8x32xf32>
    %cst_126 = arith.constant 1.000000e+00 : f32
    %456 = vector.broadcast %cst_126 : f32 to vector<8x32xf32>
    %457 = arith.subf %456, %448 : vector<8x32xf32>
    %458 = arith.mulf %457, %455 : vector<8x32xf32>
    %459 = arith.mulf %448, %431 : vector<8x32xf32>
    %460 = arith.addf %458, %459 : vector<8x32xf32>
    %461 = arith.index_cast %435 : i32 to index
    %c0_127 = arith.constant 0 : index
    %462 = vector.load %arg10[%461, %c0_127] : memref<64x32xf32, #tpu.memory_space<vmem>>, vector<8x32xf32>
    tpu.vector_store %arg10[%461, %c0_127], %460 {strides = array<i32>} : memref<64x32xf32, #tpu.memory_space<vmem>>, vector<8x32xf32>,
    %c7_i32_128 = arith.constant 7 : i32
    %c8_i32_129 = arith.constant 8 : i32
    %463 = arith.muli %c7_i32_128, %c8_i32_129 : i32
    %464 = tpu.assume_multiple %463, 8 : i32
    %465 = arith.index_cast %464 : i32 to index
    %c0_130 = arith.constant 0 : index
    %466 = vector.load %arg12[%465, %c0_130] : memref<64x96xf32, #tpu.memory_space<vmem>>, vector<8x96xf32>
    %cst_131 = arith.constant dense<0.000000e+00> : vector<8x96xf32>
    %467 = tpu.matmul %460, %251, %cst_131 {dimension_numbers = #tpu.dot_dimension_numbers<[1], [0], [0], [1], [0, 0, 1, 1], [], []>} : vector<8x32xf32>, vector<32x96xf32>, vector<8x96xf32> -> vector<8x96xf32>
    %468 = vector.extract_strided_slice %466 {offsets = [0, 0], sizes = [8, 64], strides = [1, 1]} : vector<8x96xf32> to vector<8x64xf32>
    %469 = vector.extract_strided_slice %467 {offsets = [0, 0], sizes = [8, 64], strides = [1, 1]} : vector<8x96xf32> to vector<8x64xf32>
    %470 = arith.addf %468, %469 : vector<8x64xf32>
    %471 = arith.negf %470 : vector<8x64xf32>
    %472 = math.exp %471 : vector<8x64xf32>
    %cst_132 = arith.constant 1.000000e+00 : f32
    %473 = vector.broadcast %cst_132 : f32 to vector<8x64xf32>
    %474 = arith.addf %473, %472 : vector<8x64xf32>
    %475 = arith.divf %473, %474 : vector<8x64xf32>
    %476 = vector.extract_strided_slice %475 {offsets = [0, 0], sizes = [8, 32], strides = [1, 1]} : vector<8x64xf32> to vector<8x32xf32>
    %477 = vector.extract_strided_slice %475 {offsets = [0, 32], sizes = [8, 32], strides = [1, 1]} : vector<8x64xf32> to vector<8x32xf32>
    %478 = vector.extract_strided_slice %466 {offsets = [0, 64], sizes = [8, 32], strides = [1, 1]} : vector<8x96xf32> to vector<8x32xf32>
    %479 = vector.extract_strided_slice %467 {offsets = [0, 64], sizes = [8, 32], strides = [1, 1]} : vector<8x96xf32> to vector<8x32xf32>
    %480 = vector.broadcast %253 : vector<1x32xf32> to vector<8x32xf32>
    %481 = arith.addf %479, %480 : vector<8x32xf32>
    %482 = arith.mulf %476, %481 : vector<8x32xf32>
    %483 = arith.addf %478, %482 : vector<8x32xf32>
    %484 = math.tanh %483 : vector<8x32xf32>
    %cst_133 = arith.constant 1.000000e+00 : f32
    %485 = vector.broadcast %cst_133 : f32 to vector<8x32xf32>
    %486 = arith.subf %485, %477 : vector<8x32xf32>
    %487 = arith.mulf %486, %484 : vector<8x32xf32>
    %488 = arith.mulf %477, %460 : vector<8x32xf32>
    %489 = arith.addf %487, %488 : vector<8x32xf32>
    %490 = arith.index_cast %464 : i32 to index
    %c0_134 = arith.constant 0 : index
    %491 = vector.load %arg10[%490, %c0_134] : memref<64x32xf32, #tpu.memory_space<vmem>>, vector<8x32xf32>
    tpu.vector_store %arg10[%490, %c0_134], %489 {strides = array<i32>} : memref<64x32xf32, #tpu.memory_space<vmem>>, vector<8x32xf32>,
    %c8_i32_135 = arith.constant 8 : i32
    %c8 = arith.constant 8 : index
    %c0_136 = arith.constant 0 : index
    %492 = vector.load %arg11[%c8, %c0_136] : memref<16x32xf32, #tpu.memory_space<vmem>>, vector<8x32xf32>
    tpu.vector_store %arg11[%c8, %c0_136], %489 {strides = array<i32>} : memref<16x32xf32, #tpu.memory_space<vmem>>, vector<8x32xf32>,
    return
  }
}

</mosaic_0001>

<llo_original>
// kernel: tpu_custom_call.1
$region0: #{tpu_custom_call.1}
  #allocation0 [shape = 'u32[]', space=smem, size = 0x4, offset = 0x4, fixed_abs, tag = 'smem constant byte address 0x4 - core index']
  #allocation1 [shape = 'u32[144,128]{1,0:T(1,128)}', space=vmem, size = 0x12000, scoped, tag = 'internal scratch']
  #allocation2 [shape = 'f32[64,96]{1,0:T(8,128)}', space=vmem, size = 0x8000, scoped, tag = 'scratch operand']
  %s0 = inlined_call_operand.vmem [shape: s32[64,1], index: 0, kind: input, shape index: {}]
  %s1 = inlined_call_operand.vmem [shape: f32[32,32], index: 1, kind: input, shape index: {}]
  %s2 = inlined_call_operand.vmem [shape: f32[32,96], index: 2, kind: input, shape index: {}]
  %s3 = inlined_call_operand.hbm [shape: f32[32,96], index: 3, kind: input, shape index: {}]
  %s4 = inlined_call_operand.vmem [shape: f32[1,96], index: 4, kind: input, shape index: {}]
  %s5 = inlined_call_operand.vmem [shape: f32[1,32], index: 5, kind: input, shape index: {}]
  %s6 = inlined_call_operand.hbm [shape: f32[32,96], index: 6, kind: input, shape index: {}]
  %s7 = inlined_call_operand.hbm [shape: f32[32,96], index: 7, kind: input, shape index: {}]
  %s8 = inlined_call_operand.vmem [shape: f32[1,96], index: 8, kind: input, shape index: {}]
  %s9 = inlined_call_operand.vmem [shape: f32[1,32], index: 9, kind: input, shape index: {}]
  %s10 = inlined_call_operand.vmem [shape: f32[64,32], index: 10, kind: output, shape index: {0}]
  %s11 = inlined_call_operand.hbm [shape: f32[16,32], index: 11, kind: output, shape index: {1}]
  %12 = xla_tuple %s10, %s11
  %s13 = sld [smem:[#allocation0]]
  $region70: #{tpu_custom_call.1} parent=0
    _
  %s15 = ssub.s32 1, %s13
  %s16 = scalar_select 0, %s15, %s13
  $region1: #{tpu_custom_call.1} parent=0
    #allocation3 [shape = 'u8[16384]{0}', space=vmem, size = 0x4000, scoped, tag = 'input window, operand 3, single buffered']
    #allocation4 [shape = 's32[1]{0}', space=sflag, size = 0x4, scoped, tag = 'scoped memory for tpu_custom_call.1']
    #allocation5 [shape = 's32[1]{0}', space=sflag, size = 0x4, scoped, tag = 'scoped memory for tpu_custom_call.1']
    #allocation6 [shape = 'u8[16384]{0}', space=vmem, size = 0x4000, scoped, tag = 'input window, operand 6, single buffered']
    #allocation7 [shape = 's32[1]{0}', space=sflag, size = 0x4, scoped, tag = 'scoped memory for tpu_custom_call.1']
    #allocation8 [shape = 'u8[16384]{0}', space=vmem, size = 0x4000, scoped, tag = 'input window, operand 7, single buffered']
    #allocation9 [shape = 'u8[8192]{0}', space=vmem, size = 0x2000, scoped, tag = 'output window, operand 1, single buffered']
    %17 = vsyncpa [#allocation4], 0
    %18 = vsyncpa [#allocation7], 0
    %19 = vsyncpa [#allocation5], 0
    // Predicated region
    $region2: #{tpu_custom_call.1} parent=1 // pred_check
      _
    $region3: #{tpu_custom_call.1} parent=1 // pred_check_branch
      %21 = sbr.rel (0) target = $region5
    $region4: #{tpu_custom_call.1} parent=1 // pred_region
      _
    $region5: #{tpu_custom_call.1} parent=1 // pred_fallthru
      _
    // Predicated region
    $region6: #{tpu_custom_call.1} parent=1 // pred_check
      _
    $region7: #{tpu_custom_call.1} parent=1 // pred_check_branch
      %23 = sbr.rel (0) target = $region9
    $region8: #{tpu_custom_call.1} parent=1 // pred_region
      _
    $region9: #{tpu_custom_call.1} parent=1 // pred_fallthru
      _
    // Predicated region
    $region10: #{tpu_custom_call.1} parent=1 // pred_check
      _
    $region11: #{tpu_custom_call.1} parent=1 // pred_check_branch
      %25 = sbr.rel (0) target = $region13
    $region12: #{tpu_custom_call.1} parent=1 // pred_region
      _
    $region13: #{tpu_custom_call.1} parent=1 // pred_fallthru
      _
    // Predicated region
    $region14: #{tpu_custom_call.1} parent=1 // pred_check
      _
    $region15: #{tpu_custom_call.1} parent=1 // pred_check_branch
      %27 = sbr.rel (0) target = $region17
    $region16: #{tpu_custom_call.1} parent=1 // pred_region
      %s29 = ssub.s32 512, 512
      %30 = vsyncadd [#allocation4], %s29
      %s31 = sshll.u32 [#allocation3], 4
      %s32 = int_to_ptr.vmem [resolvable:$true] %s31
      %37 = dma.hbm_to_vmem [thread:$0]  %s3, 512, %s32, [#allocation4], 128, 128, 8
    $region17: #{tpu_custom_call.1} parent=1 // pred_fallthru
      _
    // Predicated region
    $region18: #{tpu_custom_call.1} parent=1 // pred_check
      _
    $region19: #{tpu_custom_call.1} parent=1 // pred_check_branch
      %39 = sbr.rel (0) target = $region21
    $region20: #{tpu_custom_call.1} parent=1 // pred_region
      _
    $region21: #{tpu_custom_call.1} parent=1 // pred_fallthru
      _
    // Predicated region
    $region22: #{tpu_custom_call.1} parent=1 // pred_check
      _
    $region23: #{tpu_custom_call.1} parent=1 // pred_check_branch
      %41 = sbr.rel (0) target = $region25
    $region24: #{tpu_custom_call.1} parent=1 // pred_region
      _
    $region25: #{tpu_custom_call.1} parent=1 // pred_fallthru
      _
    // Predicated region
    $region26: #{tpu_custom_call.1} parent=1 // pred_check
      _
    $region27: #{tpu_custom_call.1} parent=1 // pred_check_branch
      %43 = sbr.rel (0) target = $region29
    $region28: #{tpu_custom_call.1} parent=1 // pred_region
      %s45 = ssub.s32 512, 512
      %46 = vsyncadd [#allocation7], %s45
      %s47 = sshll.u32 [#allocation6], 4
      %s48 = int_to_ptr.vmem [resolvable:$true] %s47
      %53 = dma.hbm_to_vmem [thread:$0]  %s6, 512, %s48, [#allocation7], 128, 128, 8
    $region29: #{tpu_custom_call.1} parent=1 // pred_fallthru
      _
    // Predicated region
    $region30: #{tpu_custom_call.1} parent=1 // pred_check
      _
    $region31: #{tpu_custom_call.1} parent=1 // pred_check_branch
      %55 = sbr.rel (0) target = $region33
    $region32: #{tpu_custom_call.1} parent=1 // pred_region
      %s57 = ssub.s32 512, 512
      %58 = vsyncadd [#allocation7], %s57
      %s59 = sshll.u32 [#allocation8], 4
      %s60 = int_to_ptr.vmem [resolvable:$true] %s59
      %65 = dma.hbm_to_vmem [thread:$0]  %s7, 512, %s60, [#allocation7], 128, 128, 8
    $region33: #{tpu_custom_call.1} parent=1 // pred_fallthru
      _
    // Predicated region
    $region34: #{tpu_custom_call.1} parent=1 // pred_check
      _
    $region35: #{tpu_custom_call.1} parent=1 // pred_check_branch
      %67 = sbr.rel (0) target = $region37
    $region36: #{tpu_custom_call.1} parent=1 // pred_region
      _
    $region37: #{tpu_custom_call.1} parent=1 // pred_fallthru
      _
    // Predicated region
    $region38: #{tpu_custom_call.1} parent=1 // pred_check
      _
    $region39: #{tpu_custom_call.1} parent=1 // pred_check_branch
      %69 = sbr.rel (0) target = $region41
    $region40: #{tpu_custom_call.1} parent=1 // pred_region
      _
    $region41: #{tpu_custom_call.1} parent=1 // pred_fallthru
      _
    // Predicated region
    $region42: #{tpu_custom_call.1} parent=1 // pred_check
      _
    $region43: #{tpu_custom_call.1} parent=1 // pred_check_branch
      %71 = sbr.rel (0) target = $region45
    $region44: #{tpu_custom_call.1} parent=1 // pred_region
      %72 = dma.done [#allocation4], 512
    $region45: #{tpu_custom_call.1} parent=1 // pred_fallthru
      _
    // Predicated region
    $region46: #{tpu_custom_call.1} parent=1 // pred_check
      _
    $region47: #{tpu_custom_call.1} parent=1 // pred_check_branch
      %74 = sbr.rel (0) target = $region49
    $region48: #{tpu_custom_call.1} parent=1 // pred_region
      %75 = dma.done [#allocation7], 512
    $region49: #{tpu_custom_call.1} parent=1 // pred_fallthru
      _
    // Predicated region
    $region50: #{tpu_custom_call.1} parent=1 // pred_check
      _
    $region51: #{tpu_custom_call.1} parent=1 // pred_check_branch
      %77 = sbr.rel (0) target = $region53
    $region52: #{tpu_custom_call.1} parent=1 // pred_region
      %78 = dma.done [#allocation7], 512
    $region53: #{tpu_custom_call.1} parent=1 // pred_fallthru
      _
    %v79 = vld [vmem:[%s0] sm:$0xff]
    %v80 = vld [vmem:[%s0 + $0x8] sm:$0xff]
    %v81 = vld [vmem:[%s0 + $0x10] sm:$0xff]
    %v82 = vld [vmem:[%s0 + $0x18] sm:$0xff]
    %v83 = vld [vmem:[%s0 + $0x20] sm:$0xff]
    %v84 = vld [vmem:[%s0 + $0x28] sm:$0xff]
    %v85 = vld [vmem:[%s0 + $0x30] sm:$0xff]
    %v86 = vld [vmem:[%s0 + $0x38] sm:$0xff]
    %v87 = vlaneseq
    %v88 = vand.u32 %v87, 127
    %89 = vset.pattern.permute.xlu0 0
    %90 = vperm.xlu0 %89, %v79
    %v91 = vpop.permute.xlu0 %90
    %92 = vset.pattern.permute.xlu0 0
    %93 = vperm.xlu0 %92, %v80
    %v94 = vpop.permute.xlu0 %93
    %95 = vset.pattern.permute.xlu0 0
    %96 = vperm.xlu0 %95, %v81
    %v97 = vpop.permute.xlu0 %96
    %98 = vset.pattern.permute.xlu0 0
    %99 = vperm.xlu0 %98, %v82
    %v100 = vpop.permute.xlu0 %99
    %101 = vset.pattern.permute.xlu0 0
    %102 = vperm.xlu0 %101, %v83
    %v103 = vpop.permute.xlu0 %102
    %104 = vset.pattern.permute.xlu0 0
    %105 = vperm.xlu0 %104, %v84
    %v106 = vpop.permute.xlu0 %105
    %107 = vset.pattern.permute.xlu0 0
    %108 = vperm.xlu0 %107, %v85
    %v109 = vpop.permute.xlu0 %108
    %110 = vset.pattern.permute.xlu0 0
    %111 = vperm.xlu0 %110, %v86
    %v112 = vpop.permute.xlu0 %111
    %vm113 = vcmp.eq.s32.totalorder %v88, %v91
    %vm114 = vcmp.eq.s32.totalorder %v88, %v94
    %vm115 = vcmp.eq.s32.totalorder %v88, %v97
    %vm116 = vcmp.eq.s32.totalorder %v88, %v100
    %vm117 = vcmp.eq.s32.totalorder %v88, %v103
    %vm118 = vcmp.eq.s32.totalorder %v88, %v106
    %vm119 = vcmp.eq.s32.totalorder %v88, %v109
    %vm120 = vcmp.eq.s32.totalorder %v88, %v112
    %v121 = vsel %vm113, 1, 0
    %v122 = vsel %vm114, 1, 0
    %v123 = vsel %vm115, 1, 0
    %v124 = vsel %vm116, 1, 0
    %v125 = vsel %vm117, 1, 0
    %v126 = vsel %vm118, 1, 0
    %v127 = vsel %vm119, 1, 0
    %v128 = vsel %vm120, 1, 0
    %v129 = vcvt.s32.f32 %v121
    %v130 = vcvt.s32.f32 %v122
    %v131 = vcvt.s32.f32 %v123
    %v132 = vcvt.s32.f32 %v124
    %v133 = vcvt.s32.f32 %v125
    %v134 = vcvt.s32.f32 %v126
    %v135 = vcvt.s32.f32 %v127
    %v136 = vcvt.s32.f32 %v128
    %v137 = vld [vmem:[%s1] sm:$0xff]
    %v138 = vld [vmem:[%s1 + $0x8] sm:$0xff]
    %v139 = vld [vmem:[%s1 + $0x10] sm:$0xff]
    %v140 = vld [vmem:[%s1 + $0x18] sm:$0xff]
    %vm141 = vcmask 261120
    %v143 = vsel %vm141, %v129, 0
    %v146 = vsel %vm141, %v130, 0
    %v149 = vsel %vm141, %v131, 0
    %v152 = vsel %vm141, %v132, 0
    %v155 = vsel %vm141, %v133, 0
    %v158 = vsel %vm141, %v134, 0
    %v161 = vsel %vm141, %v135, 0
    %v164 = vsel %vm141, %v136, 0
    %166 = vmatprep.subr.mxu0 0.0
    %167 = vmatpush1.msra.mxu0 %v137
    %168 = vmatprep.subr.mxu0 0.0
    %169 = vmatpush1.msra.mxu0 %v138
    %170 = vmatprep.subr.mxu0 0.0
    %171 = vmatpush1.msra.mxu0 %v139
    %172 = vmatprep.subr.mxu0 0.0
    %173 = vmatpush1.msra.mxu0 %v140
    %174 = vmatprep.subr.mxu0 0.0
    %175 = vmatpush1.msra.mxu0 0.0
    %176 = vmatprep.subr.mxu0 0.0
    %177 = vmatpush1.msra.mxu0 0.0
    %178 = vmatprep.subr.mxu0 0.0
    %179 = vmatpush1.msra.mxu0 0.0
    %180 = vmatprep.subr.mxu0 0.0
    %181 = vmatpush1.msra.mxu0 0.0
    %182 = vmatprep.subr.mxu0 0.0
    %183 = vmatpush1.msra.mxu0 0.0
    %184 = vmatprep.subr.mxu0 0.0
    %185 = vmatpush1.msra.mxu0 0.0
    %186 = vmatprep.subr.mxu0 0.0
    %187 = vmatpush1.msra.mxu0 0.0
    %188 = vmatprep.subr.mxu0 0.0
    %189 = vmatpush1.msra.mxu0 0.0
    %190 = vmatprep.subr.mxu0 0.0
    %191 = vmatpush1.msra.mxu0 0.0
    %192 = vmatprep.subr.mxu0 0.0
    %193 = vmatpush1.msra.mxu0 0.0
    %194 = vmatprep.subr.mxu0 0.0
    %195 = vmatpush1.msra.mxu0 0.0
    %196 = vmatprep.subr.mxu0 0.0
    %197 = vmatpush1.msra.mxu0 0.0
    %198 = vmatprep.subr.mxu0 0.0
    %199 = vmatpush1.msra.mxu0 0.0
    %200 = vmatprep.subr.mxu0 0.0
    %201 = vmatpush1.msra.mxu0 0.0
    %202 = vmatprep.subr.mxu0 0.0
    %203 = vmatpush1.msra.mxu0 0.0
    %204 = vmatprep.subr.mxu0 0.0
    %205 = vmatpush1.msra.mxu0 0.0
    %206 = vmatprep.subr.mxu0 0.0
    %207 = vmatpush1.msra.mxu0 0.0
    %208 = vmatprep.subr.mxu0 0.0
    %209 = vmatpush1.msra.mxu0 0.0
    %210 = vmatprep.subr.mxu0 0.0
    %211 = vmatpush1.msra.mxu0 0.0
    %212 = vmatprep.subr.mxu0 0.0
    %213 = vmatpush1.msra.mxu0 0.0
    %214 = vmatprep.subr.mxu0 0.0
    %215 = vmatpush1.msra.mxu0 0.0
    %216 = vmatprep.subr.mxu0 0.0
    %217 = vmatpush1.msra.mxu0 0.0
    %218 = vmatprep.subr.mxu0 0.0
    %219 = vmatpush1.msra.mxu0 0.0
    %220 = vmatprep.subr.mxu0 0.0
    %221 = vmatpush1.msra.mxu0 0.0
    %222 = vmatprep.subr.mxu0 0.0
    %223 = vmatpush1.msra.mxu0 0.0
    %224 = vmatprep.subr.mxu0 0.0
    %225 = vmatpush1.msra.mxu0 0.0
    %226 = vmatprep.subr.mxu0 0.0
    %227 = vmatpush1.msra.mxu0 0.0
    %228 = vmatprep.subr.mxu0 0.0
    %229 = vmatpush1.msra.mxu0 0.0
    %230 = vmatprep.mubr.f32.mxu0 0.0
    %231 = vmatmul.mubr.f32.gmra.mrb[0].mxu0 %v143
    %v232 = vpop.f32.mrb[0].mxu0
    %v233 = vadd.f32 0.0, %v232
    %v234 = vpop.f32.mrb[0].mxu0
    %235 = vmatprep.mubr.f32.mxu0 0.0
    %236 = vmatmul.mubr.f32.gmra.mrb[0].mxu0 %v146
    %v237 = vpop.f32.mrb[0].mxu0
    %v238 = vadd.f32 0.0, %v237
    %v239 = vpop.f32.mrb[0].mxu0
    %240 = vmatprep.mubr.f32.mxu0 0.0
    %241 = vmatmul.mubr.f32.gmra.mrb[0].mxu0 %v149
    %v242 = vpop.f32.mrb[0].mxu0
    %v243 = vadd.f32 0.0, %v242
    %v244 = vpop.f32.mrb[0].mxu0
    %245 = vmatprep.mubr.f32.mxu0 0.0
    %246 = vmatmul.mubr.f32.gmra.mrb[0].mxu0 %v152
    %v247 = vpop.f32.mrb[0].mxu0
    %v248 = vadd.f32 0.0, %v247
    %v249 = vpop.f32.mrb[0].mxu0
    %250 = vmatprep.mubr.f32.mxu0 0.0
    %251 = vmatmul.mubr.f32.gmra.mrb[0].mxu0 %v155
    %v252 = vpop.f32.mrb[0].mxu0
    %v253 = vadd.f32 0.0, %v252
    %v254 = vpop.f32.mrb[0].mxu0
    %255 = vmatprep.mubr.f32.mxu0 0.0
    %256 = vmatmul.mubr.f32.gmra.mrb[0].mxu0 %v158
    %v257 = vpop.f32.mrb[0].mxu0
    %v258 = vadd.f32 0.0, %v257
    %v259 = vpop.f32.mrb[0].mxu0
    %260 = vmatprep.mubr.f32.mxu0 0.0
    %261 = vmatmul.mubr.f32.gmra.mrb[0].mxu0 %v161
    %v262 = vpop.f32.mrb[0].mxu0
    %v263 = vadd.f32 0.0, %v262
    %v264 = vpop.f32.mrb[0].mxu0
    %265 = vmatprep.mubr.f32.mxu0 0.0
    %266 = vmatmul.mubr.f32.gmra.mrb[0].mxu0 %v164
    %v267 = vpop.f32.mrb[0].mxu0
    %v268 = vadd.f32 0.0, %v267
    %v269 = vpop.f32.mrb[0].mxu0
    %270 = vdwg.mxu0
    %v271 = vld [vmem:[%s2] sm:$0xff]
    %v272 = vld [vmem:[%s2 + $0x8] sm:$0xff]
    %v273 = vld [vmem:[%s2 + $0x10] sm:$0xff]
    %v274 = vld [vmem:[%s2 + $0x18] sm:$0xff]
    %v275 = vld [vmem:[#allocation3] sm:$0xff]
    %v276 = vld [vmem:[#allocation3 + $0x8] sm:$0xff]
    %v277 = vld [vmem:[#allocation3 + $0x10] sm:$0xff]
    %v278 = vld [vmem:[#allocation3 + $0x18] sm:$0xff]
    %v279 = vld [vmem:[%s4] sm:$0x1]
    %v280 = vld [vmem:[%s5] sm:$0x1]
    %v282 = vlaneseq
    %v283 = vshrl.u32 %v282, 7
    %v284 = vsub.s32 0, %v283
    %v285 = vrot.slane %v279, %v284
    %v288 = vsel %vm141, %v233, 0
    %v291 = vsel %vm141, %v238, 0
    %v294 = vsel %vm141, %v243, 0
    %v297 = vsel %vm141, %v248, 0
    %v300 = vsel %vm141, %v253, 0
    %v303 = vsel %vm141, %v258, 0
    %v306 = vsel %vm141, %v263, 0
    %v309 = vsel %vm141, %v268, 0
    %311 = vmatprep.subr.mxu0 0.0
    %312 = vmatpush1.msra.mxu0 %v271
    %313 = vmatprep.subr.mxu0 0.0
    %314 = vmatpush1.msra.mxu0 %v272
    %315 = vmatprep.subr.mxu0 0.0
    %316 = vmatpush1.msra.mxu0 %v273
    %317 = vmatprep.subr.mxu0 0.0
    %318 = vmatpush1.msra.mxu0 %v274
    %319 = vmatprep.subr.mxu0 0.0
    %320 = vmatpush1.msra.mxu0 0.0
    %321 = vmatprep.subr.mxu0 0.0
    %322 = vmatpush1.msra.mxu0 0.0
    %323 = vmatprep.subr.mxu0 0.0
    %324 = vmatpush1.msra.mxu0 0.0
    %325 = vmatprep.subr.mxu0 0.0
    %326 = vmatpush1.msra.mxu0 0.0
    %327 = vmatprep.subr.mxu0 0.0
    %328 = vmatpush1.msra.mxu0 0.0
    %329 = vmatprep.subr.mxu0 0.0
    %330 = vmatpush1.msra.mxu0 0.0
    %331 = vmatprep.subr.mxu0 0.0
    %332 = vmatpush1.msra.mxu0 0.0
    %333 = vmatprep.subr.mxu0 0.0
    %334 = vmatpush1.msra.mxu0 0.0
    %335 = vmatprep.subr.mxu0 0.0
    %336 = vmatpush1.msra.mxu0 0.0
    %337 = vmatprep.subr.mxu0 0.0
    %338 = vmatpush1.msra.mxu0 0.0
    %339 = vmatprep.subr.mxu0 0.0
    %340 = vmatpush1.msra.mxu0 0.0
    %341 = vmatprep.subr.mxu0 0.0
    %342 = vmatpush1.msra.mxu0 0.0
    %343 = vmatprep.subr.mxu0 0.0
    %344 = vmatpush1.msra.mxu0 0.0
    %345 = vmatprep.subr.mxu0 0.0
    %346 = vmatpush1.msra.mxu0 0.0
    %347 = vmatprep.subr.mxu0 0.0
    %348 = vmatpush1.msra.mxu0 0.0
    %349 = vmatprep.subr.mxu0 0.0
    %350 = vmatpush1.msra.mxu0 0.0
    %351 = vmatprep.subr.mxu0 0.0
    %352 = vmatpush1.msra.mxu0 0.0
    %353 = vmatprep.subr.mxu0 0.0
    %354 = vmatpush1.msra.mxu0 0.0
    %355 = vmatprep.subr.mxu0 0.0
    %356 = vmatpush1.msra.mxu0 0.0
    %357 = vmatprep.subr.mxu0 0.0
    %358 = vmatpush1.msra.mxu0 0.0
    %359 = vmatprep.subr.mxu0 0.0
    %360 = vmatpush1.msra.mxu0 0.0
    %361 = vmatprep.subr.mxu0 0.0
    %362 = vmatpush1.msra.mxu0 0.0
    %363 = vmatprep.subr.mxu0 0.0
    %364 = vmatpush1.msra.mxu0 0.0
    %365 = vmatprep.subr.mxu0 0.0
    %366 = vmatpush1.msra.mxu0 0.0
    %367 = vmatprep.subr.mxu0 0.0
    %368 = vmatpush1.msra.mxu0 0.0
    %369 = vmatprep.subr.mxu0 0.0
    %370 = vmatpush1.msra.mxu0 0.0
    %371 = vmatprep.subr.mxu0 0.0
    %372 = vmatpush1.msra.mxu0 0.0
    %373 = vmatprep.subr.mxu0 0.0
    %374 = vmatpush1.msra.mxu0 0.0
    %375 = vmatprep.mubr.f32.mxu0 0.0
    %376 = vmatmul.mubr.f32.gmra.mrb[0].mxu0 %v288
    %v377 = vpop.f32.mrb[0].mxu0
    %v378 = vadd.f32 %v285, %v377
    %v379 = vpop.f32.mrb[0].mxu0
    %380 = vmatprep.mubr.f32.mxu0 0.0
    %381 = vmatmul.mubr.f32.gmra.mrb[0].mxu0 %v291
    %v382 = vpop.f32.mrb[0].mxu0
    %v383 = vadd.f32 %v285, %v382
    %v384 = vpop.f32.mrb[0].mxu0
    %385 = vmatprep.mubr.f32.mxu0 0.0
    %386 = vmatmul.mubr.f32.gmra.mrb[0].mxu0 %v294
    %v387 = vpop.f32.mrb[0].mxu0
    %v388 = vadd.f32 %v285, %v387
    %v389 = vpop.f32.mrb[0].mxu0
    %390 = vmatprep.mubr.f32.mxu0 0.0
    %391 = vmatmul.mubr.f32.gmra.mrb[0].mxu0 %v297
    %v392 = vpop.f32.mrb[0].mxu0
    %v393 = vadd.f32 %v285, %v392
    %v394 = vpop.f32.mrb[0].mxu0
    %395 = vmatprep.mubr.f32.mxu0 0.0
    %396 = vmatmul.mubr.f32.gmra.mrb[0].mxu0 %v300
    %v397 = vpop.f32.mrb[0].mxu0
    %v398 = vadd.f32 %v285, %v397
    %v399 = vpop.f32.mrb[0].mxu0
    %400 = vmatprep.mubr.f32.mxu0 0.0
    %401 = vmatmul.mubr.f32.gmra.mrb[0].mxu0 %v303
    %v402 = vpop.f32.mrb[0].mxu0
    %v403 = vadd.f32 %v285, %v402
    %v404 = vpop.f32.mrb[0].mxu0
    %405 = vmatprep.mubr.f32.mxu0 0.0
    %406 = vmatmul.mubr.f32.gmra.mrb[0].mxu0 %v306
    %v407 = vpop.f32.mrb[0].mxu0
    %v408 = vadd.f32 %v285, %v407
    %v409 = vpop.f32.mrb[0].mxu0
    %410 = vmatprep.mubr.f32.mxu0 0.0
    %411 = vmatmul.mubr.f32.gmra.mrb[0].mxu0 %v309
    %v412 = vpop.f32.mrb[0].mxu0
    %v413 = vadd.f32 %v285, %v412
    %v414 = vpop.f32.mrb[0].mxu0
    %415 = vdwg.mxu0
    %vm416 = vcmask 785408
    %417 = vst.msk [vmem:[#allocation2] sm:$0xff] %vm416, %v378
    %418 = vst.msk [vmem:[#allocation2 + $0x8] sm:$0xff] %vm416, %v383
    %419 = vst.msk [vmem:[#allocation2 + $0x10] sm:$0xff] %vm416, %v388
    %420 = vst.msk [vmem:[#allocation2 + $0x18] sm:$0xff] %vm416, %v393
    %421 = vst.msk [vmem:[#allocation2 + $0x20] sm:$0xff] %vm416, %v398
    %422 = vst.msk [vmem:[#allocation2 + $0x28] sm:$0xff] %vm416, %v403
    %423 = vst.msk [vmem:[#allocation2 + $0x30] sm:$0xff] %vm416, %v408
    %424 = vst.msk [vmem:[#allocation2 + $0x38] sm:$0xff] %vm416, %v413
    %v425 = vld [vmem:[#allocation2] sm:$0xff]
    %v427 = vsel %vm141, 0.0, 0
    %429 = vmatprep.subr.mxu0 0.0
    %430 = vmatpush1.msra.mxu0 %v275
    %431 = vmatprep.subr.mxu0 0.0
    %432 = vmatpush1.msra.mxu0 %v276
    %433 = vmatprep.subr.mxu0 0.0
    %434 = vmatpush1.msra.mxu0 %v277
    %435 = vmatprep.subr.mxu0 0.0
    %436 = vmatpush1.msra.mxu0 %v278
    %437 = vmatprep.subr.mxu0 0.0
    %438 = vmatpush1.msra.mxu0 0.0
    %439 = vmatprep.subr.mxu0 0.0
    %440 = vmatpush1.msra.mxu0 0.0
    %441 = vmatprep.subr.mxu0 0.0
    %442 = vmatpush1.msra.mxu0 0.0
    %443 = vmatprep.subr.mxu0 0.0
    %444 = vmatpush1.msra.mxu0 0.0
    %445 = vmatprep.subr.mxu0 0.0
    %446 = vmatpush1.msra.mxu0 0.0
    %447 = vmatprep.subr.mxu0 0.0
    %448 = vmatpush1.msra.mxu0 0.0
    %449 = vmatprep.subr.mxu0 0.0
    %450 = vmatpush1.msra.mxu0 0.0
    %451 = vmatprep.subr.mxu0 0.0
    %452 = vmatpush1.msra.mxu0 0.0
    %453 = vmatprep.subr.mxu0 0.0
    %454 = vmatpush1.msra.mxu0 0.0
    %455 = vmatprep.subr.mxu0 0.0
    %456 = vmatpush1.msra.mxu0 0.0
    %457 = vmatprep.subr.mxu0 0.0
    %458 = vmatpush1.msra.mxu0 0.0
    %459 = vmatprep.subr.mxu0 0.0
    %460 = vmatpush1.msra.mxu0 0.0
    %461 = vmatprep.subr.mxu0 0.0
    %462 = vmatpush1.msra.mxu0 0.0
    %463 = vmatprep.subr.mxu0 0.0
    %464 = vmatpush1.msra.mxu0 0.0
    %465 = vmatprep.subr.mxu0 0.0
    %466 = vmatpush1.msra.mxu0 0.0
    %467 = vmatprep.subr.mxu0 0.0
    %468 = vmatpush1.msra.mxu0 0.0
    %469 = vmatprep.subr.mxu0 0.0
    %470 = vmatpush1.msra.mxu0 0.0
    %471 = vmatprep.subr.mxu0 0.0
    %472 = vmatpush1.msra.mxu0 0.0
    %473 = vmatprep.subr.mxu0 0.0
    %474 = vmatpush1.msra.mxu0 0.0
    %475 = vmatprep.subr.mxu0 0.0
    %476 = vmatpush1.msra.mxu0 0.0
    %477 = vmatprep.subr.mxu0 0.0
    %478 = vmatpush1.msra.mxu0 0.0
    %479 = vmatprep.subr.mxu0 0.0
    %480 = vmatpush1.msra.mxu0 0.0
    %481 = vmatprep.subr.mxu0 0.0
    %482 = vmatpush1.msra.mxu0 0.0
    %483 = vmatprep.subr.mxu0 0.0
    %484 = vmatpush1.msra.mxu0 0.0
    %485 = vmatprep.subr.mxu0 0.0
    %486 = vmatpush1.msra.mxu0 0.0
    %487 = vmatprep.subr.mxu0 0.0
    %488 = vmatpush1.msra.mxu0 0.0
    %489 = vmatprep.subr.mxu0 0.0
    %490 = vmatpush1.msra.mxu0 0.0
    %491 = vmatprep.subr.mxu0 0.0
    %492 = vmatpush1.msra.mxu0 0.0
    %493 = vmatprep.mubr.f32.mxu0 0.0
    %494 = vmatmul.mubr.f32.gmra.mrb[0].mxu0 %v427
    %v495 = vpop.f32.mrb[0].mxu0
    %v496 = vadd.f32 0.0, %v495
    %v497 = vpop.f32.mrb[0].mxu0
    %498 = vdwg.mxu0
    %v499 = vadd.f32 %v425, %v496
    %v500 = vxor.u32 %v499, 2147483648
    %v501 = vmul.f32 %v500, 1.442695
    %v502 = vpow.pop %v501
    %v503 = vadd.f32 %v502, 1.0
    %v504 = vrcp.pop %v503
    %v505 = vmul.f32 1.0, %v504
    %v507 = vlaneseq
    %v508 = vshrl.u32 %v507, 7
    %v509 = vsub.s32 0, %v508
    %v510 = vrot.slane %v280, %v509
    %511 = vrot.lane.b32.xlu0 %v510, 64
    %v512 = vpop.permute.xlu0 %511
    %v514 = vadd.f32 %v496, %v512
    %516 = vrot.lane.b32.xlu0 %v514, 64
    %v517 = vpop.permute.xlu0 %516
    %v519 = vmul.f32 %v505, %v517
    %521 = vrot.lane.b32.xlu0 %v519, 64
    %v522 = vpop.permute.xlu0 %521
    %v524 = vadd.f32 %v425, %v522
    %v525 = vtanh.pop %v524
    %v526 = vsub.f32 1.0, %v505
    %528 = vrot.lane.b32.xlu0 %v525, 96
    %v529 = vpop.permute.xlu0 %528
    %v531 = vmul.f32 %v526, %v529
    %v532 = vmul.f32 %v505, 0.0
    %v533 = vadd.f32 %v531, %v532
    %535 = vrot.lane.b32.xlu0 %v533, 96
    %v536 = vpop.permute.xlu0 %535
    %538 = vst.msk [vmem:[%s10] sm:$0xff] %vm141, %v536
    %s539 = scalar_lea.vmem [#allocation2], 8
    %v540 = vld [vmem:[%s539] sm:$0xff]
    %v541 = vsel %vm141, %v536, 0
    %543 = vmatprep.subr.mxu0 0.0
    %544 = vmatpush1.msra.mxu0 %v275
    %545 = vmatprep.subr.mxu0 0.0
    %546 = vmatpush1.msra.mxu0 %v276
    %547 = vmatprep.subr.mxu0 0.0
    %548 = vmatpush1.msra.mxu0 %v277
    %549 = vmatprep.subr.mxu0 0.0
    %550 = vmatpush1.msra.mxu0 %v278
    %551 = vmatprep.subr.mxu0 0.0
    %552 = vmatpush1.msra.mxu0 0.0
    %553 = vmatprep.subr.mxu0 0.0
    %554 = vmatpush1.msra.mxu0 0.0
    %555 = vmatprep.subr.mxu0 0.0
    %556 = vmatpush1.msra.mxu0 0.0
    %557 = vmatprep.subr.mxu0 0.0
    %558 = vmatpush1.msra.mxu0 0.0
    %559 = vmatprep.subr.mxu0 0.0
    %560 = vmatpush1.msra.mxu0 0.0
    %561 = vmatprep.subr.mxu0 0.0
    %562 = vmatpush1.msra.mxu0 0.0
    %563 = vmatprep.subr.mxu0 0.0
    %564 = vmatpush1.msra.mxu0 0.0
    %565 = vmatprep.subr.mxu0 0.0
    %566 = vmatpush1.msra.mxu0 0.0
    %567 = vmatprep.subr.mxu0 0.0
    %568 = vmatpush1.msra.mxu0 0.0
    %569 = vmatprep.subr.mxu0 0.0
    %570 = vmatpush1.msra.mxu0 0.0
    %571 = vmatprep.subr.mxu0 0.0
    %572 = vmatpush1.msra.mxu0 0.0
    %573 = vmatprep.subr.mxu0 0.0
    %574 = vmatpush1.msra.mxu0 0.0
    %575 = vmatprep.subr.mxu0 0.0
    %576 = vmatpush1.msra.mxu0 0.0
    %577 = vmatprep.subr.mxu0 0.0
    %578 = vmatpush1.msra.mxu0 0.0
    %579 = vmatprep.subr.mxu0 0.0
    %580 = vmatpush1.msra.mxu0 0.0
    %581 = vmatprep.subr.mxu0 0.0
    %582 = vmatpush1.msra.mxu0 0.0
    %583 = vmatprep.subr.mxu0 0.0
    %584 = vmatpush1.msra.mxu0 0.0
    %585 = vmatprep.subr.mxu0 0.0
    %586 = vmatpush1.msra.mxu0 0.0
    %587 = vmatprep.subr.mxu0 0.0
    %588 = vmatpush1.msra.mxu0 0.0
    %589 = vmatprep.subr.mxu0 0.0
    %590 = vmatpush1.msra.mxu0 0.0
    %591 = vmatprep.subr.mxu0 0.0
    %592 = vmatpush1.msra.mxu0 0.0
    %593 = vmatprep.subr.mxu0 0.0
    %594 = vmatpush1.msra.mxu0 0.0
    %595 = vmatprep.subr.mxu0 0.0
    %596 = vmatpush1.msra.mxu0 0.0
    %597 = vmatprep.subr.mxu0 0.0
    %598 = vmatpush1.msra.mxu0 0.0
    %599 = vmatprep.subr.mxu0 0.0
    %600 = vmatpush1.msra.mxu0 0.0
    %601 = vmatprep.subr.mxu0 0.0
    %602 = vmatpush1.msra.mxu0 0.0
    %603 = vmatprep.subr.mxu0 0.0
    %604 = vmatpush1.msra.mxu0 0.0
    %605 = vmatprep.subr.mxu0 0.0
    %606 = vmatpush1.msra.mxu0 0.0
    %607 = vmatprep.mubr.f32.mxu0 0.0
    %608 = vmatmul.mubr.f32.gmra.mrb[0].mxu0 %v541
    %v609 = vpop.f32.mrb[0].mxu0
    %v610 = vadd.f32 0.0, %v609
    %v611 = vpop.f32.mrb[0].mxu0
    %612 = vdwg.mxu0
    %v613 = vadd.f32 %v540, %v610
    %v614 = vxor.u32 %v613, 2147483648
    %v615 = vmul.f32 %v614, 1.442695
    %v616 = vpow.pop %v615
    %v617 = vadd.f32 %v616, 1.0
    %v618 = vrcp.pop %v617
    %v619 = vmul.f32 1.0, %v618
    %v620 = vadd.f32 %v610, %v512
    %622 = vrot.lane.b32.xlu0 %v620, 64
    %v623 = vpop.permute.xlu0 %622
    %v625 = vmul.f32 %v619, %v623
    %627 = vrot.lane.b32.xlu0 %v625, 64
    %v628 = vpop.permute.xlu0 %627
    %v630 = vadd.f32 %v540, %v628
    %v631 = vtanh.pop %v630
    %v632 = vsub.f32 1.0, %v619
    %634 = vrot.lane.b32.xlu0 %v631, 96
    %v635 = vpop.permute.xlu0 %634
    %v637 = vmul.f32 %v632, %v635
    %v638 = vmul.f32 %v619, %v533
    %v639 = vadd.f32 %v637, %v638
    %641 = vrot.lane.b32.xlu0 %v639, 96
    %v642 = vpop.permute.xlu0 %641
    %s644 = scalar_lea.vmem %s10, 8
    %645 = vst.msk [vmem:[%s644] sm:$0xff] %vm141, %v642
    %s646 = scalar_lea.vmem [#allocation2], 16
    %v647 = vld [vmem:[%s646] sm:$0xff]
    %v648 = vsel %vm141, %v642, 0
    %650 = vmatprep.subr.mxu0 0.0
    %651 = vmatpush1.msra.mxu0 %v275
    %652 = vmatprep.subr.mxu0 0.0
    %653 = vmatpush1.msra.mxu0 %v276
    %654 = vmatprep.subr.mxu0 0.0
    %655 = vmatpush1.msra.mxu0 %v277
    %656 = vmatprep.subr.mxu0 0.0
    %657 = vmatpush1.msra.mxu0 %v278
    %658 = vmatprep.subr.mxu0 0.0
    %659 = vmatpush1.msra.mxu0 0.0
    %660 = vmatprep.subr.mxu0 0.0
    %661 = vmatpush1.msra.mxu0 0.0
    %662 = vmatprep.subr.mxu0 0.0
    %663 = vmatpush1.msra.mxu0 0.0
    %664 = vmatprep.subr.mxu0 0.0
    %665 = vmatpush1.msra.mxu0 0.0
    %666 = vmatprep.subr.mxu0 0.0
    %667 = vmatpush1.msra.mxu0 0.0
    %668 = vmatprep.subr.mxu0 0.0
    %669 = vmatpush1.msra.mxu0 0.0
    %670 = vmatprep.subr.mxu0 0.0
    %671 = vmatpush1.msra.mxu0 0.0
    %672 = vmatprep.subr.mxu0 0.0
    %673 = vmatpush1.msra.mxu0 0.0
    %674 = vmatprep.subr.mxu0 0.0
    %675 = vmatpush1.msra.mxu0 0.0
    %676 = vmatprep.subr.mxu0 0.0
    %677 = vmatpush1.msra.mxu0 0.0
    %678 = vmatprep.subr.mxu0 0.0
    %679 = vmatpush1.msra.mxu0 0.0
    %680 = vmatprep.subr.mxu0 0.0
    %681 = vmatpush1.msra.mxu0 0.0
    %682 = vmatprep.subr.mxu0 0.0
    %683 = vmatpush1.msra.mxu0 0.0
    %684 = vmatprep.subr.mxu0 0.0
    %685 = vmatpush1.msra.mxu0 0.0
    %686 = vmatprep.subr.mxu0 0.0
    %687 = vmatpush1.msra.mxu0 0.0
    %688 = vmatprep.subr.mxu0 0.0
    %689 = vmatpush1.msra.mxu0 0.0
    %690 = vmatprep.subr.mxu0 0.0
    %691 = vmatpush1.msra.mxu0 0.0
    %692 = vmatprep.subr.mxu0 0.0
    %693 = vmatpush1.msra.mxu0 0.0
    %694 = vmatprep.subr.mxu0 0.0
    %695 = vmatpush1.msra.mxu0 0.0
    %696 = vmatprep.subr.mxu0 0.0
    %697 = vmatpush1.msra.mxu0 0.0
    %698 = vmatprep.subr.mxu0 0.0
    %699 = vmatpush1.msra.mxu0 0.0
    %700 = vmatprep.subr.mxu0 0.0
    %701 = vmatpush1.msra.mxu0 0.0
    %702 = vmatprep.subr.mxu0 0.0
    %703 = vmatpush1.msra.mxu0 0.0
    %704 = vmatprep.subr.mxu0 0.0
    %705 = vmatpush1.msra.mxu0 0.0
    %706 = vmatprep.subr.mxu0 0.0
    %707 = vmatpush1.msra.mxu0 0.0
    %708 = vmatprep.subr.mxu0 0.0
    %709 = vmatpush1.msra.mxu0 0.0
    %710 = vmatprep.subr.mxu0 0.0
    %711 = vmatpush1.msra.mxu0 0.0
    %712 = vmatprep.subr.mxu0 0.0
    %713 = vmatpush1.msra.mxu0 0.0
    %714 = vmatprep.mubr.f32.mxu0 0.0
    %715 = vmatmul.mubr.f32.gmra.mrb[0].mxu0 %v648
    %v716 = vpop.f32.mrb[0].mxu0
    %v717 = vadd.f32 0.0, %v716
    %v718 = vpop.f32.mrb[0].mxu0
    %719 = vdwg.mxu0
    %v720 = vadd.f32 %v647, %v717
    %v721 = vxor.u32 %v720, 2147483648
    %v722 = vmul.f32 %v721, 1.442695
    %v723 = vpow.pop %v722
    %v724 = vadd.f32 %v723, 1.0
    %v725 = vrcp.pop %v724
    %v726 = vmul.f32 1.0, %v725
    %v727 = vadd.f32 %v717, %v512
    %729 = vrot.lane.b32.xlu0 %v727, 64
    %v730 = vpop.permute.xlu0 %729
    %v732 = vmul.f32 %v726, %v730
    %734 = vrot.lane.b32.xlu0 %v732, 64
    %v735 = vpop.permute.xlu0 %734
    %v737 = vadd.f32 %v647, %v735
    %v738 = vtanh.pop %v737
    %v739 = vsub.f32 1.0, %v726
    %741 = vrot.lane.b32.xlu0 %v738, 96
    %v742 = vpop.permute.xlu0 %741
    %v744 = vmul.f32 %v739, %v742
    %v745 = vmul.f32 %v726, %v639
    %v746 = vadd.f32 %v744, %v745
    %748 = vrot.lane.b32.xlu0 %v746, 96
    %v749 = vpop.permute.xlu0 %748
    %s751 = scalar_lea.vmem %s10, 16
    %752 = vst.msk [vmem:[%s751] sm:$0xff] %vm141, %v749
    %s753 = scalar_lea.vmem [#allocation2], 24
    %v754 = vld [vmem:[%s753] sm:$0xff]
    %v755 = vsel %vm141, %v749, 0
    %757 = vmatprep.subr.mxu0 0.0
    %758 = vmatpush1.msra.mxu0 %v275
    %759 = vmatprep.subr.mxu0 0.0
    %760 = vmatpush1.msra.mxu0 %v276
    %761 = vmatprep.subr.mxu0 0.0
    %762 = vmatpush1.msra.mxu0 %v277
    %763 = vmatprep.subr.mxu0 0.0
    %764 = vmatpush1.msra.mxu0 %v278
    %765 = vmatprep.subr.mxu0 0.0
    %766 = vmatpush1.msra.mxu0 0.0
    %767 = vmatprep.subr.mxu0 0.0
    %768 = vmatpush1.msra.mxu0 0.0
    %769 = vmatprep.subr.mxu0 0.0
    %770 = vmatpush1.msra.mxu0 0.0
    %771 = vmatprep.subr.mxu0 0.0
    %772 = vmatpush1.msra.mxu0 0.0
    %773 = vmatprep.subr.mxu0 0.0
    %774 = vmatpush1.msra.mxu0 0.0
    %775 = vmatprep.subr.mxu0 0.0
    %776 = vmatpush1.msra.mxu0 0.0
    %777 = vmatprep.subr.mxu0 0.0
    %778 = vmatpush1.msra.mxu0 0.0
    %779 = vmatprep.subr.mxu0 0.0
    %780 = vmatpush1.msra.mxu0 0.0
    %781 = vmatprep.subr.mxu0 0.0
    %782 = vmatpush1.msra.mxu0 0.0
    %783 = vmatprep.subr.mxu0 0.0
    %784 = vmatpush1.msra.mxu0 0.0
    %785 = vmatprep.subr.mxu0 0.0
    %786 = vmatpush1.msra.mxu0 0.0
    %787 = vmatprep.subr.mxu0 0.0
    %788 = vmatpush1.msra.mxu0 0.0
    %789 = vmatprep.subr.mxu0 0.0
    %790 = vmatpush1.msra.mxu0 0.0
    %791 = vmatprep.subr.mxu0 0.0
    %792 = vmatpush1.msra.mxu0 0.0
    %793 = vmatprep.subr.mxu0 0.0
    %794 = vmatpush1.msra.mxu0 0.0
    %795 = vmatprep.subr.mxu0 0.0
    %796 = vmatpush1.msra.mxu0 0.0
    %797 = vmatprep.subr.mxu0 0.0
    %798 = vmatpush1.msra.mxu0 0.0
    %799 = vmatprep.subr.mxu0 0.0
    %800 = vmatpush1.msra.mxu0 0.0
    %801 = vmatprep.subr.mxu0 0.0
    %802 = vmatpush1.msra.mxu0 0.0
    %803 = vmatprep.subr.mxu0 0.0
    %804 = vmatpush1.msra.mxu0 0.0
    %805 = vmatprep.subr.mxu0 0.0
    %806 = vmatpush1.msra.mxu0 0.0
    %807 = vmatprep.subr.mxu0 0.0
    %808 = vmatpush1.msra.mxu0 0.0
    %809 = vmatprep.subr.mxu0 0.0
    %810 = vmatpush1.msra.mxu0 0.0
    %811 = vmatprep.subr.mxu0 0.0
    %812 = vmatpush1.msra.mxu0 0.0
    %813 = vmatprep.subr.mxu0 0.0
    %814 = vmatpush1.msra.mxu0 0.0
    %815 = vmatprep.subr.mxu0 0.0
    %816 = vmatpush1.msra.mxu0 0.0
    %817 = vmatprep.subr.mxu0 0.0
    %818 = vmatpush1.msra.mxu0 0.0
    %819 = vmatprep.subr.mxu0 0.0
    %820 = vmatpush1.msra.mxu0 0.0
    %821 = vmatprep.mubr.f32.mxu0 0.0
    %822 = vmatmul.mubr.f32.gmra.mrb[0].mxu0 %v755
    %v823 = vpop.f32.mrb[0].mxu0
    %v824 = vadd.f32 0.0, %v823
    %v825 = vpop.f32.mrb[0].mxu0
    %826 = vdwg.mxu0
    %v827 = vadd.f32 %v754, %v824
    %v828 = vxor.u32 %v827, 2147483648
    %v829 = vmul.f32 %v828, 1.442695
    %v830 = vpow.pop %v829
    %v831 = vadd.f32 %v830, 1.0
    %v832 = vrcp.pop %v831
    %v833 = vmul.f32 1.0, %v832
    %v834 = vadd.f32 %v824, %v512
    %836 = vrot.lane.b32.xlu0 %v834, 64
    %v837 = vpop.permute.xlu0 %836
    %v839 = vmul.f32 %v833, %v837
    %841 = vrot.lane.b32.xlu0 %v839, 64
    %v842 = vpop.permute.xlu0 %841
    %v844 = vadd.f32 %v754, %v842
    %v845 = vtanh.pop %v844
    %v846 = vsub.f32 1.0, %v833
    %848 = vrot.lane.b32.xlu0 %v845, 96
    %v849 = vpop.permute.xlu0 %848
    %v851 = vmul.f32 %v846, %v849
    %v852 = vmul.f32 %v833, %v746
    %v853 = vadd.f32 %v851, %v852
    %855 = vrot.lane.b32.xlu0 %v853, 96
    %v856 = vpop.permute.xlu0 %855
    %s858 = scalar_lea.vmem %s10, 24
    %859 = vst.msk [vmem:[%s858] sm:$0xff] %vm141, %v856
    %s860 = scalar_lea.vmem [#allocation2], 32
    %v861 = vld [vmem:[%s860] sm:$0xff]
    %v862 = vsel %vm141, %v856, 0
    %864 = vmatprep.subr.mxu0 0.0
    %865 = vmatpush1.msra.mxu0 %v275
    %866 = vmatprep.subr.mxu0 0.0
    %867 = vmatpush1.msra.mxu0 %v276
    %868 = vmatprep.subr.mxu0 0.0
    %869 = vmatpush1.msra.mxu0 %v277
    %870 = vmatprep.subr.mxu0 0.0
    %871 = vmatpush1.msra.mxu0 %v278
    %872 = vmatprep.subr.mxu0 0.0
    %873 = vmatpush1.msra.mxu0 0.0
    %874 = vmatprep.subr.mxu0 0.0
    %875 = vmatpush1.msra.mxu0 0.0
    %876 = vmatprep.subr.mxu0 0.0
    %877 = vmatpush1.msra.mxu0 0.0
    %878 = vmatprep.subr.mxu0 0.0
    %879 = vmatpush1.msra.mxu0 0.0
    %880 = vmatprep.subr.mxu0 0.0
    %881 = vmatpush1.msra.mxu0 0.0
    %882 = vmatprep.subr.mxu0 0.0
    %883 = vmatpush1.msra.mxu0 0.0
    %884 = vmatprep.subr.mxu0 0.0
    %885 = vmatpush1.msra.mxu0 0.0
    %886 = vmatprep.subr.mxu0 0.0
    %887 = vmatpush1.msra.mxu0 0.0
    %888 = vmatprep.subr.mxu0 0.0
    %889 = vmatpush1.msra.mxu0 0.0
    %890 = vmatprep.subr.mxu0 0.0
    %891 = vmatpush1.msra.mxu0 0.0
    %892 = vmatprep.subr.mxu0 0.0
    %893 = vmatpush1.msra.mxu0 0.0
    %894 = vmatprep.subr.mxu0 0.0
    %895 = vmatpush1.msra.mxu0 0.0
    %896 = vmatprep.subr.mxu0 0.0
    %897 = vmatpush1.msra.mxu0 0.0
    %898 = vmatprep.subr.mxu0 0.0
    %899 = vmatpush1.msra.mxu0 0.0
    %900 = vmatprep.subr.mxu0 0.0
    %901 = vmatpush1.msra.mxu0 0.0
    %902 = vmatprep.subr.mxu0 0.0
    %903 = vmatpush1.msra.mxu0 0.0
    %904 = vmatprep.subr.mxu0 0.0
    %905 = vmatpush1.msra.mxu0 0.0
    %906 = vmatprep.subr.mxu0 0.0
    %907 = vmatpush1.msra.mxu0 0.0
    %908 = vmatprep.subr.mxu0 0.0
    %909 = vmatpush1.msra.mxu0 0.0
    %910 = vmatprep.subr.mxu0 0.0
    %911 = vmatpush1.msra.mxu0 0.0
    %912 = vmatprep.subr.mxu0 0.0
    %913 = vmatpush1.msra.mxu0 0.0
    %914 = vmatprep.subr.mxu0 0.0
    %915 = vmatpush1.msra.mxu0 0.0
    %916 = vmatprep.subr.mxu0 0.0
    %917 = vmatpush1.msra.mxu0 0.0
    %918 = vmatprep.subr.mxu0 0.0
    %919 = vmatpush1.msra.mxu0 0.0
    %920 = vmatprep.subr.mxu0 0.0
    %921 = vmatpush1.msra.mxu0 0.0
    %922 = vmatprep.subr.mxu0 0.0
    %923 = vmatpush1.msra.mxu0 0.0
    %924 = vmatprep.subr.mxu0 0.0
    %925 = vmatpush1.msra.mxu0 0.0
    %926 = vmatprep.subr.mxu0 0.0
    %927 = vmatpush1.msra.mxu0 0.0
    %928 = vmatprep.mubr.f32.mxu0 0.0
    %929 = vmatmul.mubr.f32.gmra.mrb[0].mxu0 %v862
    %v930 = vpop.f32.mrb[0].mxu0
    %v931 = vadd.f32 0.0, %v930
    %v932 = vpop.f32.mrb[0].mxu0
    %933 = vdwg.mxu0
    %v934 = vadd.f32 %v861, %v931
    %v935 = vxor.u32 %v934, 2147483648
    %v936 = vmul.f32 %v935, 1.442695
    %v937 = vpow.pop %v936
    %v938 = vadd.f32 %v937, 1.0
    %v939 = vrcp.pop %v938
    %v940 = vmul.f32 1.0, %v939
    %v941 = vadd.f32 %v931, %v512
    %943 = vrot.lane.b32.xlu0 %v941, 64
    %v944 = vpop.permute.xlu0 %943
    %v946 = vmul.f32 %v940, %v944
    %948 = vrot.lane.b32.xlu0 %v946, 64
    %v949 = vpop.permute.xlu0 %948
    %v951 = vadd.f32 %v861, %v949
    %v952 = vtanh.pop %v951
    %v953 = vsub.f32 1.0, %v940
    %955 = vrot.lane.b32.xlu0 %v952, 96
    %v956 = vpop.permute.xlu0 %955
    %v958 = vmul.f32 %v953, %v956
    %v959 = vmul.f32 %v940, %v853
    %v960 = vadd.f32 %v958, %v959
    %962 = vrot.lane.b32.xlu0 %v960, 96
    %v963 = vpop.permute.xlu0 %962
    %s965 = scalar_lea.vmem %s10, 32
    %966 = vst.msk [vmem:[%s965] sm:$0xff] %vm141, %v963
    %s967 = scalar_lea.vmem [#allocation2], 40
    %v968 = vld [vmem:[%s967] sm:$0xff]
    %v969 = vsel %vm141, %v963, 0
    %971 = vmatprep.subr.mxu0 0.0
    %972 = vmatpush1.msra.mxu0 %v275
    %973 = vmatprep.subr.mxu0 0.0
    %974 = vmatpush1.msra.mxu0 %v276
    %975 = vmatprep.subr.mxu0 0.0
    %976 = vmatpush1.msra.mxu0 %v277
    %977 = vmatprep.subr.mxu0 0.0
    %978 = vmatpush1.msra.mxu0 %v278
    %979 = vmatprep.subr.mxu0 0.0
    %980 = vmatpush1.msra.mxu0 0.0
    %981 = vmatprep.subr.mxu0 0.0
    %982 = vmatpush1.msra.mxu0 0.0
    %983 = vmatprep.subr.mxu0 0.0
    %984 = vmatpush1.msra.mxu0 0.0
    %985 = vmatprep.subr.mxu0 0.0
    %986 = vmatpush1.msra.mxu0 0.0
    %987 = vmatprep.subr.mxu0 0.0
    %988 = vmatpush1.msra.mxu0 0.0
    %989 = vmatprep.subr.mxu0 0.0
    %990 = vmatpush1.msra.mxu0 0.0
    %991 = vmatprep.subr.mxu0 0.0
    %992 = vmatpush1.msra.mxu0 0.0
    %993 = vmatprep.subr.mxu0 0.0
    %994 = vmatpush1.msra.mxu0 0.0
    %995 = vmatprep.subr.mxu0 0.0
    %996 = vmatpush1.msra.mxu0 0.0
    %997 = vmatprep.subr.mxu0 0.0
    %998 = vmatpush1.msra.mxu0 0.0
    %999 = vmatprep.subr.mxu0 0.0
    %1000 = vmatpush1.msra.mxu0 0.0
    %1001 = vmatprep.subr.mxu0 0.0
    %1002 = vmatpush1.msra.mxu0 0.0
    %1003 = vmatprep.subr.mxu0 0.0
    %1004 = vmatpush1.msra.mxu0 0.0
    %1005 = vmatprep.subr.mxu0 0.0
    %1006 = vmatpush1.msra.mxu0 0.0
    %1007 = vmatprep.subr.mxu0 0.0
    %1008 = vmatpush1.msra.mxu0 0.0
    %1009 = vmatprep.subr.mxu0 0.0
    %1010 = vmatpush1.msra.mxu0 0.0
    %1011 = vmatprep.subr.mxu0 0.0
    %1012 = vmatpush1.msra.mxu0 0.0
    %1013 = vmatprep.subr.mxu0 0.0
    %1014 = vmatpush1.msra.mxu0 0.0
    %1015 = vmatprep.subr.mxu0 0.0
    %1016 = vmatpush1.msra.mxu0 0.0
    %1017 = vmatprep.subr.mxu0 0.0
    %1018 = vmatpush1.msra.mxu0 0.0
    %1019 = vmatprep.subr.mxu0 0.0
    %1020 = vmatpush1.msra.mxu0 0.0
    %1021 = vmatprep.subr.mxu0 0.0
    %1022 = vmatpush1.msra.mxu0 0.0
    %1023 = vmatprep.subr.mxu0 0.0
    %1024 = vmatpush1.msra.mxu0 0.0
    %1025 = vmatprep.subr.mxu0 0.0
    %1026 = vmatpush1.msra.mxu0 0.0
    %1027 = vmatprep.subr.mxu0 0.0
    %1028 = vmatpush1.msra.mxu0 0.0
    %1029 = vmatprep.subr.mxu0 0.0
    %1030 = vmatpush1.msra.mxu0 0.0
    %1031 = vmatprep.subr.mxu0 0.0
    %1032 = vmatpush1.msra.mxu0 0.0
    %1033 = vmatprep.subr.mxu0 0.0
    %1034 = vmatpush1.msra.mxu0 0.0
    %1035 = vmatprep.mubr.f32.mxu0 0.0
    %1036 = vmatmul.mubr.f32.gmra.mrb[0].mxu0 %v969
    %v1037 = vpop.f32.mrb[0].mxu0
    %v1038 = vadd.f32 0.0, %v1037
    %v1039 = vpop.f32.mrb[0].mxu0
    %1040 = vdwg.mxu0
    %v1041 = vadd.f32 %v968, %v1038
    %v1042 = vxor.u32 %v1041, 2147483648
    %v1043 = vmul.f32 %v1042, 1.442695
    %v1044 = vpow.pop %v1043
    %v1045 = vadd.f32 %v1044, 1.0
    %v1046 = vrcp.pop %v1045
    %v1047 = vmul.f32 1.0, %v1046
    %v1048 = vadd.f32 %v1038, %v512
    %1050 = vrot.lane.b32.xlu0 %v1048, 64
    %v1051 = vpop.permute.xlu0 %1050
    %v1053 = vmul.f32 %v1047, %v1051
    %1055 = vrot.lane.b32.xlu0 %v1053, 64
    %v1056 = vpop.permute.xlu0 %1055
    %v1058 = vadd.f32 %v968, %v1056
    %v1059 = vtanh.pop %v1058
    %v1060 = vsub.f32 1.0, %v1047
    %1062 = vrot.lane.b32.xlu0 %v1059, 96
    %v1063 = vpop.permute.xlu0 %1062
    %v1065 = vmul.f32 %v1060, %v1063
    %v1066 = vmul.f32 %v1047, %v960
    %v1067 = vadd.f32 %v1065, %v1066
    %1069 = vrot.lane.b32.xlu0 %v1067, 96
    %v1070 = vpop.permute.xlu0 %1069
    %s1072 = scalar_lea.vmem %s10, 40
    %1073 = vst.msk [vmem:[%s1072] sm:$0xff] %vm141, %v1070
    %s1074 = scalar_lea.vmem [#allocation2], 48
    %v1075 = vld [vmem:[%s1074] sm:$0xff]
    %v1076 = vsel %vm141, %v1070, 0
    %1078 = vmatprep.subr.mxu0 0.0
    %1079 = vmatpush1.msra.mxu0 %v275
    %1080 = vmatprep.subr.mxu0 0.0
    %1081 = vmatpush1.msra.mxu0 %v276
    %1082 = vmatprep.subr.mxu0 0.0
    %1083 = vmatpush1.msra.mxu0 %v277
    %1084 = vmatprep.subr.mxu0 0.0
    %1085 = vmatpush1.msra.mxu0 %v278
    %1086 = vmatprep.subr.mxu0 0.0
    %1087 = vmatpush1.msra.mxu0 0.0
    %1088 = vmatprep.subr.mxu0 0.0
    %1089 = vmatpush1.msra.mxu0 0.0
    %1090 = vmatprep.subr.mxu0 0.0
    %1091 = vmatpush1.msra.mxu0 0.0
    %1092 = vmatprep.subr.mxu0 0.0
    %1093 = vmatpush1.msra.mxu0 0.0
    %1094 = vmatprep.subr.mxu0 0.0
    %1095 = vmatpush1.msra.mxu0 0.0
    %1096 = vmatprep.subr.mxu0 0.0
    %1097 = vmatpush1.msra.mxu0 0.0
    %1098 = vmatprep.subr.mxu0 0.0
    %1099 = vmatpush1.msra.mxu0 0.0
    %1100 = vmatprep.subr.mxu0 0.0
    %1101 = vmatpush1.msra.mxu0 0.0
    %1102 = vmatprep.subr.mxu0 0.0
    %1103 = vmatpush1.msra.mxu0 0.0
    %1104 = vmatprep.subr.mxu0 0.0
    %1105 = vmatpush1.msra.mxu0 0.0
    %1106 = vmatprep.subr.mxu0 0.0
    %1107 = vmatpush1.msra.mxu0 0.0
    %1108 = vmatprep.subr.mxu0 0.0
    %1109 = vmatpush1.msra.mxu0 0.0
    %1110 = vmatprep.subr.mxu0 0.0
    %1111 = vmatpush1.msra.mxu0 0.0
    %1112 = vmatprep.subr.mxu0 0.0
    %1113 = vmatpush1.msra.mxu0 0.0
    %1114 = vmatprep.subr.mxu0 0.0
    %1115 = vmatpush1.msra.mxu0 0.0
    %1116 = vmatprep.subr.mxu0 0.0
    %1117 = vmatpush1.msra.mxu0 0.0
    %1118 = vmatprep.subr.mxu0 0.0
    %1119 = vmatpush1.msra.mxu0 0.0
    %1120 = vmatprep.subr.mxu0 0.0
    %1121 = vmatpush1.msra.mxu0 0.0
    %1122 = vmatprep.subr.mxu0 0.0
    %1123 = vmatpush1.msra.mxu0 0.0
    %1124 = vmatprep.subr.mxu0 0.0
    %1125 = vmatpush1.msra.mxu0 0.0
    %1126 = vmatprep.subr.mxu0 0.0
    %1127 = vmatpush1.msra.mxu0 0.0
    %1128 = vmatprep.subr.mxu0 0.0
    %1129 = vmatpush1.msra.mxu0 0.0
    %1130 = vmatprep.subr.mxu0 0.0
    %1131 = vmatpush1.msra.mxu0 0.0
    %1132 = vmatprep.subr.mxu0 0.0
    %1133 = vmatpush1.msra.mxu0 0.0
    %1134 = vmatprep.subr.mxu0 0.0
    %1135 = vmatpush1.msra.mxu0 0.0
    %1136 = vmatprep.subr.mxu0 0.0
    %1137 = vmatpush1.msra.mxu0 0.0
    %1138 = vmatprep.subr.mxu0 0.0
    %1139 = vmatpush1.msra.mxu0 0.0
    %1140 = vmatprep.subr.mxu0 0.0
    %1141 = vmatpush1.msra.mxu0 0.0
    %1142 = vmatprep.mubr.f32.mxu0 0.0
    %1143 = vmatmul.mubr.f32.gmra.mrb[0].mxu0 %v1076
    %v1144 = vpop.f32.mrb[0].mxu0
    %v1145 = vadd.f32 0.0, %v1144
    %v1146 = vpop.f32.mrb[0].mxu0
    %1147 = vdwg.mxu0
    %v1148 = vadd.f32 %v1075, %v1145
    %v1149 = vxor.u32 %v1148, 2147483648
    %v1150 = vmul.f32 %v1149, 1.442695
    %v1151 = vpow.pop %v1150
    %v1152 = vadd.f32 %v1151, 1.0
    %v1153 = vrcp.pop %v1152
    %v1154 = vmul.f32 1.0, %v1153
    %v1155 = vadd.f32 %v1145, %v512
    %1157 = vrot.lane.b32.xlu0 %v1155, 64
    %v1158 = vpop.permute.xlu0 %1157
    %v1160 = vmul.f32 %v1154, %v1158
    %1162 = vrot.lane.b32.xlu0 %v1160, 64
    %v1163 = vpop.permute.xlu0 %1162
    %v1165 = vadd.f32 %v1075, %v1163
    %v1166 = vtanh.pop %v1165
    %v1167 = vsub.f32 1.0, %v1154
    %1169 = vrot.lane.b32.xlu0 %v1166, 96
    %v1170 = vpop.permute.xlu0 %1169
    %v1172 = vmul.f32 %v1167, %v1170
    %v1173 = vmul.f32 %v1154, %v1067
    %v1174 = vadd.f32 %v1172, %v1173
    %1176 = vrot.lane.b32.xlu0 %v1174, 96
    %v1177 = vpop.permute.xlu0 %1176
    %s1179 = scalar_lea.vmem %s10, 48
    %1180 = vst.msk [vmem:[%s1179] sm:$0xff] %vm141, %v1177
    %s1181 = scalar_lea.vmem [#allocation2], 56
    %v1182 = vld [vmem:[%s1181] sm:$0xff]
    %v1183 = vsel %vm141, %v1177, 0
    %1185 = vmatprep.subr.mxu0 0.0
    %1186 = vmatpush1.msra.mxu0 %v275
    %1187 = vmatprep.subr.mxu0 0.0
    %1188 = vmatpush1.msra.mxu0 %v276
    %1189 = vmatprep.subr.mxu0 0.0
    %1190 = vmatpush1.msra.mxu0 %v277
    %1191 = vmatprep.subr.mxu0 0.0
    %1192 = vmatpush1.msra.mxu0 %v278
    %1193 = vmatprep.subr.mxu0 0.0
    %1194 = vmatpush1.msra.mxu0 0.0
    %1195 = vmatprep.subr.mxu0 0.0
    %1196 = vmatpush1.msra.mxu0 0.0
    %1197 = vmatprep.subr.mxu0 0.0
    %1198 = vmatpush1.msra.mxu0 0.0
    %1199 = vmatprep.subr.mxu0 0.0
    %1200 = vmatpush1.msra.mxu0 0.0
    %1201 = vmatprep.subr.mxu0 0.0
    %1202 = vmatpush1.msra.mxu0 0.0
    %1203 = vmatprep.subr.mxu0 0.0
    %1204 = vmatpush1.msra.mxu0 0.0
    %1205 = vmatprep.subr.mxu0 0.0
    %1206 = vmatpush1.msra.mxu0 0.0
    %1207 = vmatprep.subr.mxu0 0.0
    %1208 = vmatpush1.msra.mxu0 0.0
    %1209 = vmatprep.subr.mxu0 0.0
    %1210 = vmatpush1.msra.mxu0 0.0
    %1211 = vmatprep.subr.mxu0 0.0
    %1212 = vmatpush1.msra.mxu0 0.0
    %1213 = vmatprep.subr.mxu0 0.0
    %1214 = vmatpush1.msra.mxu0 0.0
    %1215 = vmatprep.subr.mxu0 0.0
    %1216 = vmatpush1.msra.mxu0 0.0
    %1217 = vmatprep.subr.mxu0 0.0
    %1218 = vmatpush1.msra.mxu0 0.0
    %1219 = vmatprep.subr.mxu0 0.0
    %1220 = vmatpush1.msra.mxu0 0.0
    %1221 = vmatprep.subr.mxu0 0.0
    %1222 = vmatpush1.msra.mxu0 0.0
    %1223 = vmatprep.subr.mxu0 0.0
    %1224 = vmatpush1.msra.mxu0 0.0
    %1225 = vmatprep.subr.mxu0 0.0
    %1226 = vmatpush1.msra.mxu0 0.0
    %1227 = vmatprep.subr.mxu0 0.0
    %1228 = vmatpush1.msra.mxu0 0.0
    %1229 = vmatprep.subr.mxu0 0.0
    %1230 = vmatpush1.msra.mxu0 0.0
    %1231 = vmatprep.subr.mxu0 0.0
    %1232 = vmatpush1.msra.mxu0 0.0
    %1233 = vmatprep.subr.mxu0 0.0
    %1234 = vmatpush1.msra.mxu0 0.0
    %1235 = vmatprep.subr.mxu0 0.0
    %1236 = vmatpush1.msra.mxu0 0.0
    %1237 = vmatprep.subr.mxu0 0.0
    %1238 = vmatpush1.msra.mxu0 0.0
    %1239 = vmatprep.subr.mxu0 0.0
    %1240 = vmatpush1.msra.mxu0 0.0
    %1241 = vmatprep.subr.mxu0 0.0
    %1242 = vmatpush1.msra.mxu0 0.0
    %1243 = vmatprep.subr.mxu0 0.0
    %1244 = vmatpush1.msra.mxu0 0.0
    %1245 = vmatprep.subr.mxu0 0.0
    %1246 = vmatpush1.msra.mxu0 0.0
    %1247 = vmatprep.subr.mxu0 0.0
    %1248 = vmatpush1.msra.mxu0 0.0
    %1249 = vmatprep.mubr.f32.mxu0 0.0
    %1250 = vmatmul.mubr.f32.gmra.mrb[0].mxu0 %v1183
    %v1251 = vpop.f32.mrb[0].mxu0
    %v1252 = vadd.f32 0.0, %v1251
    %v1253 = vpop.f32.mrb[0].mxu0
    %1254 = vdwg.mxu0
    %v1255 = vadd.f32 %v1182, %v1252
    %v1256 = vxor.u32 %v1255, 2147483648
    %v1257 = vmul.f32 %v1256, 1.442695
    %v1258 = vpow.pop %v1257
    %v1259 = vadd.f32 %v1258, 1.0
    %v1260 = vrcp.pop %v1259
    %v1261 = vmul.f32 1.0, %v1260
    %v1262 = vadd.f32 %v1252, %v512
    %1264 = vrot.lane.b32.xlu0 %v1262, 64
    %v1265 = vpop.permute.xlu0 %1264
    %v1267 = vmul.f32 %v1261, %v1265
    %1269 = vrot.lane.b32.xlu0 %v1267, 64
    %v1270 = vpop.permute.xlu0 %1269
    %v1272 = vadd.f32 %v1182, %v1270
    %v1273 = vtanh.pop %v1272
    %v1274 = vsub.f32 1.0, %v1261
    %1276 = vrot.lane.b32.xlu0 %v1273, 96
    %v1277 = vpop.permute.xlu0 %1276
    %v1279 = vmul.f32 %v1274, %v1277
    %v1280 = vmul.f32 %v1261, %v1174
    %v1281 = vadd.f32 %v1279, %v1280
    %1283 = vrot.lane.b32.xlu0 %v1281, 96
    %v1284 = vpop.permute.xlu0 %1283
    %s1286 = scalar_lea.vmem %s10, 56
    %1287 = vst.msk [vmem:[%s1286] sm:$0xff] %vm141, %v1284
    %1288 = vst.msk [vmem:[#allocation9] sm:$0xff] %vm141, %v1284
    %v1289 = vld [vmem:[#allocation6] sm:$0xff]
    %v1290 = vld [vmem:[#allocation6 + $0x8] sm:$0xff]
    %v1291 = vld [vmem:[#allocation6 + $0x10] sm:$0xff]
    %v1292 = vld [vmem:[#allocation6 + $0x18] sm:$0xff]
    %v1293 = vld [vmem:[#allocation8] sm:$0xff]
    %v1294 = vld [vmem:[#allocation8 + $0x8] sm:$0xff]
    %v1295 = vld [vmem:[#allocation8 + $0x10] sm:$0xff]
    %v1296 = vld [vmem:[#allocation8 + $0x18] sm:$0xff]
    %v1297 = vld [vmem:[%s8] sm:$0x1]
    %v1298 = vld [vmem:[%s9] sm:$0x1]
    %v1299 = vld [vmem:[%s10] sm:$0xff]
    %v1300 = vld [vmem:[%s10 + $0x8] sm:$0xff]
    %v1301 = vld [vmem:[%s10 + $0x10] sm:$0xff]
    %v1302 = vld [vmem:[%s10 + $0x18] sm:$0xff]
    %v1303 = vld [vmem:[%s10 + $0x20] sm:$0xff]
    %v1304 = vld [vmem:[%s10 + $0x28] sm:$0xff]
    %v1305 = vld [vmem:[%s10 + $0x30] sm:$0xff]
    %v1306 = vld [vmem:[%s10 + $0x38] sm:$0xff]
    %v1308 = vlaneseq
    %v1309 = vshrl.u32 %v1308, 7
    %v1310 = vsub.s32 0, %v1309
    %v1311 = vrot.slane %v1297, %v1310
    %v1314 = vsel %vm141, %v1299, 0
    %v1317 = vsel %vm141, %v1300, 0
    %v1320 = vsel %vm141, %v1301, 0
    %v1323 = vsel %vm141, %v1302, 0
    %v1326 = vsel %vm141, %v1303, 0
    %v1329 = vsel %vm141, %v1304, 0
    %v1332 = vsel %vm141, %v1305, 0
    %v1335 = vsel %vm141, %v1306, 0
    %1337 = vmatprep.subr.mxu0 0.0
    %1338 = vmatpush1.msra.mxu0 %v1289
    %1339 = vmatprep.subr.mxu0 0.0
    %1340 = vmatpush1.msra.mxu0 %v1290
    %1341 = vmatprep.subr.mxu0 0.0
    %1342 = vmatpush1.msra.mxu0 %v1291
    %1343 = vmatprep.subr.mxu0 0.0
    %1344 = vmatpush1.msra.mxu0 %v1292
    %1345 = vmatprep.subr.mxu0 0.0
    %1346 = vmatpush1.msra.mxu0 0.0
    %1347 = vmatprep.subr.mxu0 0.0
    %1348 = vmatpush1.msra.mxu0 0.0
    %1349 = vmatprep.subr.mxu0 0.0
    %1350 = vmatpush1.msra.mxu0 0.0
    %1351 = vmatprep.subr.mxu0 0.0
    %1352 = vmatpush1.msra.mxu0 0.0
    %1353 = vmatprep.subr.mxu0 0.0
    %1354 = vmatpush1.msra.mxu0 0.0
    %1355 = vmatprep.subr.mxu0 0.0
    %1356 = vmatpush1.msra.mxu0 0.0
    %1357 = vmatprep.subr.mxu0 0.0
    %1358 = vmatpush1.msra.mxu0 0.0
    %1359 = vmatprep.subr.mxu0 0.0
    %1360 = vmatpush1.msra.mxu0 0.0
    %1361 = vmatprep.subr.mxu0 0.0
    %1362 = vmatpush1.msra.mxu0 0.0
    %1363 = vmatprep.subr.mxu0 0.0
    %1364 = vmatpush1.msra.mxu0 0.0
    %1365 = vmatprep.subr.mxu0 0.0
    %1366 = vmatpush1.msra.mxu0 0.0
    %1367 = vmatprep.subr.mxu0 0.0
    %1368 = vmatpush1.msra.mxu0 0.0
    %1369 = vmatprep.subr.mxu0 0.0
    %1370 = vmatpush1.msra.mxu0 0.0
    %1371 = vmatprep.subr.mxu0 0.0
    %1372 = vmatpush1.msra.mxu0 0.0
    %1373 = vmatprep.subr.mxu0 0.0
    %1374 = vmatpush1.msra.mxu0 0.0
    %1375 = vmatprep.subr.mxu0 0.0
    %1376 = vmatpush1.msra.mxu0 0.0
    %1377 = vmatprep.subr.mxu0 0.0
    %1378 = vmatpush1.msra.mxu0 0.0
    %1379 = vmatprep.subr.mxu0 0.0
    %1380 = vmatpush1.msra.mxu0 0.0
    %1381 = vmatprep.subr.mxu0 0.0
    %1382 = vmatpush1.msra.mxu0 0.0
    %1383 = vmatprep.subr.mxu0 0.0
    %1384 = vmatpush1.msra.mxu0 0.0
    %1385 = vmatprep.subr.mxu0 0.0
    %1386 = vmatpush1.msra.mxu0 0.0
    %1387 = vmatprep.subr.mxu0 0.0
    %1388 = vmatpush1.msra.mxu0 0.0
    %1389 = vmatprep.subr.mxu0 0.0
    %1390 = vmatpush1.msra.mxu0 0.0
    %1391 = vmatprep.subr.mxu0 0.0
    %1392 = vmatpush1.msra.mxu0 0.0
    %1393 = vmatprep.subr.mxu0 0.0
    %1394 = vmatpush1.msra.mxu0 0.0
    %1395 = vmatprep.subr.mxu0 0.0
    %1396 = vmatpush1.msra.mxu0 0.0
    %1397 = vmatprep.subr.mxu0 0.0
    %1398 = vmatpush1.msra.mxu0 0.0
    %1399 = vmatprep.subr.mxu0 0.0
    %1400 = vmatpush1.msra.mxu0 0.0
    %1401 = vmatprep.mubr.f32.mxu0 0.0
    %1402 = vmatmul.mubr.f32.gmra.mrb[0].mxu0 %v1314
    %v1403 = vpop.f32.mrb[0].mxu0
    %v1404 = vadd.f32 %v1311, %v1403
    %v1405 = vpop.f32.mrb[0].mxu0
    %1406 = vmatprep.mubr.f32.mxu0 0.0
    %1407 = vmatmul.mubr.f32.gmra.mrb[0].mxu0 %v1317
    %v1408 = vpop.f32.mrb[0].mxu0
    %v1409 = vadd.f32 %v1311, %v1408
    %v1410 = vpop.f32.mrb[0].mxu0
    %1411 = vmatprep.mubr.f32.mxu0 0.0
    %1412 = vmatmul.mubr.f32.gmra.mrb[0].mxu0 %v1320
    %v1413 = vpop.f32.mrb[0].mxu0
    %v1414 = vadd.f32 %v1311, %v1413
    %v1415 = vpop.f32.mrb[0].mxu0
    %1416 = vmatprep.mubr.f32.mxu0 0.0
    %1417 = vmatmul.mubr.f32.gmra.mrb[0].mxu0 %v1323
    %v1418 = vpop.f32.mrb[0].mxu0
    %v1419 = vadd.f32 %v1311, %v1418
    %v1420 = vpop.f32.mrb[0].mxu0
    %1421 = vmatprep.mubr.f32.mxu0 0.0
    %1422 = vmatmul.mubr.f32.gmra.mrb[0].mxu0 %v1326
    %v1423 = vpop.f32.mrb[0].mxu0
    %v1424 = vadd.f32 %v1311, %v1423
    %v1425 = vpop.f32.mrb[0].mxu0
    %1426 = vmatprep.mubr.f32.mxu0 0.0
    %1427 = vmatmul.mubr.f32.gmra.mrb[0].mxu0 %v1329
    %v1428 = vpop.f32.mrb[0].mxu0
    %v1429 = vadd.f32 %v1311, %v1428
    %v1430 = vpop.f32.mrb[0].mxu0
    %1431 = vmatprep.mubr.f32.mxu0 0.0
    %1432 = vmatmul.mubr.f32.gmra.mrb[0].mxu0 %v1332
    %v1433 = vpop.f32.mrb[0].mxu0
    %v1434 = vadd.f32 %v1311, %v1433
    %v1435 = vpop.f32.mrb[0].mxu0
    %1436 = vmatprep.mubr.f32.mxu0 0.0
    %1437 = vmatmul.mubr.f32.gmra.mrb[0].mxu0 %v1335
    %v1438 = vpop.f32.mrb[0].mxu0
    %v1439 = vadd.f32 %v1311, %v1438
    %v1440 = vpop.f32.mrb[0].mxu0
    %1441 = vdwg.mxu0
    %1442 = vst.msk [vmem:[#allocation2] sm:$0xff] %vm416, %v1404
    %1443 = vst.msk [vmem:[#allocation2 + $0x8] sm:$0xff] %vm416, %v1409
    %1444 = vst.msk [vmem:[#allocation2 + $0x10] sm:$0xff] %vm416, %v1414
    %1445 = vst.msk [vmem:[#allocation2 + $0x18] sm:$0xff] %vm416, %v1419
    %1446 = vst.msk [vmem:[#allocation2 + $0x20] sm:$0xff] %vm416, %v1424
    %1447 = vst.msk [vmem:[#allocation2 + $0x28] sm:$0xff] %vm416, %v1429
    %1448 = vst.msk [vmem:[#allocation2 + $0x30] sm:$0xff] %vm416, %v1434
    %1449 = vst.msk [vmem:[#allocation2 + $0x38] sm:$0xff] %vm416, %v1439
    %v1450 = vld [vmem:[#allocation2] sm:$0xff]
    %1451 = vmatprep.subr.mxu0 0.0
    %1452 = vmatpush1.msra.mxu0 %v1293
    %1453 = vmatprep.subr.mxu0 0.0
    %1454 = vmatpush1.msra.mxu0 %v1294
    %1455 = vmatprep.subr.mxu0 0.0
    %1456 = vmatpush1.msra.mxu0 %v1295
    %1457 = vmatprep.subr.mxu0 0.0
    %1458 = vmatpush1.msra.mxu0 %v1296
    %1459 = vmatprep.subr.mxu0 0.0
    %1460 = vmatpush1.msra.mxu0 0.0
    %1461 = vmatprep.subr.mxu0 0.0
    %1462 = vmatpush1.msra.mxu0 0.0
    %1463 = vmatprep.subr.mxu0 0.0
    %1464 = vmatpush1.msra.mxu0 0.0
    %1465 = vmatprep.subr.mxu0 0.0
    %1466 = vmatpush1.msra.mxu0 0.0
    %1467 = vmatprep.subr.mxu0 0.0
    %1468 = vmatpush1.msra.mxu0 0.0
    %1469 = vmatprep.subr.mxu0 0.0
    %1470 = vmatpush1.msra.mxu0 0.0
    %1471 = vmatprep.subr.mxu0 0.0
    %1472 = vmatpush1.msra.mxu0 0.0
    %1473 = vmatprep.subr.mxu0 0.0
    %1474 = vmatpush1.msra.mxu0 0.0
    %1475 = vmatprep.subr.mxu0 0.0
    %1476 = vmatpush1.msra.mxu0 0.0
    %1477 = vmatprep.subr.mxu0 0.0
    %1478 = vmatpush1.msra.mxu0 0.0
    %1479 = vmatprep.subr.mxu0 0.0
    %1480 = vmatpush1.msra.mxu0 0.0
    %1481 = vmatprep.subr.mxu0 0.0
    %1482 = vmatpush1.msra.mxu0 0.0
    %1483 = vmatprep.subr.mxu0 0.0
    %1484 = vmatpush1.msra.mxu0 0.0
    %1485 = vmatprep.subr.mxu0 0.0
    %1486 = vmatpush1.msra.mxu0 0.0
    %1487 = vmatprep.subr.mxu0 0.0
    %1488 = vmatpush1.msra.mxu0 0.0
    %1489 = vmatprep.subr.mxu0 0.0
    %1490 = vmatpush1.msra.mxu0 0.0
    %1491 = vmatprep.subr.mxu0 0.0
    %1492 = vmatpush1.msra.mxu0 0.0
    %1493 = vmatprep.subr.mxu0 0.0
    %1494 = vmatpush1.msra.mxu0 0.0
    %1495 = vmatprep.subr.mxu0 0.0
    %1496 = vmatpush1.msra.mxu0 0.0
    %1497 = vmatprep.subr.mxu0 0.0
    %1498 = vmatpush1.msra.mxu0 0.0
    %1499 = vmatprep.subr.mxu0 0.0
    %1500 = vmatpush1.msra.mxu0 0.0
    %1501 = vmatprep.subr.mxu0 0.0
    %1502 = vmatpush1.msra.mxu0 0.0
    %1503 = vmatprep.subr.mxu0 0.0
    %1504 = vmatpush1.msra.mxu0 0.0
    %1505 = vmatprep.subr.mxu0 0.0
    %1506 = vmatpush1.msra.mxu0 0.0
    %1507 = vmatprep.subr.mxu0 0.0
    %1508 = vmatpush1.msra.mxu0 0.0
    %1509 = vmatprep.subr.mxu0 0.0
    %1510 = vmatpush1.msra.mxu0 0.0
    %1511 = vmatprep.subr.mxu0 0.0
    %1512 = vmatpush1.msra.mxu0 0.0
    %1513 = vmatprep.subr.mxu0 0.0
    %1514 = vmatpush1.msra.mxu0 0.0
    %1515 = vmatprep.mubr.f32.mxu0 0.0
    %1516 = vmatmul.mubr.f32.gmra.mrb[0].mxu0 %v427
    %v1517 = vpop.f32.mrb[0].mxu0
    %v1518 = vadd.f32 0.0, %v1517
    %v1519 = vpop.f32.mrb[0].mxu0
    %1520 = vdwg.mxu0
    %v1521 = vadd.f32 %v1450, %v1518
    %v1522 = vxor.u32 %v1521, 2147483648
    %v1523 = vmul.f32 %v1522, 1.442695
    %v1524 = vpow.pop %v1523
    %v1525 = vadd.f32 %v1524, 1.0
    %v1526 = vrcp.pop %v1525
    %v1527 = vmul.f32 1.0, %v1526
    %v1529 = vlaneseq
    %v1530 = vshrl.u32 %v1529, 7
    %v1531 = vsub.s32 0, %v1530
    %v1532 = vrot.slane %v1298, %v1531
    %1533 = vrot.lane.b32.xlu0 %v1532, 64
    %v1534 = vpop.permute.xlu0 %1533
    %v1536 = vadd.f32 %v1518, %v1534
    %1538 = vrot.lane.b32.xlu0 %v1536, 64
    %v1539 = vpop.permute.xlu0 %1538
    %v1541 = vmul.f32 %v1527, %v1539
    %1543 = vrot.lane.b32.xlu0 %v1541, 64
    %v1544 = vpop.permute.xlu0 %1543
    %v1546 = vadd.f32 %v1450, %v1544
    %v1547 = vtanh.pop %v1546
    %v1548 = vsub.f32 1.0, %v1527
    %1550 = vrot.lane.b32.xlu0 %v1547, 96
    %v1551 = vpop.permute.xlu0 %1550
    %v1553 = vmul.f32 %v1548, %v1551
    %v1554 = vmul.f32 %v1527, 0.0
    %v1555 = vadd.f32 %v1553, %v1554
    %1557 = vrot.lane.b32.xlu0 %v1555, 96
    %v1558 = vpop.permute.xlu0 %1557
    %1560 = vst.msk [vmem:[%s10] sm:$0xff] %vm141, %v1558
    %v1561 = vld [vmem:[%s539] sm:$0xff]
    %v1562 = vsel %vm141, %v1558, 0
    %1564 = vmatprep.subr.mxu0 0.0
    %1565 = vmatpush1.msra.mxu0 %v1293
    %1566 = vmatprep.subr.mxu0 0.0
    %1567 = vmatpush1.msra.mxu0 %v1294
    %1568 = vmatprep.subr.mxu0 0.0
    %1569 = vmatpush1.msra.mxu0 %v1295
    %1570 = vmatprep.subr.mxu0 0.0
    %1571 = vmatpush1.msra.mxu0 %v1296
    %1572 = vmatprep.subr.mxu0 0.0
    %1573 = vmatpush1.msra.mxu0 0.0
    %1574 = vmatprep.subr.mxu0 0.0
    %1575 = vmatpush1.msra.mxu0 0.0
    %1576 = vmatprep.subr.mxu0 0.0
    %1577 = vmatpush1.msra.mxu0 0.0
    %1578 = vmatprep.subr.mxu0 0.0
    %1579 = vmatpush1.msra.mxu0 0.0
    %1580 = vmatprep.subr.mxu0 0.0
    %1581 = vmatpush1.msra.mxu0 0.0
    %1582 = vmatprep.subr.mxu0 0.0
    %1583 = vmatpush1.msra.mxu0 0.0
    %1584 = vmatprep.subr.mxu0 0.0
    %1585 = vmatpush1.msra.mxu0 0.0
    %1586 = vmatprep.subr.mxu0 0.0
    %1587 = vmatpush1.msra.mxu0 0.0
    %1588 = vmatprep.subr.mxu0 0.0
    %1589 = vmatpush1.msra.mxu0 0.0
    %1590 = vmatprep.subr.mxu0 0.0
    %1591 = vmatpush1.msra.mxu0 0.0
    %1592 = vmatprep.subr.mxu0 0.0
    %1593 = vmatpush1.msra.mxu0 0.0
    %1594 = vmatprep.subr.mxu0 0.0
    %1595 = vmatpush1.msra.mxu0 0.0
    %1596 = vmatprep.subr.mxu0 0.0
    %1597 = vmatpush1.msra.mxu0 0.0
    %1598 = vmatprep.subr.mxu0 0.0
    %1599 = vmatpush1.msra.mxu0 0.0
    %1600 = vmatprep.subr.mxu0 0.0
    %1601 = vmatpush1.msra.mxu0 0.0
    %1602 = vmatprep.subr.mxu0 0.0
    %1603 = vmatpush1.msra.mxu0 0.0
    %1604 = vmatprep.subr.mxu0 0.0
    %1605 = vmatpush1.msra.mxu0 0.0
    %1606 = vmatprep.subr.mxu0 0.0
    %1607 = vmatpush1.msra.mxu0 0.0
    %1608 = vmatprep.subr.mxu0 0.0
    %1609 = vmatpush1.msra.mxu0 0.0
    %1610 = vmatprep.subr.mxu0 0.0
    %1611 = vmatpush1.msra.mxu0 0.0
    %1612 = vmatprep.subr.mxu0 0.0
    %1613 = vmatpush1.msra.mxu0 0.0
    %1614 = vmatprep.subr.mxu0 0.0
    %1615 = vmatpush1.msra.mxu0 0.0
    %1616 = vmatprep.subr.mxu0 0.0
    %1617 = vmatpush1.msra.mxu0 0.0
    %1618 = vmatprep.subr.mxu0 0.0
    %1619 = vmatpush1.msra.mxu0 0.0
    %1620 = vmatprep.subr.mxu0 0.0
    %1621 = vmatpush1.msra.mxu0 0.0
    %1622 = vmatprep.subr.mxu0 0.0
    %1623 = vmatpush1.msra.mxu0 0.0
    %1624 = vmatprep.subr.mxu0 0.0
    %1625 = vmatpush1.msra.mxu0 0.0
    %1626 = vmatprep.subr.mxu0 0.0
    %1627 = vmatpush1.msra.mxu0 0.0
    %1628 = vmatprep.mubr.f32.mxu0 0.0
    %1629 = vmatmul.mubr.f32.gmra.mrb[0].mxu0 %v1562
    %v1630 = vpop.f32.mrb[0].mxu0
    %v1631 = vadd.f32 0.0, %v1630
    %v1632 = vpop.f32.mrb[0].mxu0
    %1633 = vdwg.mxu0
    %v1634 = vadd.f32 %v1561, %v1631
    %v1635 = vxor.u32 %v1634, 2147483648
    %v1636 = vmul.f32 %v1635, 1.442695
    %v1637 = vpow.pop %v1636
    %v1638 = vadd.f32 %v1637, 1.0
    %v1639 = vrcp.pop %v1638
    %v1640 = vmul.f32 1.0, %v1639
    %v1641 = vadd.f32 %v1631, %v1534
    %1643 = vrot.lane.b32.xlu0 %v1641, 64
    %v1644 = vpop.permute.xlu0 %1643
    %v1646 = vmul.f32 %v1640, %v1644
    %1648 = vrot.lane.b32.xlu0 %v1646, 64
    %v1649 = vpop.permute.xlu0 %1648
    %v1651 = vadd.f32 %v1561, %v1649
    %v1652 = vtanh.pop %v1651
    %v1653 = vsub.f32 1.0, %v1640
    %1655 = vrot.lane.b32.xlu0 %v1652, 96
    %v1656 = vpop.permute.xlu0 %1655
    %v1658 = vmul.f32 %v1653, %v1656
    %v1659 = vmul.f32 %v1640, %v1555
    %v1660 = vadd.f32 %v1658, %v1659
    %1662 = vrot.lane.b32.xlu0 %v1660, 96
    %v1663 = vpop.permute.xlu0 %1662
    %1665 = vst.msk [vmem:[%s644] sm:$0xff] %vm141, %v1663
    %v1666 = vld [vmem:[%s646] sm:$0xff]
    %v1667 = vsel %vm141, %v1663, 0
    %1669 = vmatprep.subr.mxu0 0.0
    %1670 = vmatpush1.msra.mxu0 %v1293
    %1671 = vmatprep.subr.mxu0 0.0
    %1672 = vmatpush1.msra.mxu0 %v1294
    %1673 = vmatprep.subr.mxu0 0.0
    %1674 = vmatpush1.msra.mxu0 %v1295
    %1675 = vmatprep.subr.mxu0 0.0
    %1676 = vmatpush1.msra.mxu0 %v1296
    %1677 = vmatprep.subr.mxu0 0.0
    %1678 = vmatpush1.msra.mxu0 0.0
    %1679 = vmatprep.subr.mxu0 0.0
    %1680 = vmatpush1.msra.mxu0 0.0
    %1681 = vmatprep.subr.mxu0 0.0
    %1682 = vmatpush1.msra.mxu0 0.0
    %1683 = vmatprep.subr.mxu0 0.0
    %1684 = vmatpush1.msra.mxu0 0.0
    %1685 = vmatprep.subr.mxu0 0.0
    %1686 = vmatpush1.msra.mxu0 0.0
    %1687 = vmatprep.subr.mxu0 0.0
    %1688 = vmatpush1.msra.mxu0 0.0
    %1689 = vmatprep.subr.mxu0 0.0
    %1690 = vmatpush1.msra.mxu0 0.0
    %1691 = vmatprep.subr.mxu0 0.0
    %1692 = vmatpush1.msra.mxu0 0.0
    %1693 = vmatprep.subr.mxu0 0.0
    %1694 = vmatpush1.msra.mxu0 0.0
    %1695 = vmatprep.subr.mxu0 0.0
    %1696 = vmatpush1.msra.mxu0 0.0
    %1697 = vmatprep.subr.mxu0 0.0
    %1698 = vmatpush1.msra.mxu0 0.0
    %1699 = vmatprep.subr.mxu0 0.0
    %1700 = vmatpush1.msra.mxu0 0.0
    %1701 = vmatprep.subr.mxu0 0.0
    %1702 = vmatpush1.msra.mxu0 0.0
    %1703 = vmatprep.subr.mxu0 0.0
    %1704 = vmatpush1.msra.mxu0 0.0
    %1705 = vmatprep.subr.mxu0 0.0
    %1706 = vmatpush1.msra.mxu0 0.0
    %1707 = vmatprep.subr.mxu0 0.0
    %1708 = vmatpush1.msra.mxu0 0.0
    %1709 = vmatprep.subr.mxu0 0.0
    %1710 = vmatpush1.msra.mxu0 0.0
    %1711 = vmatprep.subr.mxu0 0.0
    %1712 = vmatpush1.msra.mxu0 0.0
    %1713 = vmatprep.subr.mxu0 0.0
    %1714 = vmatpush1.msra.mxu0 0.0
    %1715 = vmatprep.subr.mxu0 0.0
    %1716 = vmatpush1.msra.mxu0 0.0
    %1717 = vmatprep.subr.mxu0 0.0
    %1718 = vmatpush1.msra.mxu0 0.0
    %1719 = vmatprep.subr.mxu0 0.0
    %1720 = vmatpush1.msra.mxu0 0.0
    %1721 = vmatprep.subr.mxu0 0.0
    %1722 = vmatpush1.msra.mxu0 0.0
    %1723 = vmatprep.subr.mxu0 0.0
    %1724 = vmatpush1.msra.mxu0 0.0
    %1725 = vmatprep.subr.mxu0 0.0
    %1726 = vmatpush1.msra.mxu0 0.0
    %1727 = vmatprep.subr.mxu0 0.0
    %1728 = vmatpush1.msra.mxu0 0.0
    %1729 = vmatprep.subr.mxu0 0.0
    %1730 = vmatpush1.msra.mxu0 0.0
    %1731 = vmatprep.subr.mxu0 0.0
    %1732 = vmatpush1.msra.mxu0 0.0
    %1733 = vmatprep.mubr.f32.mxu0 0.0
    %1734 = vmatmul.mubr.f32.gmra.mrb[0].mxu0 %v1667
    %v1735 = vpop.f32.mrb[0].mxu0
    %v1736 = vadd.f32 0.0, %v1735
    %v1737 = vpop.f32.mrb[0].mxu0
    %1738 = vdwg.mxu0
    %v1739 = vadd.f32 %v1666, %v1736
    %v1740 = vxor.u32 %v1739, 2147483648
    %v1741 = vmul.f32 %v1740, 1.442695
    %v1742 = vpow.pop %v1741
    %v1743 = vadd.f32 %v1742, 1.0
    %v1744 = vrcp.pop %v1743
    %v1745 = vmul.f32 1.0, %v1744
    %v1746 = vadd.f32 %v1736, %v1534
    %1748 = vrot.lane.b32.xlu0 %v1746, 64
    %v1749 = vpop.permute.xlu0 %1748
    %v1751 = vmul.f32 %v1745, %v1749
    %1753 = vrot.lane.b32.xlu0 %v1751, 64
    %v1754 = vpop.permute.xlu0 %1753
    %v1756 = vadd.f32 %v1666, %v1754
    %v1757 = vtanh.pop %v1756
    %v1758 = vsub.f32 1.0, %v1745
    %1760 = vrot.lane.b32.xlu0 %v1757, 96
    %v1761 = vpop.permute.xlu0 %1760
    %v1763 = vmul.f32 %v1758, %v1761
    %v1764 = vmul.f32 %v1745, %v1660
    %v1765 = vadd.f32 %v1763, %v1764
    %1767 = vrot.lane.b32.xlu0 %v1765, 96
    %v1768 = vpop.permute.xlu0 %1767
    %1770 = vst.msk [vmem:[%s751] sm:$0xff] %vm141, %v1768
    %v1771 = vld [vmem:[%s753] sm:$0xff]
    %v1772 = vsel %vm141, %v1768, 0
    %1774 = vmatprep.subr.mxu0 0.0
    %1775 = vmatpush1.msra.mxu0 %v1293
    %1776 = vmatprep.subr.mxu0 0.0
    %1777 = vmatpush1.msra.mxu0 %v1294
    %1778 = vmatprep.subr.mxu0 0.0
    %1779 = vmatpush1.msra.mxu0 %v1295
    %1780 = vmatprep.subr.mxu0 0.0
    %1781 = vmatpush1.msra.mxu0 %v1296
    %1782 = vmatprep.subr.mxu0 0.0
    %1783 = vmatpush1.msra.mxu0 0.0
    %1784 = vmatprep.subr.mxu0 0.0
    %1785 = vmatpush1.msra.mxu0 0.0
    %1786 = vmatprep.subr.mxu0 0.0
    %1787 = vmatpush1.msra.mxu0 0.0
    %1788 = vmatprep.subr.mxu0 0.0
    %1789 = vmatpush1.msra.mxu0 0.0
    %1790 = vmatprep.subr.mxu0 0.0
    %1791 = vmatpush1.msra.mxu0 0.0
    %1792 = vmatprep.subr.mxu0 0.0
    %1793 = vmatpush1.msra.mxu0 0.0
    %1794 = vmatprep.subr.mxu0 0.0
    %1795 = vmatpush1.msra.mxu0 0.0
    %1796 = vmatprep.subr.mxu0 0.0
    %1797 = vmatpush1.msra.mxu0 0.0
    %1798 = vmatprep.subr.mxu0 0.0
    %1799 = vmatpush1.msra.mxu0 0.0
    %1800 = vmatprep.subr.mxu0 0.0
    %1801 = vmatpush1.msra.mxu0 0.0
    %1802 = vmatprep.subr.mxu0 0.0
    %1803 = vmatpush1.msra.mxu0 0.0
    %1804 = vmatprep.subr.mxu0 0.0
    %1805 = vmatpush1.msra.mxu0 0.0
    %1806 = vmatprep.subr.mxu0 0.0
    %1807 = vmatpush1.msra.mxu0 0.0
    %1808 = vmatprep.subr.mxu0 0.0
    %1809 = vmatpush1.msra.mxu0 0.0
    %1810 = vmatprep.subr.mxu0 0.0
    %1811 = vmatpush1.msra.mxu0 0.0
    %1812 = vmatprep.subr.mxu0 0.0
    %1813 = vmatpush1.msra.mxu0 0.0
    %1814 = vmatprep.subr.mxu0 0.0
    %1815 = vmatpush1.msra.mxu0 0.0
    %1816 = vmatprep.subr.mxu0 0.0
    %1817 = vmatpush1.msra.mxu0 0.0
    %1818 = vmatprep.subr.mxu0 0.0
    %1819 = vmatpush1.msra.mxu0 0.0
    %1820 = vmatprep.subr.mxu0 0.0
    %1821 = vmatpush1.msra.mxu0 0.0
    %1822 = vmatprep.subr.mxu0 0.0
    %1823 = vmatpush1.msra.mxu0 0.0
    %1824 = vmatprep.subr.mxu0 0.0
    %1825 = vmatpush1.msra.mxu0 0.0
    %1826 = vmatprep.subr.mxu0 0.0
    %1827 = vmatpush1.msra.mxu0 0.0
    %1828 = vmatprep.subr.mxu0 0.0
    %1829 = vmatpush1.msra.mxu0 0.0
    %1830 = vmatprep.subr.mxu0 0.0
    %1831 = vmatpush1.msra.mxu0 0.0
    %1832 = vmatprep.subr.mxu0 0.0
    %1833 = vmatpush1.msra.mxu0 0.0
    %1834 = vmatprep.subr.mxu0 0.0
    %1835 = vmatpush1.msra.mxu0 0.0
    %1836 = vmatprep.subr.mxu0 0.0
    %1837 = vmatpush1.msra.mxu0 0.0
    %1838 = vmatprep.mubr.f32.mxu0 0.0
    %1839 = vmatmul.mubr.f32.gmra.mrb[0].mxu0 %v1772
    %v1840 = vpop.f32.mrb[0].mxu0
    %v1841 = vadd.f32 0.0, %v1840
    %v1842 = vpop.f32.mrb[0].mxu0
    %1843 = vdwg.mxu0
    %v1844 = vadd.f32 %v1771, %v1841
    %v1845 = vxor.u32 %v1844, 2147483648
    %v1846 = vmul.f32 %v1845, 1.442695
    %v1847 = vpow.pop %v1846
    %v1848 = vadd.f32 %v1847, 1.0
    %v1849 = vrcp.pop %v1848
    %v1850 = vmul.f32 1.0, %v1849
    %v1851 = vadd.f32 %v1841, %v1534
    %1853 = vrot.lane.b32.xlu0 %v1851, 64
    %v1854 = vpop.permute.xlu0 %1853
    %v1856 = vmul.f32 %v1850, %v1854
    %1858 = vrot.lane.b32.xlu0 %v1856, 64
    %v1859 = vpop.permute.xlu0 %1858
    %v1861 = vadd.f32 %v1771, %v1859
    %v1862 = vtanh.pop %v1861
    %v1863 = vsub.f32 1.0, %v1850
    %1865 = vrot.lane.b32.xlu0 %v1862, 96
    %v1866 = vpop.permute.xlu0 %1865
    %v1868 = vmul.f32 %v1863, %v1866
    %v1869 = vmul.f32 %v1850, %v1765
    %v1870 = vadd.f32 %v1868, %v1869
    %1872 = vrot.lane.b32.xlu0 %v1870, 96
    %v1873 = vpop.permute.xlu0 %1872
    %1875 = vst.msk [vmem:[%s858] sm:$0xff] %vm141, %v1873
    %v1876 = vld [vmem:[%s860] sm:$0xff]
    %v1877 = vsel %vm141, %v1873, 0
    %1879 = vmatprep.subr.mxu0 0.0
    %1880 = vmatpush1.msra.mxu0 %v1293
    %1881 = vmatprep.subr.mxu0 0.0
    %1882 = vmatpush1.msra.mxu0 %v1294
    %1883 = vmatprep.subr.mxu0 0.0
    %1884 = vmatpush1.msra.mxu0 %v1295
    %1885 = vmatprep.subr.mxu0 0.0
    %1886 = vmatpush1.msra.mxu0 %v1296
    %1887 = vmatprep.subr.mxu0 0.0
    %1888 = vmatpush1.msra.mxu0 0.0
    %1889 = vmatprep.subr.mxu0 0.0
    %1890 = vmatpush1.msra.mxu0 0.0
    %1891 = vmatprep.subr.mxu0 0.0
    %1892 = vmatpush1.msra.mxu0 0.0
    %1893 = vmatprep.subr.mxu0 0.0
    %1894 = vmatpush1.msra.mxu0 0.0
    %1895 = vmatprep.subr.mxu0 0.0
    %1896 = vmatpush1.msra.mxu0 0.0
    %1897 = vmatprep.subr.mxu0 0.0
    %1898 = vmatpush1.msra.mxu0 0.0
    %1899 = vmatprep.subr.mxu0 0.0
    %1900 = vmatpush1.msra.mxu0 0.0
    %1901 = vmatprep.subr.mxu0 0.0
    %1902 = vmatpush1.msra.mxu0 0.0
    %1903 = vmatprep.subr.mxu0 0.0
    %1904 = vmatpush1.msra.mxu0 0.0
    %1905 = vmatprep.subr.mxu0 0.0
    %1906 = vmatpush1.msra.mxu0 0.0
    %1907 = vmatprep.subr.mxu0 0.0
    %1908 = vmatpush1.msra.mxu0 0.0
    %1909 = vmatprep.subr.mxu0 0.0
    %1910 = vmatpush1.msra.mxu0 0.0
    %1911 = vmatprep.subr.mxu0 0.0
    %1912 = vmatpush1.msra.mxu0 0.0
    %1913 = vmatprep.subr.mxu0 0.0
    %1914 = vmatpush1.msra.mxu0 0.0
    %1915 = vmatprep.subr.mxu0 0.0
    %1916 = vmatpush1.msra.mxu0 0.0
    %1917 = vmatprep.subr.mxu0 0.0
    %1918 = vmatpush1.msra.mxu0 0.0
    %1919 = vmatprep.subr.mxu0 0.0
    %1920 = vmatpush1.msra.mxu0 0.0
    %1921 = vmatprep.subr.mxu0 0.0
    %1922 = vmatpush1.msra.mxu0 0.0
    %1923 = vmatprep.subr.mxu0 0.0
    %1924 = vmatpush1.msra.mxu0 0.0
    %1925 = vmatprep.subr.mxu0 0.0
    %1926 = vmatpush1.msra.mxu0 0.0
    %1927 = vmatprep.subr.mxu0 0.0
    %1928 = vmatpush1.msra.mxu0 0.0
    %1929 = vmatprep.subr.mxu0 0.0
    %1930 = vmatpush1.msra.mxu0 0.0
    %1931 = vmatprep.subr.mxu0 0.0
    %1932 = vmatpush1.msra.mxu0 0.0
    %1933 = vmatprep.subr.mxu0 0.0
    %1934 = vmatpush1.msra.mxu0 0.0
    %1935 = vmatprep.subr.mxu0 0.0
    %1936 = vmatpush1.msra.mxu0 0.0
    %1937 = vmatprep.subr.mxu0 0.0
    %1938 = vmatpush1.msra.mxu0 0.0
    %1939 = vmatprep.subr.mxu0 0.0
    %1940 = vmatpush1.msra.mxu0 0.0
    %1941 = vmatprep.subr.mxu0 0.0
    %1942 = vmatpush1.msra.mxu0 0.0
    %1943 = vmatprep.mubr.f32.mxu0 0.0
    %1944 = vmatmul.mubr.f32.gmra.mrb[0].mxu0 %v1877
    %v1945 = vpop.f32.mrb[0].mxu0
    %v1946 = vadd.f32 0.0, %v1945
    %v1947 = vpop.f32.mrb[0].mxu0
    %1948 = vdwg.mxu0
    %v1949 = vadd.f32 %v1876, %v1946
    %v1950 = vxor.u32 %v1949, 2147483648
    %v1951 = vmul.f32 %v1950, 1.442695
    %v1952 = vpow.pop %v1951
    %v1953 = vadd.f32 %v1952, 1.0
    %v1954 = vrcp.pop %v1953
    %v1955 = vmul.f32 1.0, %v1954
    %v1956 = vadd.f32 %v1946, %v1534
    %1958 = vrot.lane.b32.xlu0 %v1956, 64
    %v1959 = vpop.permute.xlu0 %1958
    %v1961 = vmul.f32 %v1955, %v1959
    %1963 = vrot.lane.b32.xlu0 %v1961, 64
    %v1964 = vpop.permute.xlu0 %1963
    %v1966 = vadd.f32 %v1876, %v1964
    %v1967 = vtanh.pop %v1966
    %v1968 = vsub.f32 1.0, %v1955
    %1970 = vrot.lane.b32.xlu0 %v1967, 96
    %v1971 = vpop.permute.xlu0 %1970
    %v1973 = vmul.f32 %v1968, %v1971
    %v1974 = vmul.f32 %v1955, %v1870
    %v1975 = vadd.f32 %v1973, %v1974
    %1977 = vrot.lane.b32.xlu0 %v1975, 96
    %v1978 = vpop.permute.xlu0 %1977
    %1980 = vst.msk [vmem:[%s965] sm:$0xff] %vm141, %v1978
    %v1981 = vld [vmem:[%s967] sm:$0xff]
    %v1982 = vsel %vm141, %v1978, 0
    %1984 = vmatprep.subr.mxu0 0.0
    %1985 = vmatpush1.msra.mxu0 %v1293
    %1986 = vmatprep.subr.mxu0 0.0
    %1987 = vmatpush1.msra.mxu0 %v1294
    %1988 = vmatprep.subr.mxu0 0.0
    %1989 = vmatpush1.msra.mxu0 %v1295
    %1990 = vmatprep.subr.mxu0 0.0
    %1991 = vmatpush1.msra.mxu0 %v1296
    %1992 = vmatprep.subr.mxu0 0.0
    %1993 = vmatpush1.msra.mxu0 0.0
    %1994 = vmatprep.subr.mxu0 0.0
    %1995 = vmatpush1.msra.mxu0 0.0
    %1996 = vmatprep.subr.mxu0 0.0
    %1997 = vmatpush1.msra.mxu0 0.0
    %1998 = vmatprep.subr.mxu0 0.0
    %1999 = vmatpush1.msra.mxu0 0.0
    %2000 = vmatprep.subr.mxu0 0.0
    %2001 = vmatpush1.msra.mxu0 0.0
    %2002 = vmatprep.subr.mxu0 0.0
    %2003 = vmatpush1.msra.mxu0 0.0
    %2004 = vmatprep.subr.mxu0 0.0
    %2005 = vmatpush1.msra.mxu0 0.0
    %2006 = vmatprep.subr.mxu0 0.0
    %2007 = vmatpush1.msra.mxu0 0.0
    %2008 = vmatprep.subr.mxu0 0.0
    %2009 = vmatpush1.msra.mxu0 0.0
    %2010 = vmatprep.subr.mxu0 0.0
    %2011 = vmatpush1.msra.mxu0 0.0
    %2012 = vmatprep.subr.mxu0 0.0
    %2013 = vmatpush1.msra.mxu0 0.0
    %2014 = vmatprep.subr.mxu0 0.0
    %2015 = vmatpush1.msra.mxu0 0.0
    %2016 = vmatprep.subr.mxu0 0.0
    %2017 = vmatpush1.msra.mxu0 0.0
    %2018 = vmatprep.subr.mxu0 0.0
    %2019 = vmatpush1.msra.mxu0 0.0
    %2020 = vmatprep.subr.mxu0 0.0
    %2021 = vmatpush1.msra.mxu0 0.0
    %2022 = vmatprep.subr.mxu0 0.0
    %2023 = vmatpush1.msra.mxu0 0.0
    %2024 = vmatprep.subr.mxu0 0.0
    %2025 = vmatpush1.msra.mxu0 0.0
    %2026 = vmatprep.subr.mxu0 0.0
    %2027 = vmatpush1.msra.mxu0 0.0
    %2028 = vmatprep.subr.mxu0 0.0
    %2029 = vmatpush1.msra.mxu0 0.0
    %2030 = vmatprep.subr.mxu0 0.0
    %2031 = vmatpush1.msra.mxu0 0.0
    %2032 = vmatprep.subr.mxu0 0.0
    %2033 = vmatpush1.msra.mxu0 0.0
    %2034 = vmatprep.subr.mxu0 0.0
    %2035 = vmatpush1.msra.mxu0 0.0
    %2036 = vmatprep.subr.mxu0 0.0
    %2037 = vmatpush1.msra.mxu0 0.0
    %2038 = vmatprep.subr.mxu0 0.0
    %2039 = vmatpush1.msra.mxu0 0.0
    %2040 = vmatprep.subr.mxu0 0.0
    %2041 = vmatpush1.msra.mxu0 0.0
    %2042 = vmatprep.subr.mxu0 0.0
    %2043 = vmatpush1.msra.mxu0 0.0
    %2044 = vmatprep.subr.mxu0 0.0
    %2045 = vmatpush1.msra.mxu0 0.0
    %2046 = vmatprep.subr.mxu0 0.0
    %2047 = vmatpush1.msra.mxu0 0.0
    %2048 = vmatprep.mubr.f32.mxu0 0.0
    %2049 = vmatmul.mubr.f32.gmra.mrb[0].mxu0 %v1982
    %v2050 = vpop.f32.mrb[0].mxu0
    %v2051 = vadd.f32 0.0, %v2050
    %v2052 = vpop.f32.mrb[0].mxu0
    %2053 = vdwg.mxu0
    %v2054 = vadd.f32 %v1981, %v2051
    %v2055 = vxor.u32 %v2054, 2147483648
    %v2056 = vmul.f32 %v2055, 1.442695
    %v2057 = vpow.pop %v2056
    %v2058 = vadd.f32 %v2057, 1.0
    %v2059 = vrcp.pop %v2058
    %v2060 = vmul.f32 1.0, %v2059
    %v2061 = vadd.f32 %v2051, %v1534
    %2063 = vrot.lane.b32.xlu0 %v2061, 64
    %v2064 = vpop.permute.xlu0 %2063
    %v2066 = vmul.f32 %v2060, %v2064
    %2068 = vrot.lane.b32.xlu0 %v2066, 64
    %v2069 = vpop.permute.xlu0 %2068
    %v2071 = vadd.f32 %v1981, %v2069
    %v2072 = vtanh.pop %v2071
    %v2073 = vsub.f32 1.0, %v2060
    %2075 = vrot.lane.b32.xlu0 %v2072, 96
    %v2076 = vpop.permute.xlu0 %2075
    %v2078 = vmul.f32 %v2073, %v2076
    %v2079 = vmul.f32 %v2060, %v1975
    %v2080 = vadd.f32 %v2078, %v2079
    %2082 = vrot.lane.b32.xlu0 %v2080, 96
    %v2083 = vpop.permute.xlu0 %2082
    %2085 = vst.msk [vmem:[%s1072] sm:$0xff] %vm141, %v2083
    %v2086 = vld [vmem:[%s1074] sm:$0xff]
    %v2087 = vsel %vm141, %v2083, 0
    %2089 = vmatprep.subr.mxu0 0.0
    %2090 = vmatpush1.msra.mxu0 %v1293
    %2091 = vmatprep.subr.mxu0 0.0
    %2092 = vmatpush1.msra.mxu0 %v1294
    %2093 = vmatprep.subr.mxu0 0.0
    %2094 = vmatpush1.msra.mxu0 %v1295
    %2095 = vmatprep.subr.mxu0 0.0
    %2096 = vmatpush1.msra.mxu0 %v1296
    %2097 = vmatprep.subr.mxu0 0.0
    %2098 = vmatpush1.msra.mxu0 0.0
    %2099 = vmatprep.subr.mxu0 0.0
    %2100 = vmatpush1.msra.mxu0 0.0
    %2101 = vmatprep.subr.mxu0 0.0
    %2102 = vmatpush1.msra.mxu0 0.0
    %2103 = vmatprep.subr.mxu0 0.0
    %2104 = vmatpush1.msra.mxu0 0.0
    %2105 = vmatprep.subr.mxu0 0.0
    %2106 = vmatpush1.msra.mxu0 0.0
    %2107 = vmatprep.subr.mxu0 0.0
    %2108 = vmatpush1.msra.mxu0 0.0
    %2109 = vmatprep.subr.mxu0 0.0
    %2110 = vmatpush1.msra.mxu0 0.0
    %2111 = vmatprep.subr.mxu0 0.0
    %2112 = vmatpush1.msra.mxu0 0.0
    %2113 = vmatprep.subr.mxu0 0.0
    %2114 = vmatpush1.msra.mxu0 0.0
    %2115 = vmatprep.subr.mxu0 0.0
    %2116 = vmatpush1.msra.mxu0 0.0
    %2117 = vmatprep.subr.mxu0 0.0
    %2118 = vmatpush1.msra.mxu0 0.0
    %2119 = vmatprep.subr.mxu0 0.0
    %2120 = vmatpush1.msra.mxu0 0.0
    %2121 = vmatprep.subr.mxu0 0.0
    %2122 = vmatpush1.msra.mxu0 0.0
    %2123 = vmatprep.subr.mxu0 0.0
    %2124 = vmatpush1.msra.mxu0 0.0
    %2125 = vmatprep.subr.mxu0 0.0
    %2126 = vmatpush1.msra.mxu0 0.0
    %2127 = vmatprep.subr.mxu0 0.0
    %2128 = vmatpush1.msra.mxu0 0.0
    %2129 = vmatprep.subr.mxu0 0.0
    %2130 = vmatpush1.msra.mxu0 0.0
    %2131 = vmatprep.subr.mxu0 0.0
    %2132 = vmatpush1.msra.mxu0 0.0
    %2133 = vmatprep.subr.mxu0 0.0
    %2134 = vmatpush1.msra.mxu0 0.0
    %2135 = vmatprep.subr.mxu0 0.0
    %2136 = vmatpush1.msra.mxu0 0.0
    %2137 = vmatprep.subr.mxu0 0.0
    %2138 = vmatpush1.msra.mxu0 0.0
    %2139 = vmatprep.subr.mxu0 0.0
    %2140 = vmatpush1.msra.mxu0 0.0
    %2141 = vmatprep.subr.mxu0 0.0
    %2142 = vmatpush1.msra.mxu0 0.0
    %2143 = vmatprep.subr.mxu0 0.0
    %2144 = vmatpush1.msra.mxu0 0.0
    %2145 = vmatprep.subr.mxu0 0.0
    %2146 = vmatpush1.msra.mxu0 0.0
    %2147 = vmatprep.subr.mxu0 0.0
    %2148 = vmatpush1.msra.mxu0 0.0
    %2149 = vmatprep.subr.mxu0 0.0
    %2150 = vmatpush1.msra.mxu0 0.0
    %2151 = vmatprep.subr.mxu0 0.0
    %2152 = vmatpush1.msra.mxu0 0.0
    %2153 = vmatprep.mubr.f32.mxu0 0.0
    %2154 = vmatmul.mubr.f32.gmra.mrb[0].mxu0 %v2087
    %v2155 = vpop.f32.mrb[0].mxu0
    %v2156 = vadd.f32 0.0, %v2155
    %v2157 = vpop.f32.mrb[0].mxu0
    %2158 = vdwg.mxu0
    %v2159 = vadd.f32 %v2086, %v2156
    %v2160 = vxor.u32 %v2159, 2147483648
    %v2161 = vmul.f32 %v2160, 1.442695
    %v2162 = vpow.pop %v2161
    %v2163 = vadd.f32 %v2162, 1.0
    %v2164 = vrcp.pop %v2163
    %v2165 = vmul.f32 1.0, %v2164
    %v2166 = vadd.f32 %v2156, %v1534
    %2168 = vrot.lane.b32.xlu0 %v2166, 64
    %v2169 = vpop.permute.xlu0 %2168
    %v2171 = vmul.f32 %v2165, %v2169
    %2173 = vrot.lane.b32.xlu0 %v2171, 64
    %v2174 = vpop.permute.xlu0 %2173
    %v2176 = vadd.f32 %v2086, %v2174
    %v2177 = vtanh.pop %v2176
    %v2178 = vsub.f32 1.0, %v2165
    %2180 = vrot.lane.b32.xlu0 %v2177, 96
    %v2181 = vpop.permute.xlu0 %2180
    %v2183 = vmul.f32 %v2178, %v2181
    %v2184 = vmul.f32 %v2165, %v2080
    %v2185 = vadd.f32 %v2183, %v2184
    %2187 = vrot.lane.b32.xlu0 %v2185, 96
    %v2188 = vpop.permute.xlu0 %2187
    %2190 = vst.msk [vmem:[%s1179] sm:$0xff] %vm141, %v2188
    %v2191 = vld [vmem:[%s1181] sm:$0xff]
    %v2192 = vsel %vm141, %v2188, 0
    %2194 = vmatprep.subr.mxu0 0.0
    %2195 = vmatpush1.msra.mxu0 %v1293
    %2196 = vmatprep.subr.mxu0 0.0
    %2197 = vmatpush1.msra.mxu0 %v1294
    %2198 = vmatprep.subr.mxu0 0.0
    %2199 = vmatpush1.msra.mxu0 %v1295
    %2200 = vmatprep.subr.mxu0 0.0
    %2201 = vmatpush1.msra.mxu0 %v1296
    %2202 = vmatprep.subr.mxu0 0.0
    %2203 = vmatpush1.msra.mxu0 0.0
    %2204 = vmatprep.subr.mxu0 0.0
    %2205 = vmatpush1.msra.mxu0 0.0
    %2206 = vmatprep.subr.mxu0 0.0
    %2207 = vmatpush1.msra.mxu0 0.0
    %2208 = vmatprep.subr.mxu0 0.0
    %2209 = vmatpush1.msra.mxu0 0.0
    %2210 = vmatprep.subr.mxu0 0.0
    %2211 = vmatpush1.msra.mxu0 0.0
    %2212 = vmatprep.subr.mxu0 0.0
    %2213 = vmatpush1.msra.mxu0 0.0
    %2214 = vmatprep.subr.mxu0 0.0
    %2215 = vmatpush1.msra.mxu0 0.0
    %2216 = vmatprep.subr.mxu0 0.0
    %2217 = vmatpush1.msra.mxu0 0.0
    %2218 = vmatprep.subr.mxu0 0.0
    %2219 = vmatpush1.msra.mxu0 0.0
    %2220 = vmatprep.subr.mxu0 0.0
    %2221 = vmatpush1.msra.mxu0 0.0
    %2222 = vmatprep.subr.mxu0 0.0
    %2223 = vmatpush1.msra.mxu0 0.0
    %2224 = vmatprep.subr.mxu0 0.0
    %2225 = vmatpush1.msra.mxu0 0.0
    %2226 = vmatprep.subr.mxu0 0.0
    %2227 = vmatpush1.msra.mxu0 0.0
    %2228 = vmatprep.subr.mxu0 0.0
    %2229 = vmatpush1.msra.mxu0 0.0
    %2230 = vmatprep.subr.mxu0 0.0
    %2231 = vmatpush1.msra.mxu0 0.0
    %2232 = vmatprep.subr.mxu0 0.0
    %2233 = vmatpush1.msra.mxu0 0.0
    %2234 = vmatprep.subr.mxu0 0.0
    %2235 = vmatpush1.msra.mxu0 0.0
    %2236 = vmatprep.subr.mxu0 0.0
    %2237 = vmatpush1.msra.mxu0 0.0
    %2238 = vmatprep.subr.mxu0 0.0
    %2239 = vmatpush1.msra.mxu0 0.0
    %2240 = vmatprep.subr.mxu0 0.0
    %2241 = vmatpush1.msra.mxu0 0.0
    %2242 = vmatprep.subr.mxu0 0.0
    %2243 = vmatpush1.msra.mxu0 0.0
    %2244 = vmatprep.subr.mxu0 0.0
    %2245 = vmatpush1.msra.mxu0 0.0
    %2246 = vmatprep.subr.mxu0 0.0
    %2247 = vmatpush1.msra.mxu0 0.0
    %2248 = vmatprep.subr.mxu0 0.0
    %2249 = vmatpush1.msra.mxu0 0.0
    %2250 = vmatprep.subr.mxu0 0.0
    %2251 = vmatpush1.msra.mxu0 0.0
    %2252 = vmatprep.subr.mxu0 0.0
    %2253 = vmatpush1.msra.mxu0 0.0
    %2254 = vmatprep.subr.mxu0 0.0
    %2255 = vmatpush1.msra.mxu0 0.0
    %2256 = vmatprep.subr.mxu0 0.0
    %2257 = vmatpush1.msra.mxu0 0.0
    %2258 = vmatprep.mubr.f32.mxu0 0.0
    %2259 = vmatmul.mubr.f32.gmra.mrb[0].mxu0 %v2192
    %v2260 = vpop.f32.mrb[0].mxu0
    %v2261 = vadd.f32 0.0, %v2260
    %v2262 = vpop.f32.mrb[0].mxu0
    %2263 = vdwg.mxu0
    %v2264 = vadd.f32 %v2191, %v2261
    %v2265 = vxor.u32 %v2264, 2147483648
    %v2266 = vmul.f32 %v2265, 1.442695
    %v2267 = vpow.pop %v2266
    %v2268 = vadd.f32 %v2267, 1.0
    %v2269 = vrcp.pop %v2268
    %v2270 = vmul.f32 1.0, %v2269
    %v2271 = vadd.f32 %v2261, %v1534
    %2273 = vrot.lane.b32.xlu0 %v2271, 64
    %v2274 = vpop.permute.xlu0 %2273
    %v2276 = vmul.f32 %v2270, %v2274
    %2278 = vrot.lane.b32.xlu0 %v2276, 64
    %v2279 = vpop.permute.xlu0 %2278
    %v2281 = vadd.f32 %v2191, %v2279
    %v2282 = vtanh.pop %v2281
    %v2283 = vsub.f32 1.0, %v2270
    %2285 = vrot.lane.b32.xlu0 %v2282, 96
    %v2286 = vpop.permute.xlu0 %2285
    %v2288 = vmul.f32 %v2283, %v2286
    %v2289 = vmul.f32 %v2270, %v2185
    %v2290 = vadd.f32 %v2288, %v2289
    %2292 = vrot.lane.b32.xlu0 %v2290, 96
    %v2293 = vpop.permute.xlu0 %2292
    %2295 = vst.msk [vmem:[%s1286] sm:$0xff] %vm141, %v2293
    %2296 = vst.msk [vmem:[#allocation9 + $0x8] sm:$0xff] %vm141, %v2293
    // Predicated region
    $region54: #{tpu_custom_call.1} parent=1 // pred_check
      _
    $region55: #{tpu_custom_call.1} parent=1 // pred_check_branch
      %2298 = sbr.rel (0) target = $region57
    $region56: #{tpu_custom_call.1} parent=1 // pred_region
      _
    $region57: #{tpu_custom_call.1} parent=1 // pred_fallthru
      _
    // Predicated region
    $region58: #{tpu_custom_call.1} parent=1 // pred_check
      _
    $region59: #{tpu_custom_call.1} parent=1 // pred_check_branch
      %2300 = sbr.rel (0) target = $region61
    $region60: #{tpu_custom_call.1} parent=1 // pred_region
      %s2302 = ssub.s32 256, 256
      %2303 = vsyncadd [#allocation5], %s2302
      %s2304 = sshll.u32 [#allocation9], 4
      %s2305 = int_to_ptr.vmem [resolvable:$true] %s2304
      %2310 = dma.vmem_to_hbm [thread:$0]  %s2305, 256, %s11, [#allocation5], 128, 128, 8
    $region61: #{tpu_custom_call.1} parent=1 // pred_fallthru
      _
    // Predicated region
    $region62: #{tpu_custom_call.1} parent=1 // pred_check
      _
    $region63: #{tpu_custom_call.1} parent=1 // pred_check_branch
      %2312 = sbr.rel (0) target = $region65
    $region64: #{tpu_custom_call.1} parent=1 // pred_region
      _
    $region65: #{tpu_custom_call.1} parent=1 // pred_fallthru
      _
    // Predicated region
    $region66: #{tpu_custom_call.1} parent=1 // pred_check
      _
    $region67: #{tpu_custom_call.1} parent=1 // pred_check_branch
      %2314 = sbr.rel (0) target = $region69
    $region68: #{tpu_custom_call.1} parent=1 // pred_region
      %2315 = dma.done [#allocation5], 256
    $region69: #{tpu_custom_call.1} parent=1 // pred_fallthru
      _
    %2316 = vsyncpa [#allocation4], 1
    %2317 = vsyncpa [#allocation7], 1
    %2318 = vsyncpa [#allocation5], 1

</llo_original>
